<compile_context>
chip_gen: v7x
topology: tpu7x:2x2x1
jax: 0.10.0
libtpu: 0.0.40
codegen_flags: <defaults>
</compile_context>

<pallas_src>
import functools

import jax
import jax.numpy as jnp
from jax.experimental import pallas as pl
from jax.experimental.pallas import tpu as pltpu


# ----------------------------------------------------------------------------
# In-kernel helpers (values already resident in VMEM / vregs)
# ----------------------------------------------------------------------------
def _attn_core(q, k, v, heads, bb, tq, tk):
    """Scores + softmax + context for one attention block.

    q: (bb*tq, dm) f32 (already scaled by 1/sqrt(dh) via weight folding)
    k, v: (bb*tk, dm) f32
    Returns context as (bb*tq, dm) bf16, heads merged along lanes (ready for
    the single full-width output projection).
    """
    dm = q.shape[-1]
    dh = dm // heads
    qh = q.reshape(bb, tq, dm).astype(jnp.bfloat16)   # cast once per operand
    kh = k.reshape(bb, tk, dm).astype(jnp.bfloat16)
    vh = v.reshape(bb, tk, dm).astype(jnp.bfloat16)

    ctx_parts = []
    for h in range(heads):                            # static head loop
        lo, hi = h * dh, (h + 1) * dh
        s = jnp.einsum('bqd,bkd->bqk', qh[:, :, lo:hi], kh[:, :, lo:hi],
                       preferred_element_type=jnp.float32)      # (bb, tq, tk)
        s = s - jnp.max(s, axis=-1, keepdims=True)
        p = jnp.exp(s)
        p = p / jnp.sum(p, axis=-1, keepdims=True)              # exact softmax
        c = jnp.einsum('bqk,bkd->bqd', p.astype(jnp.bfloat16), vh[:, :, lo:hi],
                       preferred_element_type=jnp.float32)      # (bb, tq, dh)
        ctx_parts.append(c)
    ctx = jnp.concatenate(ctx_parts, axis=-1)         # (bb, tq, dm) f32
    return ctx.reshape(bb * tq, dm).astype(jnp.bfloat16)


def _add_layernorm(x, r, g, b):
    """LayerNorm(x + r) over the last dim, eps = 1e-5 (PyTorch default)."""
    y = x + r
    mu = jnp.mean(y, axis=-1, keepdims=True)
    var = jnp.mean(jnp.square(y - mu), axis=-1, keepdims=True)
    return (y - mu) * jax.lax.rsqrt(var + 1e-5) * g + b


# ----------------------------------------------------------------------------
# Fused decoder-layer kernel (one batch-block per grid step)
# ----------------------------------------------------------------------------
def decoder_layer_kernel(
        tgt_ref, sent_ref, graph_ref,
        sa_wqkv, sa_bqkv, sa_wo, sa_bo,
        se_wq, se_bq, se_wkv, se_bkv, se_wo, se_bo,
        gr_wq, gr_bq, gr_wkv, gr_bkv, gr_wo, gr_bo,
        fu_ws, fu_wg, fu_b,
        w1, b1, w2, b2, ln,
        o_ref, *, heads, n_graph_head, flatten_out):
    # TODO(synk): optional attn_mask / key_padding_mask args (default None in
    # the PyTorch module) and train-mode dropout are not plumbed through.
    bb, T, Dm = tgt_ref.shape
    _, Ts, De = sent_ref.shape
    _, Tg, Dc = graph_ref.shape

    # Flattened activation slabs (leading-dim merges only -- layout-safe).
    tgt = tgt_ref[...].reshape(bb * T, Dm)                          # f32
    sent_bf = sent_ref[...].reshape(bb * Ts, De).astype(jnp.bfloat16)
    graph_bf = graph_ref[...].reshape(bb * Tg, Dc).astype(jnp.bfloat16)
    ln_p = ln[...]                                                  # (6, Dm)

    # ---------------- self attention -> add & norm1 ----------------
    tgt_bf = tgt.astype(jnp.bfloat16)
    qkv = jnp.dot(tgt_bf, sa_wqkv[...],
                  preferred_element_type=jnp.float32) + sa_bqkv[...]   # (bb*T, 3Dm)
    ctx = _attn_core(qkv[:, :Dm], qkv[:, Dm:2 * Dm], qkv[:, 2 * Dm:],
                     heads, bb, T, T)
    sa_out = jnp.dot(ctx, sa_wo[...],
                     preferred_element_type=jnp.float32) + sa_bo[...]
    x = _add_layernorm(tgt, sa_out, ln_p[0:1], ln_p[1:2])

    # ---------- dual cross attention + split fuse-linear -> add & norm2 ----
    x_bf = x.astype(jnp.bfloat16)          # cast once, reused by both branches

    qs = jnp.dot(x_bf, se_wq[...],
                 preferred_element_type=jnp.float32) + se_bq[...]      # (bb*T, De)
    kv_s = jnp.dot(sent_bf, se_wkv[...],
                   preferred_element_type=jnp.float32) + se_bkv[...]   # (bb*Ts, 2De)
    ctx_s = _attn_core(qs, kv_s[:, :De], kv_s[:, De:], heads, bb, T, Ts)
    s_out = jnp.dot(ctx_s, se_wo[...],
                    preferred_element_type=jnp.float32) + se_bo[...]   # (bb*T, De)

    qg = jnp.dot(x_bf, gr_wq[...],
                 preferred_element_type=jnp.float32) + gr_bq[...]      # (bb*T, Dc)
    kv_g = jnp.dot(graph_bf, gr_wkv[...],
                   preferred_element_type=jnp.float32) + gr_bkv[...]   # (bb*Tg, 2Dc)
    ctx_g = _attn_core(qg, kv_g[:, :Dc], kv_g[:, Dc:], n_graph_head, bb, T, Tg)
    g_out = jnp.dot(ctx_g, gr_wo[...],
                    preferred_element_type=jnp.float32) + gr_bo[...]   # (bb*T, Dc)

    # fuse_linear over concat([s_out, g_out]) == two partial matmuls (no concat)
    fused = (jnp.dot(s_out.astype(jnp.bfloat16), fu_ws[...],
                     preferred_element_type=jnp.float32)
             + jnp.dot(g_out.astype(jnp.bfloat16), fu_wg[...],
                       preferred_element_type=jnp.float32)
             + fu_b[...])
    x = _add_layernorm(x, fused, ln_p[2:3], ln_p[3:4])

    # ---------------- feed-forward -> add & norm3 ----------------
    hid = jnp.dot(x.astype(jnp.bfloat16), w1[...],
                  preferred_element_type=jnp.float32) + b1[...]
    hid = jnp.maximum(hid, 0.0)
    ff = jnp.dot(hid.astype(jnp.bfloat16), w2[...],
                 preferred_element_type=jnp.float32) + b2[...]
    x = _add_layernorm(x, ff, ln_p[4:5], ln_p[5:6])

    # ---------------- store ----------------
    x3 = x.reshape(bb, T, Dm)              # leading-dim split only (layout-safe)
    if flatten_out:
        # Lane-dense (bb, T*Dm) tile built by lane-concat (avoids a
        # minor-dim-changing reshape); used when Dm is not a multiple of 128.
        o_ref[...] = jnp.concatenate([x3[:, t, :] for t in range(T)], axis=-1)
    else:
        o_ref[...] = x3


# ----------------------------------------------------------------------------
# Host-side weight preparation (scale folding, QKV/KV fusion, bf16 cast)
# ----------------------------------------------------------------------------
def _prep_self_attn(p, n_heads):
    wq, bq, wk, bk, wv, bv, wo, bo = p
    dm = wk.shape[1]
    scale = 1.0 / float(dm // n_heads) ** 0.5          # folded into Wq / bq
    w_qkv = jnp.concatenate([wq * scale, wk, wv], axis=1).astype(jnp.bfloat16)
    b_qkv = jnp.concatenate([bq * scale, bk, bv], axis=1)          # f32
    return w_qkv, b_qkv, wo.astype(jnp.bfloat16), bo


def _prep_cross_attn(p, n_heads):
    wq, bq, wk, bk, wv, bv, wo, bo = p
    dm = wk.shape[1]
    scale = 1.0 / float(dm // n_heads) ** 0.5          # folded into Wq / bq
    w_kv = jnp.concatenate([wk, wv], axis=1).astype(jnp.bfloat16)
    b_kv = jnp.concatenate([bk, bv], axis=1)
    return ((wq * scale).astype(jnp.bfloat16), bq * scale,
            w_kv, b_kv, wo.astype(jnp.bfloat16), bo)


@functools.partial(jax.jit, static_argnames=("heads", "n_graph_head"))
def decoder_layer_forward(tgt, sent_memory, graph_memory, params, heads, n_graph_head):
    B, T, Dm = tgt.shape
    _, Ts, De = sent_memory.shape
    _, Tg, Dc = graph_memory.shape

    # At most 2 batch-blocks: short serial grid on v5e/v6e (1 TC),
    # both TensorCores fed on v7x (2 TCs) via "parallel" semantics.
    if B >= 2 and B % 2 == 0:
        n_blocks, bb = 2, B // 2
    else:
        n_blocks, bb = 1, B

    sa = _prep_self_attn(params["self_attn"], heads)
    se = _prep_cross_attn(params["sent_attn"], heads)
    gr = _prep_cross_attn(params["graph_attn"], n_graph_head)

    fw, fb = params["fuse"]
    fu_ws = fw[:De].astype(jnp.bfloat16)        # sent part of the fuse weight
    fu_wg = fw[De:].astype(jnp.bfloat16)        # graph part of the fuse weight

    w1, b1, w2, b2 = params["ffn"]
    ln_pack = jnp.concatenate([*params["norm1"], *params["norm2"],
                               *params["norm3"]], axis=0)          # (6, Dm)

    weight_args = (*sa, *se, *gr, fu_ws, fu_wg, fb,
                   w1.astype(jnp.bfloat16), b1, w2.astype(jnp.bfloat16), b2,
                   ln_pack)

    def full_spec(a):
        zeros = (0,) * a.ndim
        # NOTE: weights have constant index maps; at production sizes on v7x
        # consider pipeline_mode=pl.Buffered(1) / explicit vmem_limit_bytes.
        return pl.BlockSpec(a.shape, lambda i, _z=zeros: _z)

    flatten_out = (Dm % 128 != 0)
    if flatten_out:
        out_shape = jax.ShapeDtypeStruct((n_blocks, bb, T * Dm), jnp.float32)
        out_spec = pl.BlockSpec((None, bb, T * Dm), lambda i: (i, 0, 0))
    else:
        out_shape = jax.ShapeDtypeStruct((B, T, Dm), jnp.float32)
        out_spec = pl.BlockSpec((bb, T, Dm), lambda i: (i, 0, 0))

    in_specs = (
        [pl.BlockSpec((bb, T, Dm), lambda i: (i, 0, 0)),
         pl.BlockSpec((bb, Ts, De), lambda i: (i, 0, 0)),
         pl.BlockSpec((bb, Tg, Dc), lambda i: (i, 0, 0))]
        + [full_spec(a) for a in weight_args]
    )

    kernel = functools.partial(decoder_layer_kernel, heads=heads,
                               n_graph_head=n_graph_head,
                               flatten_out=flatten_out)
    out = pl.pallas_call(
        kernel,
        out_shape=out_shape,
        grid=(n_blocks,),
        in_specs=in_specs,
        out_specs=out_spec,
        compiler_params=pltpu.CompilerParams(
            dimension_semantics=("parallel",)),
    )(tgt, sent_memory, graph_memory, *weight_args)
    return out.reshape(B, T, Dm)


# ----------------------------------------------------------------------------
# Parameter construction (deterministic, synthetic; stored in f32)
# ----------------------------------------------------------------------------
def _lin_params(key, din, dout, scale=0.05):
    kw, kb = jax.random.split(key)
    w = scale * jax.random.normal(kw, (din, dout), jnp.float32)
    b = scale * jax.random.normal(kb, (1, dout), jnp.float32)
    return w, b


def _attn_params(key, q_dim, model_dim):
    kq, kk, kv, ko = jax.random.split(key, 4)
    wq, bq = _lin_params(kq, q_dim, model_dim)
    wk, bk = _lin_params(kk, model_dim, model_dim)
    wv, bv = _lin_params(kv, model_dim, model_dim)
    wo, bo = _lin_params(ko, model_dim, model_dim)
    return (wq, bq, wk, bk, wv, bv, wo, bo)


def init_params(key, d_model, d_enc, d_con, d_ff):
    ks = jax.random.split(key, 8)
    return {
        "self_attn": _attn_params(ks[0], d_model, d_model),
        "sent_attn": _attn_params(ks[1], d_model, d_enc),
        "graph_attn": _attn_params(ks[2], d_model, d_con),
        "fuse": _lin_params(ks[3], d_enc + d_con, d_model),
        "ffn": _lin_params(ks[4], d_model, d_ff) + _lin_params(ks[5], d_ff, d_model),
        "norm1": (jnp.ones((1, d_model), jnp.float32), jnp.zeros((1, d_model), jnp.float32)),
        "norm2": (jnp.ones((1, d_model), jnp.float32), jnp.zeros((1, d_model), jnp.float32)),
        "norm3": (jnp.ones((1, d_model), jnp.float32), jnp.zeros((1, d_model), jnp.float32)),
    }


if __name__ == "__main__":
    # Small, module-consistent shapes (dual_enc=True path).
    B, T_tgt, T_sent, T_graph = 2, 8, 16, 8
    d_model, d_enc, d_con, d_ff = 32, 32, 64, 64
    heads = 4
    n_graph_head = 4 if d_con != 512 else 8

    key = jax.random.PRNGKey(0)
    k_p, k_t, k_s, k_g = jax.random.split(key, 4)

    params = init_params(k_p, d_model, d_enc, d_con, d_ff)
    tgt = jax.random.normal(k_t, (B, T_tgt, d_model), jnp.float32)
    sent_memory = jax.random.normal(k_s, (B, T_sent, d_enc), jnp.float32)
    graph_memory = jax.random.normal(k_g, (B, T_graph, d_con), jnp.float32)

    out = decoder_layer_forward(tgt, sent_memory, graph_memory, params,
                                heads=heads, n_graph_head=n_graph_head)
    out = jax.block_until_ready(out)
    assert out.shape == (B, T_tgt, d_model)
    assert bool(jnp.all(jnp.isfinite(out)))
    print("KERNEL_OK")
</pallas_src>

<mosaic_0001>
module attributes {stable_mosaic.version = 11 : i64} {
  func.func @decoder_layer_kernel(%arg0: i32, %arg1: memref<1x8x32xf32, #tpu.memory_space<vmem>>, %arg2: memref<1x16x32xf32, #tpu.memory_space<vmem>>, %arg3: memref<1x8x64xf32, #tpu.memory_space<vmem>>, %arg4: memref<32x96xbf16, #tpu.memory_space<vmem>>, %arg5: memref<1x96xf32, #tpu.memory_space<vmem>>, %arg6: memref<32x32xbf16, #tpu.memory_space<vmem>>, %arg7: memref<1x32xf32, #tpu.memory_space<vmem>>, %arg8: memref<32x32xbf16, #tpu.memory_space<vmem>>, %arg9: memref<1x32xf32, #tpu.memory_space<vmem>>, %arg10: memref<32x64xbf16, #tpu.memory_space<vmem>>, %arg11: memref<1x64xf32, #tpu.memory_space<vmem>>, %arg12: memref<32x32xbf16, #tpu.memory_space<vmem>>, %arg13: memref<1x32xf32, #tpu.memory_space<vmem>>, %arg14: memref<32x64xbf16, #tpu.memory_space<vmem>>, %arg15: memref<1x64xf32, #tpu.memory_space<vmem>>, %arg16: memref<64x128xbf16, #tpu.memory_space<vmem>>, %arg17: memref<1x128xf32, #tpu.memory_space<vmem>>, %arg18: memref<64x64xbf16, #tpu.memory_space<vmem>>, %arg19: memref<1x64xf32, #tpu.memory_space<vmem>>, %arg20: memref<32x32xbf16, #tpu.memory_space<vmem>>, %arg21: memref<64x32xbf16, #tpu.memory_space<vmem>>, %arg22: memref<1x32xf32, #tpu.memory_space<vmem>>, %arg23: memref<32x64xbf16, #tpu.memory_space<vmem>>, %arg24: memref<1x64xf32, #tpu.memory_space<vmem>>, %arg25: memref<64x32xbf16, #tpu.memory_space<vmem>>, %arg26: memref<1x32xf32, #tpu.memory_space<vmem>>, %arg27: memref<6x32xf32, #tpu.memory_space<vmem>>, %arg28: memref<1x1x256xf32, #tpu.memory_space<vmem>>) attributes {dimension_semantics = [#tpu.dimension_semantics<parallel>], iteration_bounds = array<i64: 2>, scalar_prefetch = 0 : i64, scratch_operands = 0 : i64, tpu.core_type = #tpu.core_type<tc>, window_params = [{transform_indices = @transform_0, window_bounds = array<i64: 1, 8, 32>}, {transform_indices = @transform_1, window_bounds = array<i64: 1, 16, 32>}, {transform_indices = @transform_2, window_bounds = array<i64: 1, 8, 64>}, {pipeline_mode = #tpu.pipeline_mode<synchronous>, transform_indices = @transform_3, window_bounds = array<i64: 32, 96>}, {pipeline_mode = #tpu.pipeline_mode<synchronous>, transform_indices = @transform_4, window_bounds = array<i64: 1, 96>}, {pipeline_mode = #tpu.pipeline_mode<synchronous>, transform_indices = @transform_5, window_bounds = array<i64: 32, 32>}, {pipeline_mode = #tpu.pipeline_mode<synchronous>, transform_indices = @transform_6, window_bounds = array<i64: 1, 32>}, {pipeline_mode = #tpu.pipeline_mode<synchronous>, transform_indices = @transform_7, window_bounds = array<i64: 32, 32>}, {pipeline_mode = #tpu.pipeline_mode<synchronous>, transform_indices = @transform_8, window_bounds = array<i64: 1, 32>}, {pipeline_mode = #tpu.pipeline_mode<synchronous>, transform_indices = @transform_9, window_bounds = array<i64: 32, 64>}, {pipeline_mode = #tpu.pipeline_mode<synchronous>, transform_indices = @transform_10, window_bounds = array<i64: 1, 64>}, {pipeline_mode = #tpu.pipeline_mode<synchronous>, transform_indices = @transform_11, window_bounds = array<i64: 32, 32>}, {pipeline_mode = #tpu.pipeline_mode<synchronous>, transform_indices = @transform_12, window_bounds = array<i64: 1, 32>}, {pipeline_mode = #tpu.pipeline_mode<synchronous>, transform_indices = @transform_13, window_bounds = array<i64: 32, 64>}, {pipeline_mode = #tpu.pipeline_mode<synchronous>, transform_indices = @transform_14, window_bounds = array<i64: 1, 64>}, {pipeline_mode = #tpu.pipeline_mode<synchronous>, transform_indices = @transform_15, window_bounds = array<i64: 64, 128>}, {pipeline_mode = #tpu.pipeline_mode<synchronous>, transform_indices = @transform_16, window_bounds = array<i64: 1, 128>}, {pipeline_mode = #tpu.pipeline_mode<synchronous>, transform_indices = @transform_17, window_bounds = array<i64: 64, 64>}, {pipeline_mode = #tpu.pipeline_mode<synchronous>, transform_indices = @transform_18, window_bounds = array<i64: 1, 64>}, {pipeline_mode = #tpu.pipeline_mode<synchronous>, transform_indices = @transform_19, window_bounds = array<i64: 32, 32>}, {pipeline_mode = #tpu.pipeline_mode<synchronous>, transform_indices = @transform_20, window_bounds = array<i64: 64, 32>}, {pipeline_mode = #tpu.pipeline_mode<synchronous>, transform_indices = @transform_21, window_bounds = array<i64: 1, 32>}, {pipeline_mode = #tpu.pipeline_mode<synchronous>, transform_indices = @transform_22, window_bounds = array<i64: 32, 64>}, {pipeline_mode = #tpu.pipeline_mode<synchronous>, transform_indices = @transform_23, window_bounds = array<i64: 1, 64>}, {pipeline_mode = #tpu.pipeline_mode<synchronous>, transform_indices = @transform_24, window_bounds = array<i64: 64, 32>}, {pipeline_mode = #tpu.pipeline_mode<synchronous>, transform_indices = @transform_25, window_bounds = array<i64: 1, 32>}, {pipeline_mode = #tpu.pipeline_mode<synchronous>, transform_indices = @transform_26, window_bounds = array<i64: 6, 32>}, {transform_indices = @transform_27, window_bounds = array<i64: 1, 1, 256>}]} {
    %c0 = arith.constant 0 : index
    %c0_0 = arith.constant 0 : index
    %c0_1 = arith.constant 0 : index
    %0 = vector.load %arg1[%c0, %c0_0, %c0_1] : memref<1x8x32xf32, #tpu.memory_space<vmem>>, vector<1x8x32xf32>
    %1 = vector.shape_cast %0 : vector<1x8x32xf32> to vector<8x32xf32>
    %c0_2 = arith.constant 0 : index
    %c0_3 = arith.constant 0 : index
    %c0_4 = arith.constant 0 : index
    %2 = vector.load %arg2[%c0_2, %c0_3, %c0_4] : memref<1x16x32xf32, #tpu.memory_space<vmem>>, vector<1x16x32xf32>
    %3 = vector.shape_cast %2 : vector<1x16x32xf32> to vector<16x32xf32>
    %4 = arith.truncf %3 : vector<16x32xf32> to vector<16x32xbf16>
    %c0_5 = arith.constant 0 : index
    %c0_6 = arith.constant 0 : index
    %c0_7 = arith.constant 0 : index
    %5 = vector.load %arg3[%c0_5, %c0_6, %c0_7] : memref<1x8x64xf32, #tpu.memory_space<vmem>>, vector<1x8x64xf32>
    %6 = vector.shape_cast %5 : vector<1x8x64xf32> to vector<8x64xf32>
    %7 = arith.truncf %6 : vector<8x64xf32> to vector<8x64xbf16>
    %c0_8 = arith.constant 0 : index
    %c0_9 = arith.constant 0 : index
    %8 = vector.load %arg27[%c0_8, %c0_9] : memref<6x32xf32, #tpu.memory_space<vmem>>, vector<6x32xf32>
    %9 = arith.truncf %1 : vector<8x32xf32> to vector<8x32xbf16>
    %c0_10 = arith.constant 0 : index
    %c0_11 = arith.constant 0 : index
    %10 = vector.load %arg4[%c0_10, %c0_11] : memref<32x96xbf16, #tpu.memory_space<vmem>>, vector<32x96xbf16>
    %cst = arith.constant dense<0.000000e+00> : vector<8x96xf32>
    %11 = tpu.matmul %9, %10, %cst {dimension_numbers = #tpu.dot_dimension_numbers<[1], [0], [0], [1], [0, 0, 1, 1], [], []>} : vector<8x32xbf16>, vector<32x96xbf16>, vector<8x96xf32> -> vector<8x96xf32>
    %c0_12 = arith.constant 0 : index
    %c0_13 = arith.constant 0 : index
    %12 = vector.load %arg5[%c0_12, %c0_13] : memref<1x96xf32, #tpu.memory_space<vmem>>, vector<1x96xf32>
    %13 = vector.broadcast %12 : vector<1x96xf32> to vector<8x96xf32>
    %14 = arith.addf %11, %13 : vector<8x96xf32>
    %15 = vector.extract_strided_slice %14 {offsets = [0, 0], sizes = [8, 32], strides = [1, 1]} : vector<8x96xf32> to vector<8x32xf32>
    %16 = vector.extract_strided_slice %14 {offsets = [0, 32], sizes = [8, 32], strides = [1, 1]} : vector<8x96xf32> to vector<8x32xf32>
    %17 = vector.extract_strided_slice %14 {offsets = [0, 64], sizes = [8, 32], strides = [1, 1]} : vector<8x96xf32> to vector<8x32xf32>
    %18 = vector.shape_cast %15 : vector<8x32xf32> to vector<1x8x32xf32>
    %19 = arith.truncf %18 : vector<1x8x32xf32> to vector<1x8x32xbf16>
    %20 = vector.shape_cast %16 : vector<8x32xf32> to vector<1x8x32xf32>
    %21 = arith.truncf %20 : vector<1x8x32xf32> to vector<1x8x32xbf16>
    %22 = vector.shape_cast %17 : vector<8x32xf32> to vector<1x8x32xf32>
    %23 = arith.truncf %22 : vector<1x8x32xf32> to vector<1x8x32xbf16>
    %24 = vector.extract_strided_slice %19 {offsets = [0, 0, 0], sizes = [1, 8, 8], strides = [1, 1, 1]} : vector<1x8x32xbf16> to vector<1x8x8xbf16>
    %25 = vector.extract_strided_slice %21 {offsets = [0, 0, 0], sizes = [1, 8, 8], strides = [1, 1, 1]} : vector<1x8x32xbf16> to vector<1x8x8xbf16>
    "tpu.trace_start"() <{level = 10 : i32, message = "bqd,bkd->bqk"}> : () -> ()
    %cst_14 = arith.constant dense<0.000000e+00> : vector<1x8x8xf32>
    %26 = tpu.matmul %24, %25, %cst_14 {dimension_numbers = #tpu.dot_dimension_numbers<[2], [2], [1], [1], [0, 0, 0, 1, 1, 1], [0], [0]>} : vector<1x8x8xbf16>, vector<1x8x8xbf16>, vector<1x8x8xf32> -> vector<1x8x8xf32>
    "tpu.trace_stop"() : () -> ()
    %cst_15 = arith.constant dense<0xFF800000> : vector<1x8xf32>
    %27 = vector.multi_reduction <maximumf>, %26, %cst_15 [2] : vector<1x8x8xf32> to vector<1x8xf32>
    %28 = vector.shape_cast %27 : vector<1x8xf32> to vector<1x8x1xf32>
    %29 = vector.broadcast %28 : vector<1x8x1xf32> to vector<1x8x8xf32>
    %30 = arith.subf %26, %29 : vector<1x8x8xf32>
    %31 = math.exp %30 : vector<1x8x8xf32>
    %cst_16 = arith.constant dense<0.000000e+00> : vector<1x8xf32>
    %32 = vector.multi_reduction <add>, %31, %cst_16 [2] : vector<1x8x8xf32> to vector<1x8xf32>
    %33 = vector.shape_cast %32 : vector<1x8xf32> to vector<1x8x1xf32>
    %34 = vector.broadcast %33 : vector<1x8x1xf32> to vector<1x8x8xf32>
    %35 = arith.divf %31, %34 : vector<1x8x8xf32>
    %36 = arith.truncf %35 : vector<1x8x8xf32> to vector<1x8x8xbf16>
    %37 = vector.extract_strided_slice %23 {offsets = [0, 0, 0], sizes = [1, 8, 8], strides = [1, 1, 1]} : vector<1x8x32xbf16> to vector<1x8x8xbf16>
    "tpu.trace_start"() <{level = 10 : i32, message = "bqk,bkd->bqd"}> : () -> ()
    %cst_17 = arith.constant dense<0.000000e+00> : vector<1x8x8xf32>
    %38 = tpu.matmul %36, %37, %cst_17 {dimension_numbers = #tpu.dot_dimension_numbers<[2], [1], [1], [2], [0, 0, 0, 1, 1, 2], [0], [0]>} : vector<1x8x8xbf16>, vector<1x8x8xbf16>, vector<1x8x8xf32> -> vector<1x8x8xf32>
    "tpu.trace_stop"() : () -> ()
    %39 = vector.extract_strided_slice %19 {offsets = [0, 0, 8], sizes = [1, 8, 8], strides = [1, 1, 1]} : vector<1x8x32xbf16> to vector<1x8x8xbf16>
    %40 = vector.extract_strided_slice %21 {offsets = [0, 0, 8], sizes = [1, 8, 8], strides = [1, 1, 1]} : vector<1x8x32xbf16> to vector<1x8x8xbf16>
    "tpu.trace_start"() <{level = 10 : i32, message = "bqd,bkd->bqk"}> : () -> ()
    %cst_18 = arith.constant dense<0.000000e+00> : vector<1x8x8xf32>
    %41 = tpu.matmul %39, %40, %cst_18 {dimension_numbers = #tpu.dot_dimension_numbers<[2], [2], [1], [1], [0, 0, 0, 1, 1, 1], [0], [0]>} : vector<1x8x8xbf16>, vector<1x8x8xbf16>, vector<1x8x8xf32> -> vector<1x8x8xf32>
    "tpu.trace_stop"() : () -> ()
    %cst_19 = arith.constant dense<0xFF800000> : vector<1x8xf32>
    %42 = vector.multi_reduction <maximumf>, %41, %cst_19 [2] : vector<1x8x8xf32> to vector<1x8xf32>
    %43 = vector.shape_cast %42 : vector<1x8xf32> to vector<1x8x1xf32>
    %44 = vector.broadcast %43 : vector<1x8x1xf32> to vector<1x8x8xf32>
    %45 = arith.subf %41, %44 : vector<1x8x8xf32>
    %46 = math.exp %45 : vector<1x8x8xf32>
    %cst_20 = arith.constant dense<0.000000e+00> : vector<1x8xf32>
    %47 = vector.multi_reduction <add>, %46, %cst_20 [2] : vector<1x8x8xf32> to vector<1x8xf32>
    %48 = vector.shape_cast %47 : vector<1x8xf32> to vector<1x8x1xf32>
    %49 = vector.broadcast %48 : vector<1x8x1xf32> to vector<1x8x8xf32>
    %50 = arith.divf %46, %49 : vector<1x8x8xf32>
    %51 = arith.truncf %50 : vector<1x8x8xf32> to vector<1x8x8xbf16>
    %52 = vector.extract_strided_slice %23 {offsets = [0, 0, 8], sizes = [1, 8, 8], strides = [1, 1, 1]} : vector<1x8x32xbf16> to vector<1x8x8xbf16>
    "tpu.trace_start"() <{level = 10 : i32, message = "bqk,bkd->bqd"}> : () -> ()
    %cst_21 = arith.constant dense<0.000000e+00> : vector<1x8x8xf32>
    %53 = tpu.matmul %51, %52, %cst_21 {dimension_numbers = #tpu.dot_dimension_numbers<[2], [1], [1], [2], [0, 0, 0, 1, 1, 2], [0], [0]>} : vector<1x8x8xbf16>, vector<1x8x8xbf16>, vector<1x8x8xf32> -> vector<1x8x8xf32>
    "tpu.trace_stop"() : () -> ()
    %54 = vector.extract_strided_slice %19 {offsets = [0, 0, 16], sizes = [1, 8, 8], strides = [1, 1, 1]} : vector<1x8x32xbf16> to vector<1x8x8xbf16>
    %55 = vector.extract_strided_slice %21 {offsets = [0, 0, 16], sizes = [1, 8, 8], strides = [1, 1, 1]} : vector<1x8x32xbf16> to vector<1x8x8xbf16>
    "tpu.trace_start"() <{level = 10 : i32, message = "bqd,bkd->bqk"}> : () -> ()
    %cst_22 = arith.constant dense<0.000000e+00> : vector<1x8x8xf32>
    %56 = tpu.matmul %54, %55, %cst_22 {dimension_numbers = #tpu.dot_dimension_numbers<[2], [2], [1], [1], [0, 0, 0, 1, 1, 1], [0], [0]>} : vector<1x8x8xbf16>, vector<1x8x8xbf16>, vector<1x8x8xf32> -> vector<1x8x8xf32>
    "tpu.trace_stop"() : () -> ()
    %cst_23 = arith.constant dense<0xFF800000> : vector<1x8xf32>
    %57 = vector.multi_reduction <maximumf>, %56, %cst_23 [2] : vector<1x8x8xf32> to vector<1x8xf32>
    %58 = vector.shape_cast %57 : vector<1x8xf32> to vector<1x8x1xf32>
    %59 = vector.broadcast %58 : vector<1x8x1xf32> to vector<1x8x8xf32>
    %60 = arith.subf %56, %59 : vector<1x8x8xf32>
    %61 = math.exp %60 : vector<1x8x8xf32>
    %cst_24 = arith.constant dense<0.000000e+00> : vector<1x8xf32>
    %62 = vector.multi_reduction <add>, %61, %cst_24 [2] : vector<1x8x8xf32> to vector<1x8xf32>
    %63 = vector.shape_cast %62 : vector<1x8xf32> to vector<1x8x1xf32>
    %64 = vector.broadcast %63 : vector<1x8x1xf32> to vector<1x8x8xf32>
    %65 = arith.divf %61, %64 : vector<1x8x8xf32>
    %66 = arith.truncf %65 : vector<1x8x8xf32> to vector<1x8x8xbf16>
    %67 = vector.extract_strided_slice %23 {offsets = [0, 0, 16], sizes = [1, 8, 8], strides = [1, 1, 1]} : vector<1x8x32xbf16> to vector<1x8x8xbf16>
    "tpu.trace_start"() <{level = 10 : i32, message = "bqk,bkd->bqd"}> : () -> ()
    %cst_25 = arith.constant dense<0.000000e+00> : vector<1x8x8xf32>
    %68 = tpu.matmul %66, %67, %cst_25 {dimension_numbers = #tpu.dot_dimension_numbers<[2], [1], [1], [2], [0, 0, 0, 1, 1, 2], [0], [0]>} : vector<1x8x8xbf16>, vector<1x8x8xbf16>, vector<1x8x8xf32> -> vector<1x8x8xf32>
    "tpu.trace_stop"() : () -> ()
    %69 = vector.extract_strided_slice %19 {offsets = [0, 0, 24], sizes = [1, 8, 8], strides = [1, 1, 1]} : vector<1x8x32xbf16> to vector<1x8x8xbf16>
    %70 = vector.extract_strided_slice %21 {offsets = [0, 0, 24], sizes = [1, 8, 8], strides = [1, 1, 1]} : vector<1x8x32xbf16> to vector<1x8x8xbf16>
    "tpu.trace_start"() <{level = 10 : i32, message = "bqd,bkd->bqk"}> : () -> ()
    %cst_26 = arith.constant dense<0.000000e+00> : vector<1x8x8xf32>
    %71 = tpu.matmul %69, %70, %cst_26 {dimension_numbers = #tpu.dot_dimension_numbers<[2], [2], [1], [1], [0, 0, 0, 1, 1, 1], [0], [0]>} : vector<1x8x8xbf16>, vector<1x8x8xbf16>, vector<1x8x8xf32> -> vector<1x8x8xf32>
    "tpu.trace_stop"() : () -> ()
    %cst_27 = arith.constant dense<0xFF800000> : vector<1x8xf32>
    %72 = vector.multi_reduction <maximumf>, %71, %cst_27 [2] : vector<1x8x8xf32> to vector<1x8xf32>
    %73 = vector.shape_cast %72 : vector<1x8xf32> to vector<1x8x1xf32>
    %74 = vector.broadcast %73 : vector<1x8x1xf32> to vector<1x8x8xf32>
    %75 = arith.subf %71, %74 : vector<1x8x8xf32>
    %76 = math.exp %75 : vector<1x8x8xf32>
    %cst_28 = arith.constant dense<0.000000e+00> : vector<1x8xf32>
    %77 = vector.multi_reduction <add>, %76, %cst_28 [2] : vector<1x8x8xf32> to vector<1x8xf32>
    %78 = vector.shape_cast %77 : vector<1x8xf32> to vector<1x8x1xf32>
    %79 = vector.broadcast %78 : vector<1x8x1xf32> to vector<1x8x8xf32>
    %80 = arith.divf %76, %79 : vector<1x8x8xf32>
    %81 = arith.truncf %80 : vector<1x8x8xf32> to vector<1x8x8xbf16>
    %82 = vector.extract_strided_slice %23 {offsets = [0, 0, 24], sizes = [1, 8, 8], strides = [1, 1, 1]} : vector<1x8x32xbf16> to vector<1x8x8xbf16>
    "tpu.trace_start"() <{level = 10 : i32, message = "bqk,bkd->bqd"}> : () -> ()
    %cst_29 = arith.constant dense<0.000000e+00> : vector<1x8x8xf32>
    %83 = tpu.matmul %81, %82, %cst_29 {dimension_numbers = #tpu.dot_dimension_numbers<[2], [1], [1], [2], [0, 0, 0, 1, 1, 2], [0], [0]>} : vector<1x8x8xbf16>, vector<1x8x8xbf16>, vector<1x8x8xf32> -> vector<1x8x8xf32>
    "tpu.trace_stop"() : () -> ()
    %84 = tpu.concatenate %38, %53, %68, %83 in 2 : vector<1x8x8xf32>, vector<1x8x8xf32>, vector<1x8x8xf32>, vector<1x8x8xf32> -> vector<1x8x32xf32>
    %85 = vector.shape_cast %84 : vector<1x8x32xf32> to vector<8x32xf32>
    %86 = arith.truncf %85 : vector<8x32xf32> to vector<8x32xbf16>
    %c0_30 = arith.constant 0 : index
    %c0_31 = arith.constant 0 : index
    %87 = vector.load %arg6[%c0_30, %c0_31] : memref<32x32xbf16, #tpu.memory_space<vmem>>, vector<32x32xbf16>
    %cst_32 = arith.constant dense<0.000000e+00> : vector<8x32xf32>
    %88 = tpu.matmul %86, %87, %cst_32 {dimension_numbers = #tpu.dot_dimension_numbers<[1], [0], [0], [1], [0, 0, 1, 1], [], []>} : vector<8x32xbf16>, vector<32x32xbf16>, vector<8x32xf32> -> vector<8x32xf32>
    %c0_33 = arith.constant 0 : index
    %c0_34 = arith.constant 0 : index
    %89 = vector.load %arg7[%c0_33, %c0_34] : memref<1x32xf32, #tpu.memory_space<vmem>>, vector<1x32xf32>
    %90 = vector.broadcast %89 : vector<1x32xf32> to vector<8x32xf32>
    %91 = arith.addf %88, %90 : vector<8x32xf32>
    %92 = vector.extract_strided_slice %8 {offsets = [0, 0], sizes = [1, 32], strides = [1, 1]} : vector<6x32xf32> to vector<1x32xf32>
    %93 = vector.extract_strided_slice %8 {offsets = [1, 0], sizes = [1, 32], strides = [1, 1]} : vector<6x32xf32> to vector<1x32xf32>
    %94 = arith.addf %1, %91 : vector<8x32xf32>
    %cst_35 = arith.constant dense<0.000000e+00> : vector<8xf32>
    %95 = vector.multi_reduction <add>, %94, %cst_35 [1] : vector<8x32xf32> to vector<8xf32>
    %96 = vector.shape_cast %95 : vector<8xf32> to vector<8x1xf32>
    %cst_36 = arith.constant 3.200000e+01 : f32
    %97 = vector.broadcast %cst_36 : f32 to vector<8x1xf32>
    %98 = arith.divf %96, %97 : vector<8x1xf32>
    %99 = vector.broadcast %98 : vector<8x1xf32> to vector<8x32xf32>
    %100 = arith.subf %94, %99 : vector<8x32xf32>
    %101 = arith.mulf %100, %100 : vector<8x32xf32>
    %cst_37 = arith.constant dense<0.000000e+00> : vector<8xf32>
    %102 = vector.multi_reduction <add>, %101, %cst_37 [1] : vector<8x32xf32> to vector<8xf32>
    %103 = vector.shape_cast %102 : vector<8xf32> to vector<8x1xf32>
    %cst_38 = arith.constant 3.200000e+01 : f32
    %104 = vector.broadcast %cst_38 : f32 to vector<8x1xf32>
    %105 = arith.divf %103, %104 : vector<8x1xf32>
    %106 = vector.broadcast %98 : vector<8x1xf32> to vector<8x32xf32>
    %107 = arith.subf %94, %106 : vector<8x32xf32>
    %cst_39 = arith.constant 9.99999974E-6 : f32
    %108 = vector.broadcast %cst_39 : f32 to vector<8x1xf32>
    %109 = arith.addf %105, %108 : vector<8x1xf32>
    %110 = math.rsqrt %109 : vector<8x1xf32>
    %111 = vector.broadcast %110 : vector<8x1xf32> to vector<8x32xf32>
    %112 = arith.mulf %107, %111 : vector<8x32xf32>
    %113 = vector.broadcast %92 : vector<1x32xf32> to vector<8x32xf32>
    %114 = arith.mulf %112, %113 : vector<8x32xf32>
    %115 = vector.broadcast %93 : vector<1x32xf32> to vector<8x32xf32>
    %116 = arith.addf %114, %115 : vector<8x32xf32>
    %117 = arith.truncf %116 : vector<8x32xf32> to vector<8x32xbf16>
    %c0_40 = arith.constant 0 : index
    %c0_41 = arith.constant 0 : index
    %118 = vector.load %arg8[%c0_40, %c0_41] : memref<32x32xbf16, #tpu.memory_space<vmem>>, vector<32x32xbf16>
    %cst_42 = arith.constant dense<0.000000e+00> : vector<8x32xf32>
    %119 = tpu.matmul %117, %118, %cst_42 {dimension_numbers = #tpu.dot_dimension_numbers<[1], [0], [0], [1], [0, 0, 1, 1], [], []>} : vector<8x32xbf16>, vector<32x32xbf16>, vector<8x32xf32> -> vector<8x32xf32>
    %c0_43 = arith.constant 0 : index
    %c0_44 = arith.constant 0 : index
    %120 = vector.load %arg9[%c0_43, %c0_44] : memref<1x32xf32, #tpu.memory_space<vmem>>, vector<1x32xf32>
    %121 = vector.broadcast %120 : vector<1x32xf32> to vector<8x32xf32>
    %122 = arith.addf %119, %121 : vector<8x32xf32>
    %c0_45 = arith.constant 0 : index
    %c0_46 = arith.constant 0 : index
    %123 = vector.load %arg10[%c0_45, %c0_46] : memref<32x64xbf16, #tpu.memory_space<vmem>>, vector<32x64xbf16>
    %cst_47 = arith.constant dense<0.000000e+00> : vector<16x64xf32>
    %124 = tpu.matmul %4, %123, %cst_47 {dimension_numbers = #tpu.dot_dimension_numbers<[1], [0], [0], [1], [0, 0, 1, 1], [], []>} : vector<16x32xbf16>, vector<32x64xbf16>, vector<16x64xf32> -> vector<16x64xf32>
    %c0_48 = arith.constant 0 : index
    %c0_49 = arith.constant 0 : index
    %125 = vector.load %arg11[%c0_48, %c0_49] : memref<1x64xf32, #tpu.memory_space<vmem>>, vector<1x64xf32>
    %126 = vector.broadcast %125 : vector<1x64xf32> to vector<16x64xf32>
    %127 = arith.addf %124, %126 : vector<16x64xf32>
    %128 = vector.extract_strided_slice %127 {offsets = [0, 0], sizes = [16, 32], strides = [1, 1]} : vector<16x64xf32> to vector<16x32xf32>
    %129 = vector.extract_strided_slice %127 {offsets = [0, 32], sizes = [16, 32], strides = [1, 1]} : vector<16x64xf32> to vector<16x32xf32>
    %130 = vector.shape_cast %122 : vector<8x32xf32> to vector<1x8x32xf32>
    %131 = arith.truncf %130 : vector<1x8x32xf32> to vector<1x8x32xbf16>
    %132 = vector.shape_cast %128 : vector<16x32xf32> to vector<1x16x32xf32>
    %133 = arith.truncf %132 : vector<1x16x32xf32> to vector<1x16x32xbf16>
    %134 = vector.shape_cast %129 : vector<16x32xf32> to vector<1x16x32xf32>
    %135 = arith.truncf %134 : vector<1x16x32xf32> to vector<1x16x32xbf16>
    %136 = vector.extract_strided_slice %131 {offsets = [0, 0, 0], sizes = [1, 8, 8], strides = [1, 1, 1]} : vector<1x8x32xbf16> to vector<1x8x8xbf16>
    %137 = vector.extract_strided_slice %133 {offsets = [0, 0, 0], sizes = [1, 16, 8], strides = [1, 1, 1]} : vector<1x16x32xbf16> to vector<1x16x8xbf16>
    "tpu.trace_start"() <{level = 10 : i32, message = "bqd,bkd->bqk"}> : () -> ()
    %cst_50 = arith.constant dense<0.000000e+00> : vector<1x8x16xf32>
    %138 = tpu.matmul %136, %137, %cst_50 {dimension_numbers = #tpu.dot_dimension_numbers<[2], [2], [1], [1], [0, 0, 0, 1, 1, 1], [0], [0]>} : vector<1x8x8xbf16>, vector<1x16x8xbf16>, vector<1x8x16xf32> -> vector<1x8x16xf32>
    "tpu.trace_stop"() : () -> ()
    %cst_51 = arith.constant dense<0xFF800000> : vector<1x8xf32>
    %139 = vector.multi_reduction <maximumf>, %138, %cst_51 [2] : vector<1x8x16xf32> to vector<1x8xf32>
    %140 = vector.shape_cast %139 : vector<1x8xf32> to vector<1x8x1xf32>
    %141 = vector.broadcast %140 : vector<1x8x1xf32> to vector<1x8x16xf32>
    %142 = arith.subf %138, %141 : vector<1x8x16xf32>
    %143 = math.exp %142 : vector<1x8x16xf32>
    %cst_52 = arith.constant dense<0.000000e+00> : vector<1x8xf32>
    %144 = vector.multi_reduction <add>, %143, %cst_52 [2] : vector<1x8x16xf32> to vector<1x8xf32>
    %145 = vector.shape_cast %144 : vector<1x8xf32> to vector<1x8x1xf32>
    %146 = vector.broadcast %145 : vector<1x8x1xf32> to vector<1x8x16xf32>
    %147 = arith.divf %143, %146 : vector<1x8x16xf32>
    %148 = arith.truncf %147 : vector<1x8x16xf32> to vector<1x8x16xbf16>
    %149 = vector.extract_strided_slice %135 {offsets = [0, 0, 0], sizes = [1, 16, 8], strides = [1, 1, 1]} : vector<1x16x32xbf16> to vector<1x16x8xbf16>
    "tpu.trace_start"() <{level = 10 : i32, message = "bqk,bkd->bqd"}> : () -> ()
    %cst_53 = arith.constant dense<0.000000e+00> : vector<1x8x8xf32>
    %150 = tpu.matmul %148, %149, %cst_53 {dimension_numbers = #tpu.dot_dimension_numbers<[2], [1], [1], [2], [0, 0, 0, 1, 1, 2], [0], [0]>} : vector<1x8x16xbf16>, vector<1x16x8xbf16>, vector<1x8x8xf32> -> vector<1x8x8xf32>
    "tpu.trace_stop"() : () -> ()
    %151 = vector.extract_strided_slice %131 {offsets = [0, 0, 8], sizes = [1, 8, 8], strides = [1, 1, 1]} : vector<1x8x32xbf16> to vector<1x8x8xbf16>
    %152 = vector.extract_strided_slice %133 {offsets = [0, 0, 8], sizes = [1, 16, 8], strides = [1, 1, 1]} : vector<1x16x32xbf16> to vector<1x16x8xbf16>
    "tpu.trace_start"() <{level = 10 : i32, message = "bqd,bkd->bqk"}> : () -> ()
    %cst_54 = arith.constant dense<0.000000e+00> : vector<1x8x16xf32>
    %153 = tpu.matmul %151, %152, %cst_54 {dimension_numbers = #tpu.dot_dimension_numbers<[2], [2], [1], [1], [0, 0, 0, 1, 1, 1], [0], [0]>} : vector<1x8x8xbf16>, vector<1x16x8xbf16>, vector<1x8x16xf32> -> vector<1x8x16xf32>
    "tpu.trace_stop"() : () -> ()
    %cst_55 = arith.constant dense<0xFF800000> : vector<1x8xf32>
    %154 = vector.multi_reduction <maximumf>, %153, %cst_55 [2] : vector<1x8x16xf32> to vector<1x8xf32>
    %155 = vector.shape_cast %154 : vector<1x8xf32> to vector<1x8x1xf32>
    %156 = vector.broadcast %155 : vector<1x8x1xf32> to vector<1x8x16xf32>
    %157 = arith.subf %153, %156 : vector<1x8x16xf32>
    %158 = math.exp %157 : vector<1x8x16xf32>
    %cst_56 = arith.constant dense<0.000000e+00> : vector<1x8xf32>
    %159 = vector.multi_reduction <add>, %158, %cst_56 [2] : vector<1x8x16xf32> to vector<1x8xf32>
    %160 = vector.shape_cast %159 : vector<1x8xf32> to vector<1x8x1xf32>
    %161 = vector.broadcast %160 : vector<1x8x1xf32> to vector<1x8x16xf32>
    %162 = arith.divf %158, %161 : vector<1x8x16xf32>
    %163 = arith.truncf %162 : vector<1x8x16xf32> to vector<1x8x16xbf16>
    %164 = vector.extract_strided_slice %135 {offsets = [0, 0, 8], sizes = [1, 16, 8], strides = [1, 1, 1]} : vector<1x16x32xbf16> to vector<1x16x8xbf16>
    "tpu.trace_start"() <{level = 10 : i32, message = "bqk,bkd->bqd"}> : () -> ()
    %cst_57 = arith.constant dense<0.000000e+00> : vector<1x8x8xf32>
    %165 = tpu.matmul %163, %164, %cst_57 {dimension_numbers = #tpu.dot_dimension_numbers<[2], [1], [1], [2], [0, 0, 0, 1, 1, 2], [0], [0]>} : vector<1x8x16xbf16>, vector<1x16x8xbf16>, vector<1x8x8xf32> -> vector<1x8x8xf32>
    "tpu.trace_stop"() : () -> ()
    %166 = vector.extract_strided_slice %131 {offsets = [0, 0, 16], sizes = [1, 8, 8], strides = [1, 1, 1]} : vector<1x8x32xbf16> to vector<1x8x8xbf16>
    %167 = vector.extract_strided_slice %133 {offsets = [0, 0, 16], sizes = [1, 16, 8], strides = [1, 1, 1]} : vector<1x16x32xbf16> to vector<1x16x8xbf16>
    "tpu.trace_start"() <{level = 10 : i32, message = "bqd,bkd->bqk"}> : () -> ()
    %cst_58 = arith.constant dense<0.000000e+00> : vector<1x8x16xf32>
    %168 = tpu.matmul %166, %167, %cst_58 {dimension_numbers = #tpu.dot_dimension_numbers<[2], [2], [1], [1], [0, 0, 0, 1, 1, 1], [0], [0]>} : vector<1x8x8xbf16>, vector<1x16x8xbf16>, vector<1x8x16xf32> -> vector<1x8x16xf32>
    "tpu.trace_stop"() : () -> ()
    %cst_59 = arith.constant dense<0xFF800000> : vector<1x8xf32>
    %169 = vector.multi_reduction <maximumf>, %168, %cst_59 [2] : vector<1x8x16xf32> to vector<1x8xf32>
    %170 = vector.shape_cast %169 : vector<1x8xf32> to vector<1x8x1xf32>
    %171 = vector.broadcast %170 : vector<1x8x1xf32> to vector<1x8x16xf32>
    %172 = arith.subf %168, %171 : vector<1x8x16xf32>
    %173 = math.exp %172 : vector<1x8x16xf32>
    %cst_60 = arith.constant dense<0.000000e+00> : vector<1x8xf32>
    %174 = vector.multi_reduction <add>, %173, %cst_60 [2] : vector<1x8x16xf32> to vector<1x8xf32>
    %175 = vector.shape_cast %174 : vector<1x8xf32> to vector<1x8x1xf32>
    %176 = vector.broadcast %175 : vector<1x8x1xf32> to vector<1x8x16xf32>
    %177 = arith.divf %173, %176 : vector<1x8x16xf32>
    %178 = arith.truncf %177 : vector<1x8x16xf32> to vector<1x8x16xbf16>
    %179 = vector.extract_strided_slice %135 {offsets = [0, 0, 16], sizes = [1, 16, 8], strides = [1, 1, 1]} : vector<1x16x32xbf16> to vector<1x16x8xbf16>
    "tpu.trace_start"() <{level = 10 : i32, message = "bqk,bkd->bqd"}> : () -> ()
    %cst_61 = arith.constant dense<0.000000e+00> : vector<1x8x8xf32>
    %180 = tpu.matmul %178, %179, %cst_61 {dimension_numbers = #tpu.dot_dimension_numbers<[2], [1], [1], [2], [0, 0, 0, 1, 1, 2], [0], [0]>} : vector<1x8x16xbf16>, vector<1x16x8xbf16>, vector<1x8x8xf32> -> vector<1x8x8xf32>
    "tpu.trace_stop"() : () -> ()
    %181 = vector.extract_strided_slice %131 {offsets = [0, 0, 24], sizes = [1, 8, 8], strides = [1, 1, 1]} : vector<1x8x32xbf16> to vector<1x8x8xbf16>
    %182 = vector.extract_strided_slice %133 {offsets = [0, 0, 24], sizes = [1, 16, 8], strides = [1, 1, 1]} : vector<1x16x32xbf16> to vector<1x16x8xbf16>
    "tpu.trace_start"() <{level = 10 : i32, message = "bqd,bkd->bqk"}> : () -> ()
    %cst_62 = arith.constant dense<0.000000e+00> : vector<1x8x16xf32>
    %183 = tpu.matmul %181, %182, %cst_62 {dimension_numbers = #tpu.dot_dimension_numbers<[2], [2], [1], [1], [0, 0, 0, 1, 1, 1], [0], [0]>} : vector<1x8x8xbf16>, vector<1x16x8xbf16>, vector<1x8x16xf32> -> vector<1x8x16xf32>
    "tpu.trace_stop"() : () -> ()
    %cst_63 = arith.constant dense<0xFF800000> : vector<1x8xf32>
    %184 = vector.multi_reduction <maximumf>, %183, %cst_63 [2] : vector<1x8x16xf32> to vector<1x8xf32>
    %185 = vector.shape_cast %184 : vector<1x8xf32> to vector<1x8x1xf32>
    %186 = vector.broadcast %185 : vector<1x8x1xf32> to vector<1x8x16xf32>
    %187 = arith.subf %183, %186 : vector<1x8x16xf32>
    %188 = math.exp %187 : vector<1x8x16xf32>
    %cst_64 = arith.constant dense<0.000000e+00> : vector<1x8xf32>
    %189 = vector.multi_reduction <add>, %188, %cst_64 [2] : vector<1x8x16xf32> to vector<1x8xf32>
    %190 = vector.shape_cast %189 : vector<1x8xf32> to vector<1x8x1xf32>
    %191 = vector.broadcast %190 : vector<1x8x1xf32> to vector<1x8x16xf32>
    %192 = arith.divf %188, %191 : vector<1x8x16xf32>
    %193 = arith.truncf %192 : vector<1x8x16xf32> to vector<1x8x16xbf16>
    %194 = vector.extract_strided_slice %135 {offsets = [0, 0, 24], sizes = [1, 16, 8], strides = [1, 1, 1]} : vector<1x16x32xbf16> to vector<1x16x8xbf16>
    "tpu.trace_start"() <{level = 10 : i32, message = "bqk,bkd->bqd"}> : () -> ()
    %cst_65 = arith.constant dense<0.000000e+00> : vector<1x8x8xf32>
    %195 = tpu.matmul %193, %194, %cst_65 {dimension_numbers = #tpu.dot_dimension_numbers<[2], [1], [1], [2], [0, 0, 0, 1, 1, 2], [0], [0]>} : vector<1x8x16xbf16>, vector<1x16x8xbf16>, vector<1x8x8xf32> -> vector<1x8x8xf32>
    "tpu.trace_stop"() : () -> ()
    %196 = tpu.concatenate %150, %165, %180, %195 in 2 : vector<1x8x8xf32>, vector<1x8x8xf32>, vector<1x8x8xf32>, vector<1x8x8xf32> -> vector<1x8x32xf32>
    %197 = vector.shape_cast %196 : vector<1x8x32xf32> to vector<8x32xf32>
    %198 = arith.truncf %197 : vector<8x32xf32> to vector<8x32xbf16>
    %c0_66 = arith.constant 0 : index
    %c0_67 = arith.constant 0 : index
    %199 = vector.load %arg12[%c0_66, %c0_67] : memref<32x32xbf16, #tpu.memory_space<vmem>>, vector<32x32xbf16>
    %cst_68 = arith.constant dense<0.000000e+00> : vector<8x32xf32>
    %200 = tpu.matmul %198, %199, %cst_68 {dimension_numbers = #tpu.dot_dimension_numbers<[1], [0], [0], [1], [0, 0, 1, 1], [], []>} : vector<8x32xbf16>, vector<32x32xbf16>, vector<8x32xf32> -> vector<8x32xf32>
    %c0_69 = arith.constant 0 : index
    %c0_70 = arith.constant 0 : index
    %201 = vector.load %arg13[%c0_69, %c0_70] : memref<1x32xf32, #tpu.memory_space<vmem>>, vector<1x32xf32>
    %202 = vector.broadcast %201 : vector<1x32xf32> to vector<8x32xf32>
    %203 = arith.addf %200, %202 : vector<8x32xf32>
    %c0_71 = arith.constant 0 : index
    %c0_72 = arith.constant 0 : index
    %204 = vector.load %arg14[%c0_71, %c0_72] : memref<32x64xbf16, #tpu.memory_space<vmem>>, vector<32x64xbf16>
    %cst_73 = arith.constant dense<0.000000e+00> : vector<8x64xf32>
    %205 = tpu.matmul %117, %204, %cst_73 {dimension_numbers = #tpu.dot_dimension_numbers<[1], [0], [0], [1], [0, 0, 1, 1], [], []>} : vector<8x32xbf16>, vector<32x64xbf16>, vector<8x64xf32> -> vector<8x64xf32>
    %c0_74 = arith.constant 0 : index
    %c0_75 = arith.constant 0 : index
    %206 = vector.load %arg15[%c0_74, %c0_75] : memref<1x64xf32, #tpu.memory_space<vmem>>, vector<1x64xf32>
    %207 = vector.broadcast %206 : vector<1x64xf32> to vector<8x64xf32>
    %208 = arith.addf %205, %207 : vector<8x64xf32>
    %c0_76 = arith.constant 0 : index
    %c0_77 = arith.constant 0 : index
    %209 = vector.load %arg16[%c0_76, %c0_77] : memref<64x128xbf16, #tpu.memory_space<vmem>>, vector<64x128xbf16>
    %cst_78 = arith.constant dense<0.000000e+00> : vector<8x128xf32>
    %210 = tpu.matmul %7, %209, %cst_78 {dimension_numbers = #tpu.dot_dimension_numbers<[1], [0], [0], [1], [0, 0, 1, 1], [], []>} : vector<8x64xbf16>, vector<64x128xbf16>, vector<8x128xf32> -> vector<8x128xf32>
    %c0_79 = arith.constant 0 : index
    %c0_80 = arith.constant 0 : index
    %211 = vector.load %arg17[%c0_79, %c0_80] : memref<1x128xf32, #tpu.memory_space<vmem>>, vector<1x128xf32>
    %212 = vector.broadcast %211 : vector<1x128xf32> to vector<8x128xf32>
    %213 = arith.addf %210, %212 : vector<8x128xf32>
    %214 = vector.extract_strided_slice %213 {offsets = [0, 0], sizes = [8, 64], strides = [1, 1]} : vector<8x128xf32> to vector<8x64xf32>
    %215 = vector.extract_strided_slice %213 {offsets = [0, 64], sizes = [8, 64], strides = [1, 1]} : vector<8x128xf32> to vector<8x64xf32>
    %216 = vector.shape_cast %208 : vector<8x64xf32> to vector<1x8x64xf32>
    %217 = arith.truncf %216 : vector<1x8x64xf32> to vector<1x8x64xbf16>
    %218 = vector.shape_cast %214 : vector<8x64xf32> to vector<1x8x64xf32>
    %219 = arith.truncf %218 : vector<1x8x64xf32> to vector<1x8x64xbf16>
    %220 = vector.shape_cast %215 : vector<8x64xf32> to vector<1x8x64xf32>
    %221 = arith.truncf %220 : vector<1x8x64xf32> to vector<1x8x64xbf16>
    %222 = vector.extract_strided_slice %217 {offsets = [0, 0, 0], sizes = [1, 8, 16], strides = [1, 1, 1]} : vector<1x8x64xbf16> to vector<1x8x16xbf16>
    %223 = vector.extract_strided_slice %219 {offsets = [0, 0, 0], sizes = [1, 8, 16], strides = [1, 1, 1]} : vector<1x8x64xbf16> to vector<1x8x16xbf16>
    "tpu.trace_start"() <{level = 10 : i32, message = "bqd,bkd->bqk"}> : () -> ()
    %cst_81 = arith.constant dense<0.000000e+00> : vector<1x8x8xf32>
    %224 = tpu.matmul %222, %223, %cst_81 {dimension_numbers = #tpu.dot_dimension_numbers<[2], [2], [1], [1], [0, 0, 0, 1, 1, 1], [0], [0]>} : vector<1x8x16xbf16>, vector<1x8x16xbf16>, vector<1x8x8xf32> -> vector<1x8x8xf32>
    "tpu.trace_stop"() : () -> ()
    %cst_82 = arith.constant dense<0xFF800000> : vector<1x8xf32>
    %225 = vector.multi_reduction <maximumf>, %224, %cst_82 [2] : vector<1x8x8xf32> to vector<1x8xf32>
    %226 = vector.shape_cast %225 : vector<1x8xf32> to vector<1x8x1xf32>
    %227 = vector.broadcast %226 : vector<1x8x1xf32> to vector<1x8x8xf32>
    %228 = arith.subf %224, %227 : vector<1x8x8xf32>
    %229 = math.exp %228 : vector<1x8x8xf32>
    %cst_83 = arith.constant dense<0.000000e+00> : vector<1x8xf32>
    %230 = vector.multi_reduction <add>, %229, %cst_83 [2] : vector<1x8x8xf32> to vector<1x8xf32>
    %231 = vector.shape_cast %230 : vector<1x8xf32> to vector<1x8x1xf32>
    %232 = vector.broadcast %231 : vector<1x8x1xf32> to vector<1x8x8xf32>
    %233 = arith.divf %229, %232 : vector<1x8x8xf32>
    %234 = arith.truncf %233 : vector<1x8x8xf32> to vector<1x8x8xbf16>
    %235 = vector.extract_strided_slice %221 {offsets = [0, 0, 0], sizes = [1, 8, 16], strides = [1, 1, 1]} : vector<1x8x64xbf16> to vector<1x8x16xbf16>
    "tpu.trace_start"() <{level = 10 : i32, message = "bqk,bkd->bqd"}> : () -> ()
    %cst_84 = arith.constant dense<0.000000e+00> : vector<1x8x16xf32>
    %236 = tpu.matmul %234, %235, %cst_84 {dimension_numbers = #tpu.dot_dimension_numbers<[2], [1], [1], [2], [0, 0, 0, 1, 1, 2], [0], [0]>} : vector<1x8x8xbf16>, vector<1x8x16xbf16>, vector<1x8x16xf32> -> vector<1x8x16xf32>
    "tpu.trace_stop"() : () -> ()
    %237 = vector.extract_strided_slice %217 {offsets = [0, 0, 16], sizes = [1, 8, 16], strides = [1, 1, 1]} : vector<1x8x64xbf16> to vector<1x8x16xbf16>
    %238 = vector.extract_strided_slice %219 {offsets = [0, 0, 16], sizes = [1, 8, 16], strides = [1, 1, 1]} : vector<1x8x64xbf16> to vector<1x8x16xbf16>
    "tpu.trace_start"() <{level = 10 : i32, message = "bqd,bkd->bqk"}> : () -> ()
    %cst_85 = arith.constant dense<0.000000e+00> : vector<1x8x8xf32>
    %239 = tpu.matmul %237, %238, %cst_85 {dimension_numbers = #tpu.dot_dimension_numbers<[2], [2], [1], [1], [0, 0, 0, 1, 1, 1], [0], [0]>} : vector<1x8x16xbf16>, vector<1x8x16xbf16>, vector<1x8x8xf32> -> vector<1x8x8xf32>
    "tpu.trace_stop"() : () -> ()
    %cst_86 = arith.constant dense<0xFF800000> : vector<1x8xf32>
    %240 = vector.multi_reduction <maximumf>, %239, %cst_86 [2] : vector<1x8x8xf32> to vector<1x8xf32>
    %241 = vector.shape_cast %240 : vector<1x8xf32> to vector<1x8x1xf32>
    %242 = vector.broadcast %241 : vector<1x8x1xf32> to vector<1x8x8xf32>
    %243 = arith.subf %239, %242 : vector<1x8x8xf32>
    %244 = math.exp %243 : vector<1x8x8xf32>
    %cst_87 = arith.constant dense<0.000000e+00> : vector<1x8xf32>
    %245 = vector.multi_reduction <add>, %244, %cst_87 [2] : vector<1x8x8xf32> to vector<1x8xf32>
    %246 = vector.shape_cast %245 : vector<1x8xf32> to vector<1x8x1xf32>
    %247 = vector.broadcast %246 : vector<1x8x1xf32> to vector<1x8x8xf32>
    %248 = arith.divf %244, %247 : vector<1x8x8xf32>
    %249 = arith.truncf %248 : vector<1x8x8xf32> to vector<1x8x8xbf16>
    %250 = vector.extract_strided_slice %221 {offsets = [0, 0, 16], sizes = [1, 8, 16], strides = [1, 1, 1]} : vector<1x8x64xbf16> to vector<1x8x16xbf16>
    "tpu.trace_start"() <{level = 10 : i32, message = "bqk,bkd->bqd"}> : () -> ()
    %cst_88 = arith.constant dense<0.000000e+00> : vector<1x8x16xf32>
    %251 = tpu.matmul %249, %250, %cst_88 {dimension_numbers = #tpu.dot_dimension_numbers<[2], [1], [1], [2], [0, 0, 0, 1, 1, 2], [0], [0]>} : vector<1x8x8xbf16>, vector<1x8x16xbf16>, vector<1x8x16xf32> -> vector<1x8x16xf32>
    "tpu.trace_stop"() : () -> ()
    %252 = vector.extract_strided_slice %217 {offsets = [0, 0, 32], sizes = [1, 8, 16], strides = [1, 1, 1]} : vector<1x8x64xbf16> to vector<1x8x16xbf16>
    %253 = vector.extract_strided_slice %219 {offsets = [0, 0, 32], sizes = [1, 8, 16], strides = [1, 1, 1]} : vector<1x8x64xbf16> to vector<1x8x16xbf16>
    "tpu.trace_start"() <{level = 10 : i32, message = "bqd,bkd->bqk"}> : () -> ()
    %cst_89 = arith.constant dense<0.000000e+00> : vector<1x8x8xf32>
    %254 = tpu.matmul %252, %253, %cst_89 {dimension_numbers = #tpu.dot_dimension_numbers<[2], [2], [1], [1], [0, 0, 0, 1, 1, 1], [0], [0]>} : vector<1x8x16xbf16>, vector<1x8x16xbf16>, vector<1x8x8xf32> -> vector<1x8x8xf32>
    "tpu.trace_stop"() : () -> ()
    %cst_90 = arith.constant dense<0xFF800000> : vector<1x8xf32>
    %255 = vector.multi_reduction <maximumf>, %254, %cst_90 [2] : vector<1x8x8xf32> to vector<1x8xf32>
    %256 = vector.shape_cast %255 : vector<1x8xf32> to vector<1x8x1xf32>
    %257 = vector.broadcast %256 : vector<1x8x1xf32> to vector<1x8x8xf32>
    %258 = arith.subf %254, %257 : vector<1x8x8xf32>
    %259 = math.exp %258 : vector<1x8x8xf32>
    %cst_91 = arith.constant dense<0.000000e+00> : vector<1x8xf32>
    %260 = vector.multi_reduction <add>, %259, %cst_91 [2] : vector<1x8x8xf32> to vector<1x8xf32>
    %261 = vector.shape_cast %260 : vector<1x8xf32> to vector<1x8x1xf32>
    %262 = vector.broadcast %261 : vector<1x8x1xf32> to vector<1x8x8xf32>
    %263 = arith.divf %259, %262 : vector<1x8x8xf32>
    %264 = arith.truncf %263 : vector<1x8x8xf32> to vector<1x8x8xbf16>
    %265 = vector.extract_strided_slice %221 {offsets = [0, 0, 32], sizes = [1, 8, 16], strides = [1, 1, 1]} : vector<1x8x64xbf16> to vector<1x8x16xbf16>
    "tpu.trace_start"() <{level = 10 : i32, message = "bqk,bkd->bqd"}> : () -> ()
    %cst_92 = arith.constant dense<0.000000e+00> : vector<1x8x16xf32>
    %266 = tpu.matmul %264, %265, %cst_92 {dimension_numbers = #tpu.dot_dimension_numbers<[2], [1], [1], [2], [0, 0, 0, 1, 1, 2], [0], [0]>} : vector<1x8x8xbf16>, vector<1x8x16xbf16>, vector<1x8x16xf32> -> vector<1x8x16xf32>
    "tpu.trace_stop"() : () -> ()
    %267 = vector.extract_strided_slice %217 {offsets = [0, 0, 48], sizes = [1, 8, 16], strides = [1, 1, 1]} : vector<1x8x64xbf16> to vector<1x8x16xbf16>
    %268 = vector.extract_strided_slice %219 {offsets = [0, 0, 48], sizes = [1, 8, 16], strides = [1, 1, 1]} : vector<1x8x64xbf16> to vector<1x8x16xbf16>
    "tpu.trace_start"() <{level = 10 : i32, message = "bqd,bkd->bqk"}> : () -> ()
    %cst_93 = arith.constant dense<0.000000e+00> : vector<1x8x8xf32>
    %269 = tpu.matmul %267, %268, %cst_93 {dimension_numbers = #tpu.dot_dimension_numbers<[2], [2], [1], [1], [0, 0, 0, 1, 1, 1], [0], [0]>} : vector<1x8x16xbf16>, vector<1x8x16xbf16>, vector<1x8x8xf32> -> vector<1x8x8xf32>
    "tpu.trace_stop"() : () -> ()
    %cst_94 = arith.constant dense<0xFF800000> : vector<1x8xf32>
    %270 = vector.multi_reduction <maximumf>, %269, %cst_94 [2] : vector<1x8x8xf32> to vector<1x8xf32>
    %271 = vector.shape_cast %270 : vector<1x8xf32> to vector<1x8x1xf32>
    %272 = vector.broadcast %271 : vector<1x8x1xf32> to vector<1x8x8xf32>
    %273 = arith.subf %269, %272 : vector<1x8x8xf32>
    %274 = math.exp %273 : vector<1x8x8xf32>
    %cst_95 = arith.constant dense<0.000000e+00> : vector<1x8xf32>
    %275 = vector.multi_reduction <add>, %274, %cst_95 [2] : vector<1x8x8xf32> to vector<1x8xf32>
    %276 = vector.shape_cast %275 : vector<1x8xf32> to vector<1x8x1xf32>
    %277 = vector.broadcast %276 : vector<1x8x1xf32> to vector<1x8x8xf32>
    %278 = arith.divf %274, %277 : vector<1x8x8xf32>
    %279 = arith.truncf %278 : vector<1x8x8xf32> to vector<1x8x8xbf16>
    %280 = vector.extract_strided_slice %221 {offsets = [0, 0, 48], sizes = [1, 8, 16], strides = [1, 1, 1]} : vector<1x8x64xbf16> to vector<1x8x16xbf16>
    "tpu.trace_start"() <{level = 10 : i32, message = "bqk,bkd->bqd"}> : () -> ()
    %cst_96 = arith.constant dense<0.000000e+00> : vector<1x8x16xf32>
    %281 = tpu.matmul %279, %280, %cst_96 {dimension_numbers = #tpu.dot_dimension_numbers<[2], [1], [1], [2], [0, 0, 0, 1, 1, 2], [0], [0]>} : vector<1x8x8xbf16>, vector<1x8x16xbf16>, vector<1x8x16xf32> -> vector<1x8x16xf32>
    "tpu.trace_stop"() : () -> ()
    %282 = tpu.concatenate %236, %251, %266, %281 in 2 : vector<1x8x16xf32>, vector<1x8x16xf32>, vector<1x8x16xf32>, vector<1x8x16xf32> -> vector<1x8x64xf32>
    %283 = vector.shape_cast %282 : vector<1x8x64xf32> to vector<8x64xf32>
    %284 = arith.truncf %283 : vector<8x64xf32> to vector<8x64xbf16>
    %c0_97 = arith.constant 0 : index
    %c0_98 = arith.constant 0 : index
    %285 = vector.load %arg18[%c0_97, %c0_98] : memref<64x64xbf16, #tpu.memory_space<vmem>>, vector<64x64xbf16>
    %cst_99 = arith.constant dense<0.000000e+00> : vector<8x64xf32>
    %286 = tpu.matmul %284, %285, %cst_99 {dimension_numbers = #tpu.dot_dimension_numbers<[1], [0], [0], [1], [0, 0, 1, 1], [], []>} : vector<8x64xbf16>, vector<64x64xbf16>, vector<8x64xf32> -> vector<8x64xf32>
    %c0_100 = arith.constant 0 : index
    %c0_101 = arith.constant 0 : index
    %287 = vector.load %arg19[%c0_100, %c0_101] : memref<1x64xf32, #tpu.memory_space<vmem>>, vector<1x64xf32>
    %288 = vector.broadcast %287 : vector<1x64xf32> to vector<8x64xf32>
    %289 = arith.addf %286, %288 : vector<8x64xf32>
    %290 = arith.truncf %203 : vector<8x32xf32> to vector<8x32xbf16>
    %c0_102 = arith.constant 0 : index
    %c0_103 = arith.constant 0 : index
    %291 = vector.load %arg20[%c0_102, %c0_103] : memref<32x32xbf16, #tpu.memory_space<vmem>>, vector<32x32xbf16>
    %cst_104 = arith.constant dense<0.000000e+00> : vector<8x32xf32>
    %292 = tpu.matmul %290, %291, %cst_104 {dimension_numbers = #tpu.dot_dimension_numbers<[1], [0], [0], [1], [0, 0, 1, 1], [], []>} : vector<8x32xbf16>, vector<32x32xbf16>, vector<8x32xf32> -> vector<8x32xf32>
    %293 = arith.truncf %289 : vector<8x64xf32> to vector<8x64xbf16>
    %c0_105 = arith.constant 0 : index
    %c0_106 = arith.constant 0 : index
    %294 = vector.load %arg21[%c0_105, %c0_106] : memref<64x32xbf16, #tpu.memory_space<vmem>>, vector<64x32xbf16>
    %cst_107 = arith.constant dense<0.000000e+00> : vector<8x32xf32>
    %295 = tpu.matmul %293, %294, %cst_107 {dimension_numbers = #tpu.dot_dimension_numbers<[1], [0], [0], [1], [0, 0, 1, 1], [], []>} : vector<8x64xbf16>, vector<64x32xbf16>, vector<8x32xf32> -> vector<8x32xf32>
    %296 = arith.addf %292, %295 : vector<8x32xf32>
    %c0_108 = arith.constant 0 : index
    %c0_109 = arith.constant 0 : index
    %297 = vector.load %arg22[%c0_108, %c0_109] : memref<1x32xf32, #tpu.memory_space<vmem>>, vector<1x32xf32>
    %298 = vector.broadcast %297 : vector<1x32xf32> to vector<8x32xf32>
    %299 = arith.addf %296, %298 : vector<8x32xf32>
    %300 = vector.extract_strided_slice %8 {offsets = [2, 0], sizes = [1, 32], strides = [1, 1]} : vector<6x32xf32> to vector<1x32xf32>
    %301 = vector.extract_strided_slice %8 {offsets = [3, 0], sizes = [1, 32], strides = [1, 1]} : vector<6x32xf32> to vector<1x32xf32>
    %302 = arith.addf %116, %299 : vector<8x32xf32>
    %cst_110 = arith.constant dense<0.000000e+00> : vector<8xf32>
    %303 = vector.multi_reduction <add>, %302, %cst_110 [1] : vector<8x32xf32> to vector<8xf32>
    %304 = vector.shape_cast %303 : vector<8xf32> to vector<8x1xf32>
    %cst_111 = arith.constant 3.200000e+01 : f32
    %305 = vector.broadcast %cst_111 : f32 to vector<8x1xf32>
    %306 = arith.divf %304, %305 : vector<8x1xf32>
    %307 = vector.broadcast %306 : vector<8x1xf32> to vector<8x32xf32>
    %308 = arith.subf %302, %307 : vector<8x32xf32>
    %309 = arith.mulf %308, %308 : vector<8x32xf32>
    %cst_112 = arith.constant dense<0.000000e+00> : vector<8xf32>
    %310 = vector.multi_reduction <add>, %309, %cst_112 [1] : vector<8x32xf32> to vector<8xf32>
    %311 = vector.shape_cast %310 : vector<8xf32> to vector<8x1xf32>
    %cst_113 = arith.constant 3.200000e+01 : f32
    %312 = vector.broadcast %cst_113 : f32 to vector<8x1xf32>
    %313 = arith.divf %311, %312 : vector<8x1xf32>
    %314 = vector.broadcast %306 : vector<8x1xf32> to vector<8x32xf32>
    %315 = arith.subf %302, %314 : vector<8x32xf32>
    %cst_114 = arith.constant 9.99999974E-6 : f32
    %316 = vector.broadcast %cst_114 : f32 to vector<8x1xf32>
    %317 = arith.addf %313, %316 : vector<8x1xf32>
    %318 = math.rsqrt %317 : vector<8x1xf32>
    %319 = vector.broadcast %318 : vector<8x1xf32> to vector<8x32xf32>
    %320 = arith.mulf %315, %319 : vector<8x32xf32>
    %321 = vector.broadcast %300 : vector<1x32xf32> to vector<8x32xf32>
    %322 = arith.mulf %320, %321 : vector<8x32xf32>
    %323 = vector.broadcast %301 : vector<1x32xf32> to vector<8x32xf32>
    %324 = arith.addf %322, %323 : vector<8x32xf32>
    %325 = arith.truncf %324 : vector<8x32xf32> to vector<8x32xbf16>
    %c0_115 = arith.constant 0 : index
    %c0_116 = arith.constant 0 : index
    %326 = vector.load %arg23[%c0_115, %c0_116] : memref<32x64xbf16, #tpu.memory_space<vmem>>, vector<32x64xbf16>
    %cst_117 = arith.constant dense<0.000000e+00> : vector<8x64xf32>
    %327 = tpu.matmul %325, %326, %cst_117 {dimension_numbers = #tpu.dot_dimension_numbers<[1], [0], [0], [1], [0, 0, 1, 1], [], []>} : vector<8x32xbf16>, vector<32x64xbf16>, vector<8x64xf32> -> vector<8x64xf32>
    %c0_118 = arith.constant 0 : index
    %c0_119 = arith.constant 0 : index
    %328 = vector.load %arg24[%c0_118, %c0_119] : memref<1x64xf32, #tpu.memory_space<vmem>>, vector<1x64xf32>
    %329 = vector.broadcast %328 : vector<1x64xf32> to vector<8x64xf32>
    %330 = arith.addf %327, %329 : vector<8x64xf32>
    %cst_120 = arith.constant 0.000000e+00 : f32
    %331 = vector.broadcast %cst_120 : f32 to vector<8x64xf32>
    %332 = arith.maximumf %330, %331 : vector<8x64xf32>
    %333 = arith.truncf %332 : vector<8x64xf32> to vector<8x64xbf16>
    %c0_121 = arith.constant 0 : index
    %c0_122 = arith.constant 0 : index
    %334 = vector.load %arg25[%c0_121, %c0_122] : memref<64x32xbf16, #tpu.memory_space<vmem>>, vector<64x32xbf16>
    %cst_123 = arith.constant dense<0.000000e+00> : vector<8x32xf32>
    %335 = tpu.matmul %333, %334, %cst_123 {dimension_numbers = #tpu.dot_dimension_numbers<[1], [0], [0], [1], [0, 0, 1, 1], [], []>} : vector<8x64xbf16>, vector<64x32xbf16>, vector<8x32xf32> -> vector<8x32xf32>
    %c0_124 = arith.constant 0 : index
    %c0_125 = arith.constant 0 : index
    %336 = vector.load %arg26[%c0_124, %c0_125] : memref<1x32xf32, #tpu.memory_space<vmem>>, vector<1x32xf32>
    %337 = vector.broadcast %336 : vector<1x32xf32> to vector<8x32xf32>
    %338 = arith.addf %335, %337 : vector<8x32xf32>
    %339 = vector.extract_strided_slice %8 {offsets = [4, 0], sizes = [1, 32], strides = [1, 1]} : vector<6x32xf32> to vector<1x32xf32>
    %340 = vector.extract_strided_slice %8 {offsets = [5, 0], sizes = [1, 32], strides = [1, 1]} : vector<6x32xf32> to vector<1x32xf32>
    %341 = arith.addf %324, %338 : vector<8x32xf32>
    %cst_126 = arith.constant dense<0.000000e+00> : vector<8xf32>
    %342 = vector.multi_reduction <add>, %341, %cst_126 [1] : vector<8x32xf32> to vector<8xf32>
    %343 = vector.shape_cast %342 : vector<8xf32> to vector<8x1xf32>
    %cst_127 = arith.constant 3.200000e+01 : f32
    %344 = vector.broadcast %cst_127 : f32 to vector<8x1xf32>
    %345 = arith.divf %343, %344 : vector<8x1xf32>
    %346 = vector.broadcast %345 : vector<8x1xf32> to vector<8x32xf32>
    %347 = arith.subf %341, %346 : vector<8x32xf32>
    %348 = arith.mulf %347, %347 : vector<8x32xf32>
    %cst_128 = arith.constant dense<0.000000e+00> : vector<8xf32>
    %349 = vector.multi_reduction <add>, %348, %cst_128 [1] : vector<8x32xf32> to vector<8xf32>
    %350 = vector.shape_cast %349 : vector<8xf32> to vector<8x1xf32>
    %cst_129 = arith.constant 3.200000e+01 : f32
    %351 = vector.broadcast %cst_129 : f32 to vector<8x1xf32>
    %352 = arith.divf %350, %351 : vector<8x1xf32>
    %353 = vector.broadcast %345 : vector<8x1xf32> to vector<8x32xf32>
    %354 = arith.subf %341, %353 : vector<8x32xf32>
    %cst_130 = arith.constant 9.99999974E-6 : f32
    %355 = vector.broadcast %cst_130 : f32 to vector<8x1xf32>
    %356 = arith.addf %352, %355 : vector<8x1xf32>
    %357 = math.rsqrt %356 : vector<8x1xf32>
    %358 = vector.broadcast %357 : vector<8x1xf32> to vector<8x32xf32>
    %359 = arith.mulf %354, %358 : vector<8x32xf32>
    %360 = vector.broadcast %339 : vector<1x32xf32> to vector<8x32xf32>
    %361 = arith.mulf %359, %360 : vector<8x32xf32>
    %362 = vector.broadcast %340 : vector<1x32xf32> to vector<8x32xf32>
    %363 = arith.addf %361, %362 : vector<8x32xf32>
    %364 = vector.shape_cast %363 : vector<8x32xf32> to vector<1x8x32xf32>
    %365 = vector.extract_strided_slice %364 {offsets = [0, 0, 0], sizes = [1, 1, 32], strides = [1, 1, 1]} : vector<1x8x32xf32> to vector<1x1x32xf32>
    %366 = vector.shape_cast %365 : vector<1x1x32xf32> to vector<1x32xf32>
    %367 = vector.extract_strided_slice %364 {offsets = [0, 1, 0], sizes = [1, 1, 32], strides = [1, 1, 1]} : vector<1x8x32xf32> to vector<1x1x32xf32>
    %368 = vector.shape_cast %367 : vector<1x1x32xf32> to vector<1x32xf32>
    %369 = vector.extract_strided_slice %364 {offsets = [0, 2, 0], sizes = [1, 1, 32], strides = [1, 1, 1]} : vector<1x8x32xf32> to vector<1x1x32xf32>
    %370 = vector.shape_cast %369 : vector<1x1x32xf32> to vector<1x32xf32>
    %371 = vector.extract_strided_slice %364 {offsets = [0, 3, 0], sizes = [1, 1, 32], strides = [1, 1, 1]} : vector<1x8x32xf32> to vector<1x1x32xf32>
    %372 = vector.shape_cast %371 : vector<1x1x32xf32> to vector<1x32xf32>
    %373 = vector.extract_strided_slice %364 {offsets = [0, 4, 0], sizes = [1, 1, 32], strides = [1, 1, 1]} : vector<1x8x32xf32> to vector<1x1x32xf32>
    %374 = vector.shape_cast %373 : vector<1x1x32xf32> to vector<1x32xf32>
    %375 = vector.extract_strided_slice %364 {offsets = [0, 5, 0], sizes = [1, 1, 32], strides = [1, 1, 1]} : vector<1x8x32xf32> to vector<1x1x32xf32>
    %376 = vector.shape_cast %375 : vector<1x1x32xf32> to vector<1x32xf32>
    %377 = vector.extract_strided_slice %364 {offsets = [0, 6, 0], sizes = [1, 1, 32], strides = [1, 1, 1]} : vector<1x8x32xf32> to vector<1x1x32xf32>
    %378 = vector.shape_cast %377 : vector<1x1x32xf32> to vector<1x32xf32>
    %379 = vector.extract_strided_slice %364 {offsets = [0, 7, 0], sizes = [1, 1, 32], strides = [1, 1, 1]} : vector<1x8x32xf32> to vector<1x1x32xf32>
    %380 = vector.shape_cast %379 : vector<1x1x32xf32> to vector<1x32xf32>
    %381 = tpu.concatenate %366, %368, %370, %372, %374, %376, %378, %380 in 1 : vector<1x32xf32>, vector<1x32xf32>, vector<1x32xf32>, vector<1x32xf32>, vector<1x32xf32>, vector<1x32xf32>, vector<1x32xf32>, vector<1x32xf32> -> vector<1x256xf32>
    %c0_131 = arith.constant 0 : index
    %c0_132 = arith.constant 0 : index
    %c0_133 = arith.constant 0 : index
    %382 = vector.load %arg28[%c0_131, %c0_132, %c0_133] : memref<1x1x256xf32, #tpu.memory_space<vmem>>, vector<1x1x256xf32>
    %383 = vector.shape_cast %382 : vector<1x1x256xf32> to vector<1x256xf32>
    %384 = vector.shape_cast %381 : vector<1x256xf32> to vector<1x1x256xf32>
    tpu.vector_store %arg28[%c0_131, %c0_132, %c0_133], %384 {strides = array<i32>} : memref<1x1x256xf32, #tpu.memory_space<vmem>>, vector<1x1x256xf32>,
    return
  }
  func.func @transform_0(%arg0: i32) -> (i32, i32, i32) {
    %c0_i32 = arith.constant 0 : i32
    %c0_i32_0 = arith.constant 0 : i32
    %c0_i32_1 = arith.constant 0 : i32
    return %arg0, %c0_i32, %c0_i32_0 : i32, i32, i32
  }
  func.func @transform_1(%arg0: i32) -> (i32, i32, i32) {
    %c0_i32 = arith.constant 0 : i32
    %c0_i32_0 = arith.constant 0 : i32
    %c0_i32_1 = arith.constant 0 : i32
    return %arg0, %c0_i32, %c0_i32_0 : i32, i32, i32
  }
  func.func @transform_2(%arg0: i32) -> (i32, i32, i32) {
    %c0_i32 = arith.constant 0 : i32
    %c0_i32_0 = arith.constant 0 : i32
    %c0_i32_1 = arith.constant 0 : i32
    return %arg0, %c0_i32, %c0_i32_0 : i32, i32, i32
  }
  func.func @transform_3(%arg0: i32) -> (i32, i32) {
    %c0_i32 = arith.constant 0 : i32
    %c0_i32_0 = arith.constant 0 : i32
    %c0_i32_1 = arith.constant 0 : i32
    return %c0_i32, %c0_i32_0 : i32, i32
  }
  func.func @transform_4(%arg0: i32) -> (i32, i32) {
    %c0_i32 = arith.constant 0 : i32
    %c0_i32_0 = arith.constant 0 : i32
    %c0_i32_1 = arith.constant 0 : i32
    return %c0_i32, %c0_i32_0 : i32, i32
  }
  func.func @transform_5(%arg0: i32) -> (i32, i32) {
    %c0_i32 = arith.constant 0 : i32
    %c0_i32_0 = arith.constant 0 : i32
    %c0_i32_1 = arith.constant 0 : i32
    return %c0_i32, %c0_i32_0 : i32, i32
  }
  func.func @transform_6(%arg0: i32) -> (i32, i32) {
    %c0_i32 = arith.constant 0 : i32
    %c0_i32_0 = arith.constant 0 : i32
    %c0_i32_1 = arith.constant 0 : i32
    return %c0_i32, %c0_i32_0 : i32, i32
  }
  func.func @transform_7(%arg0: i32) -> (i32, i32) {
    %c0_i32 = arith.constant 0 : i32
    %c0_i32_0 = arith.constant 0 : i32
    %c0_i32_1 = arith.constant 0 : i32
    return %c0_i32, %c0_i32_0 : i32, i32
  }
  func.func @transform_8(%arg0: i32) -> (i32, i32) {
    %c0_i32 = arith.constant 0 : i32
    %c0_i32_0 = arith.constant 0 : i32
    %c0_i32_1 = arith.constant 0 : i32
    return %c0_i32, %c0_i32_0 : i32, i32
  }
  func.func @transform_9(%arg0: i32) -> (i32, i32) {
    %c0_i32 = arith.constant 0 : i32
    %c0_i32_0 = arith.constant 0 : i32
    %c0_i32_1 = arith.constant 0 : i32
    return %c0_i32, %c0_i32_0 : i32, i32
  }
  func.func @transform_10(%arg0: i32) -> (i32, i32) {
    %c0_i32 = arith.constant 0 : i32
    %c0_i32_0 = arith.constant 0 : i32
    %c0_i32_1 = arith.constant 0 : i32
    return %c0_i32, %c0_i32_0 : i32, i32
  }
  func.func @transform_11(%arg0: i32) -> (i32, i32) {
    %c0_i32 = arith.constant 0 : i32
    %c0_i32_0 = arith.constant 0 : i32
    %c0_i32_1 = arith.constant 0 : i32
    return %c0_i32, %c0_i32_0 : i32, i32
  }
  func.func @transform_12(%arg0: i32) -> (i32, i32) {
    %c0_i32 = arith.constant 0 : i32
    %c0_i32_0 = arith.constant 0 : i32
    %c0_i32_1 = arith.constant 0 : i32
    return %c0_i32, %c0_i32_0 : i32, i32
  }
  func.func @transform_13(%arg0: i32) -> (i32, i32) {
    %c0_i32 = arith.constant 0 : i32
    %c0_i32_0 = arith.constant 0 : i32
    %c0_i32_1 = arith.constant 0 : i32
    return %c0_i32, %c0_i32_0 : i32, i32
  }
  func.func @transform_14(%arg0: i32) -> (i32, i32) {
    %c0_i32 = arith.constant 0 : i32
    %c0_i32_0 = arith.constant 0 : i32
    %c0_i32_1 = arith.constant 0 : i32
    return %c0_i32, %c0_i32_0 : i32, i32
  }
  func.func @transform_15(%arg0: i32) -> (i32, i32) {
    %c0_i32 = arith.constant 0 : i32
    %c0_i32_0 = arith.constant 0 : i32
    %c0_i32_1 = arith.constant 0 : i32
    return %c0_i32, %c0_i32_0 : i32, i32
  }
  func.func @transform_16(%arg0: i32) -> (i32, i32) {
    %c0_i32 = arith.constant 0 : i32
    %c0_i32_0 = arith.constant 0 : i32
    %c0_i32_1 = arith.constant 0 : i32
    return %c0_i32, %c0_i32_0 : i32, i32
  }
  func.func @transform_17(%arg0: i32) -> (i32, i32) {
    %c0_i32 = arith.constant 0 : i32
    %c0_i32_0 = arith.constant 0 : i32
    %c0_i32_1 = arith.constant 0 : i32
    return %c0_i32, %c0_i32_0 : i32, i32
  }
  func.func @transform_18(%arg0: i32) -> (i32, i32) {
    %c0_i32 = arith.constant 0 : i32
    %c0_i32_0 = arith.constant 0 : i32
    %c0_i32_1 = arith.constant 0 : i32
    return %c0_i32, %c0_i32_0 : i32, i32
  }
  func.func @transform_19(%arg0: i32) -> (i32, i32) {
    %c0_i32 = arith.constant 0 : i32
    %c0_i32_0 = arith.constant 0 : i32
    %c0_i32_1 = arith.constant 0 : i32
    return %c0_i32, %c0_i32_0 : i32, i32
  }
  func.func @transform_20(%arg0: i32) -> (i32, i32) {
    %c0_i32 = arith.constant 0 : i32
    %c0_i32_0 = arith.constant 0 : i32
    %c0_i32_1 = arith.constant 0 : i32
    return %c0_i32, %c0_i32_0 : i32, i32
  }
  func.func @transform_21(%arg0: i32) -> (i32, i32) {
    %c0_i32 = arith.constant 0 : i32
    %c0_i32_0 = arith.constant 0 : i32
    %c0_i32_1 = arith.constant 0 : i32
    return %c0_i32, %c0_i32_0 : i32, i32
  }
  func.func @transform_22(%arg0: i32) -> (i32, i32) {
    %c0_i32 = arith.constant 0 : i32
    %c0_i32_0 = arith.constant 0 : i32
    %c0_i32_1 = arith.constant 0 : i32
    return %c0_i32, %c0_i32_0 : i32, i32
  }
  func.func @transform_23(%arg0: i32) -> (i32, i32) {
    %c0_i32 = arith.constant 0 : i32
    %c0_i32_0 = arith.constant 0 : i32
    %c0_i32_1 = arith.constant 0 : i32
    return %c0_i32, %c0_i32_0 : i32, i32
  }
  func.func @transform_24(%arg0: i32) -> (i32, i32) {
    %c0_i32 = arith.constant 0 : i32
    %c0_i32_0 = arith.constant 0 : i32
    %c0_i32_1 = arith.constant 0 : i32
    return %c0_i32, %c0_i32_0 : i32, i32
  }
  func.func @transform_25(%arg0: i32) -> (i32, i32) {
    %c0_i32 = arith.constant 0 : i32
    %c0_i32_0 = arith.constant 0 : i32
    %c0_i32_1 = arith.constant 0 : i32
    return %c0_i32, %c0_i32_0 : i32, i32
  }
  func.func @transform_26(%arg0: i32) -> (i32, i32) {
    %c0_i32 = arith.constant 0 : i32
    %c0_i32_0 = arith.constant 0 : i32
    %c0_i32_1 = arith.constant 0 : i32
    return %c0_i32, %c0_i32_0 : i32, i32
  }
  func.func @transform_27(%arg0: i32) -> (i32, i32, i32) {
    %c0_i32 = arith.constant 0 : i32
    %c0_i32_0 = arith.constant 0 : i32
    %c0_i32_1 = arith.constant 0 : i32
    return %arg0, %c0_i32, %c0_i32_0 : i32, i32, i32
  }
}

</mosaic_0001>

<llo_original>
// kernel: decoder_layer_forward.1
$region0: #{decoder_layer_forward.1}
  #allocation0 [shape = 'u32[]', space=smem, size = 0x4, offset = 0x4, fixed_abs, tag = 'smem constant byte address 0x4 - core index']
  #allocation1 [shape = 'u32[144,128]{1,0:T(1,128)}', space=vmem, size = 0x12000, scoped, tag = 'internal scratch']
  %s0 = inlined_call_operand.vmem [shape: f32[2,8,32], index: 0, kind: input, shape index: {}]
  %s1 = inlined_call_operand.vmem [shape: f32[2,16,32], index: 1, kind: input, shape index: {}]
  %s2 = inlined_call_operand.vmem [shape: f32[2,8,64], index: 2, kind: input, shape index: {}]
  %s3 = inlined_call_operand.vmem [shape: bf16[32,96], index: 3, kind: input, shape index: {}]
  %s4 = inlined_call_operand.vmem [shape: f32[1,96], index: 4, kind: input, shape index: {}]
  %s5 = inlined_call_operand.vmem [shape: bf16[32,32], index: 5, kind: input, shape index: {}]
  %s6 = inlined_call_operand.vmem [shape: f32[1,32], index: 6, kind: input, shape index: {}]
  %s7 = inlined_call_operand.vmem [shape: bf16[32,32], index: 7, kind: input, shape index: {}]
  %s8 = inlined_call_operand.vmem [shape: f32[1,32], index: 8, kind: input, shape index: {}]
  %s9 = inlined_call_operand.vmem [shape: bf16[32,64], index: 9, kind: input, shape index: {}]
  %s10 = inlined_call_operand.vmem [shape: f32[1,64], index: 10, kind: input, shape index: {}]
  %s11 = inlined_call_operand.vmem [shape: bf16[32,32], index: 11, kind: input, shape index: {}]
  %s12 = inlined_call_operand.vmem [shape: f32[1,32], index: 12, kind: input, shape index: {}]
  %s13 = inlined_call_operand.vmem [shape: bf16[32,64], index: 13, kind: input, shape index: {}]
  %s14 = inlined_call_operand.vmem [shape: f32[1,64], index: 14, kind: input, shape index: {}]
  %s15 = inlined_call_operand.vmem [shape: bf16[64,128], index: 15, kind: input, shape index: {}]
  %s16 = inlined_call_operand.vmem [shape: f32[1,128], index: 16, kind: input, shape index: {}]
  %s17 = inlined_call_operand.vmem [shape: bf16[64,64], index: 17, kind: input, shape index: {}]
  %s18 = inlined_call_operand.vmem [shape: f32[1,64], index: 18, kind: input, shape index: {}]
  %s19 = inlined_call_operand.vmem [shape: bf16[32,32], index: 19, kind: input, shape index: {}]
  %s20 = inlined_call_operand.vmem [shape: bf16[64,32], index: 20, kind: input, shape index: {}]
  %s21 = inlined_call_operand.vmem [shape: f32[1,32], index: 21, kind: input, shape index: {}]
  %s22 = inlined_call_operand.vmem [shape: bf16[32,64], index: 22, kind: input, shape index: {}]
  %s23 = inlined_call_operand.vmem [shape: f32[1,64], index: 23, kind: input, shape index: {}]
  %s24 = inlined_call_operand.vmem [shape: bf16[64,32], index: 24, kind: input, shape index: {}]
  %s25 = inlined_call_operand.vmem [shape: f32[1,32], index: 25, kind: input, shape index: {}]
  %s26 = inlined_call_operand.vmem [shape: f32[6,32], index: 26, kind: input, shape index: {}]
  %s27 = inlined_call_operand.vmem [shape: f32[2,1,256], index: 27, kind: output, shape index: {}]
  %s28 = sld [smem:[#allocation0]]
  $region141: #{decoder_layer_forward.1} parent=0
    _
  %s30 = ssub.s32 1, %s28
  %s31 = scalar_select 0, %s30, %s28
  loop: start=0, step=1, limit=4
  $region2: #{decoder_layer_forward.1} parent=0 // loop_pre_header
    _
  $region3: #{decoder_layer_forward.1} parent=0 // loop_header
    %s33 = sphi 0, %s37
    %p34 = scmp.ge.s32.totalorder %s33, 4
    %s43 = sphi 0, %s45
    %s46 = sphi 0, %s43
    %s47 = sphi 0, %s46
    %s63 = sphi 0, %s47
    %s69 = sphi 0, %s71
    %s72 = sphi 0, %s69
    %s73 = sphi 0, %s72
    %s89 = sphi 0, %s73
    %s95 = sphi 0, %s97
    %s98 = sphi 0, %s95
    %s99 = sphi 0, %s98
    %s115 = sphi 0, %s99
    %s119 = sphi 0, %s119
    %s121 = sphi 0, %s119
    %s122 = sphi 0, %s121
    %s136 = sphi 0, %s122
    %s140 = sphi 0, %s140
    %s142 = sphi 0, %s140
    %s143 = sphi 0, %s142
    %s157 = sphi 0, %s143
    %s161 = sphi 0, %s161
    %s163 = sphi 0, %s161
    %s164 = sphi 0, %s163
    %s178 = sphi 0, %s164
    %s182 = sphi 0, %s182
    %s184 = sphi 0, %s182
    %s185 = sphi 0, %s184
    %s199 = sphi 0, %s185
    %s203 = sphi 0, %s203
    %s205 = sphi 0, %s203
    %s206 = sphi 0, %s205
    %s220 = sphi 0, %s206
    %s224 = sphi 0, %s224
    %s226 = sphi 0, %s224
    %s227 = sphi 0, %s226
    %s241 = sphi 0, %s227
    %s245 = sphi 0, %s245
    %s247 = sphi 0, %s245
    %s248 = sphi 0, %s247
    %s262 = sphi 0, %s248
    %s266 = sphi 0, %s266
    %s268 = sphi 0, %s266
    %s269 = sphi 0, %s268
    %s283 = sphi 0, %s269
    %s287 = sphi 0, %s287
    %s289 = sphi 0, %s287
    %s290 = sphi 0, %s289
    %s304 = sphi 0, %s290
    %s308 = sphi 0, %s308
    %s310 = sphi 0, %s308
    %s311 = sphi 0, %s310
    %s325 = sphi 0, %s311
    %s329 = sphi 0, %s329
    %s331 = sphi 0, %s329
    %s332 = sphi 0, %s331
    %s346 = sphi 0, %s332
    %s350 = sphi 0, %s350
    %s352 = sphi 0, %s350
    %s353 = sphi 0, %s352
    %s367 = sphi 0, %s353
    %s371 = sphi 0, %s371
    %s373 = sphi 0, %s371
    %s374 = sphi 0, %s373
    %s388 = sphi 0, %s374
    %s392 = sphi 0, %s392
    %s394 = sphi 0, %s392
    %s395 = sphi 0, %s394
    %s409 = sphi 0, %s395
    %s413 = sphi 0, %s413
    %s415 = sphi 0, %s413
    %s416 = sphi 0, %s415
    %s430 = sphi 0, %s416
    %s434 = sphi 0, %s434
    %s436 = sphi 0, %s434
    %s437 = sphi 0, %s436
    %s451 = sphi 0, %s437
    %s455 = sphi 0, %s455
    %s457 = sphi 0, %s455
    %s458 = sphi 0, %s457
    %s472 = sphi 0, %s458
    %s476 = sphi 0, %s476
    %s478 = sphi 0, %s476
    %s479 = sphi 0, %s478
    %s493 = sphi 0, %s479
    %s497 = sphi 0, %s497
    %s499 = sphi 0, %s497
    %s500 = sphi 0, %s499
    %s514 = sphi 0, %s500
    %s518 = sphi 0, %s518
    %s520 = sphi 0, %s518
    %s521 = sphi 0, %s520
    %s535 = sphi 0, %s521
    %s539 = sphi 0, %s539
    %s541 = sphi 0, %s539
    %s542 = sphi 0, %s541
    %s556 = sphi 0, %s542
    %s560 = sphi 0, %s560
    %s562 = sphi 0, %s560
    %s563 = sphi 0, %s562
    %s577 = sphi 0, %s563
    %s581 = sphi 0, %s581
    %s583 = sphi 0, %s581
    %s584 = sphi 0, %s583
    %s598 = sphi 0, %s584
    %s602 = sphi 0, %s602
    %s604 = sphi 0, %s602
    %s605 = sphi 0, %s604
    %s619 = sphi 0, %s605
    %s625 = sphi 0, %s627
    %s628 = sphi 0, %s625
    %s629 = sphi 0, %s628
    %s645 = sphi 0, %s629
  $region4: #{decoder_layer_forward.1} parent=0 // loop_header_branch
    %36 = sbr.rel (%p34) target = $region8
  $region5: #{decoder_layer_forward.1} parent=0 // loop_body
    %s38 = ssub.s32 %s33, 1
    %s39 = ssub.s32 %s33, 2
    %s40 = sadd.s32 %s33, 1
    %s41 = ssub.s32 %s33, %s40
    %p42 = scmp.eq.s32.totalorder %s41, 0
    %s44 = sadd.s32 %s43, 1
    %s45 = scalar_select %p42, %s43, %s44
    %p48 = pneg %p42
    %p49 = scmp.eq.s32.totalorder %s33, 1
    %p50 = por %p48, %p49
    %p51 = scmp.ne.s32.totalorder %s43, %s46
    %p52 = scmp.eq.s32.totalorder %s33, 0
    %p53 = por %p51, %p52
    %p54 = scmp.ne.s32.totalorder %s43, %s46
    %p55 = scmp.eq.s32.totalorder %s38, 1
    %p56 = por %p54, %p55
    %p57 = scmp.ne.s32.totalorder %s46, %s47
    %p58 = scmp.eq.s32.totalorder %s38, 0
    %p59 = por %p57, %p58
    %p60 = scmp.ne.s32.totalorder %s46, %s47
    %p61 = scmp.eq.s32.totalorder %s39, 1
    %p62 = por %p60, %p61
    %p64 = scmp.ne.s32.totalorder %s47, %s63
    %p65 = scmp.eq.s32.totalorder %s39, 0
    %p66 = por %p64, %p65
    %s67 = ssub.s32 %s33, %s40
    %p68 = scmp.eq.s32.totalorder %s67, 0
    %s70 = sadd.s32 %s69, 1
    %s71 = scalar_select %p68, %s69, %s70
    %p74 = pneg %p68
    %p75 = scmp.eq.s32.totalorder %s33, 1
    %p76 = por %p74, %p75
    %p77 = scmp.ne.s32.totalorder %s69, %s72
    %p78 = scmp.eq.s32.totalorder %s33, 0
    %p79 = por %p77, %p78
    %p80 = scmp.ne.s32.totalorder %s69, %s72
    %p81 = scmp.eq.s32.totalorder %s38, 1
    %p82 = por %p80, %p81
    %p83 = scmp.ne.s32.totalorder %s72, %s73
    %p84 = scmp.eq.s32.totalorder %s38, 0
    %p85 = por %p83, %p84
    %p86 = scmp.ne.s32.totalorder %s72, %s73
    %p87 = scmp.eq.s32.totalorder %s39, 1
    %p88 = por %p86, %p87
    %p90 = scmp.ne.s32.totalorder %s73, %s89
    %p91 = scmp.eq.s32.totalorder %s39, 0
    %p92 = por %p90, %p91
    %s93 = ssub.s32 %s33, %s40
    %p94 = scmp.eq.s32.totalorder %s93, 0
    %s96 = sadd.s32 %s95, 1
    %s97 = scalar_select %p94, %s95, %s96
    %p100 = pneg %p94
    %p101 = scmp.eq.s32.totalorder %s33, 1
    %p102 = por %p100, %p101
    %p103 = scmp.ne.s32.totalorder %s95, %s98
    %p104 = scmp.eq.s32.totalorder %s33, 0
    %p105 = por %p103, %p104
    %p106 = scmp.ne.s32.totalorder %s95, %s98
    %p107 = scmp.eq.s32.totalorder %s38, 1
    %p108 = por %p106, %p107
    %p109 = scmp.ne.s32.totalorder %s98, %s99
    %p110 = scmp.eq.s32.totalorder %s38, 0
    %p111 = por %p109, %p110
    %p112 = scmp.ne.s32.totalorder %s98, %s99
    %p113 = scmp.eq.s32.totalorder %s39, 1
    %p114 = por %p112, %p113
    %p116 = scmp.ne.s32.totalorder %s99, %s115
    %p117 = scmp.eq.s32.totalorder %s39, 0
    %p118 = por %p116, %p117
    %s120 = sadd.s32 %s119, 1
    %p123 = scmp.eq.s32.totalorder %s33, 1
    %p124 = scmp.ne.s32.totalorder %s119, %s121
    %p125 = scmp.eq.s32.totalorder %s33, 0
    %p126 = por %p124, %p125
    %p127 = scmp.ne.s32.totalorder %s119, %s121
    %p128 = scmp.eq.s32.totalorder %s38, 1
    %p129 = por %p127, %p128
    %p130 = scmp.ne.s32.totalorder %s121, %s122
    %p131 = scmp.eq.s32.totalorder %s38, 0
    %p132 = por %p130, %p131
    %p133 = scmp.ne.s32.totalorder %s121, %s122
    %p134 = scmp.eq.s32.totalorder %s39, 1
    %p135 = por %p133, %p134
    %p137 = scmp.ne.s32.totalorder %s122, %s136
    %p138 = scmp.eq.s32.totalorder %s39, 0
    %p139 = por %p137, %p138
    %s141 = sadd.s32 %s140, 1
    %p144 = scmp.eq.s32.totalorder %s33, 1
    %p145 = scmp.ne.s32.totalorder %s140, %s142
    %p146 = scmp.eq.s32.totalorder %s33, 0
    %p147 = por %p145, %p146
    %p148 = scmp.ne.s32.totalorder %s140, %s142
    %p149 = scmp.eq.s32.totalorder %s38, 1
    %p150 = por %p148, %p149
    %p151 = scmp.ne.s32.totalorder %s142, %s143
    %p152 = scmp.eq.s32.totalorder %s38, 0
    %p153 = por %p151, %p152
    %p154 = scmp.ne.s32.totalorder %s142, %s143
    %p155 = scmp.eq.s32.totalorder %s39, 1
    %p156 = por %p154, %p155
    %p158 = scmp.ne.s32.totalorder %s143, %s157
    %p159 = scmp.eq.s32.totalorder %s39, 0
    %p160 = por %p158, %p159
    %s162 = sadd.s32 %s161, 1
    %p165 = scmp.eq.s32.totalorder %s33, 1
    %p166 = scmp.ne.s32.totalorder %s161, %s163
    %p167 = scmp.eq.s32.totalorder %s33, 0
    %p168 = por %p166, %p167
    %p169 = scmp.ne.s32.totalorder %s161, %s163
    %p170 = scmp.eq.s32.totalorder %s38, 1
    %p171 = por %p169, %p170
    %p172 = scmp.ne.s32.totalorder %s163, %s164
    %p173 = scmp.eq.s32.totalorder %s38, 0
    %p174 = por %p172, %p173
    %p175 = scmp.ne.s32.totalorder %s163, %s164
    %p176 = scmp.eq.s32.totalorder %s39, 1
    %p177 = por %p175, %p176
    %p179 = scmp.ne.s32.totalorder %s164, %s178
    %p180 = scmp.eq.s32.totalorder %s39, 0
    %p181 = por %p179, %p180
    %s183 = sadd.s32 %s182, 1
    %p186 = scmp.eq.s32.totalorder %s33, 1
    %p187 = scmp.ne.s32.totalorder %s182, %s184
    %p188 = scmp.eq.s32.totalorder %s33, 0
    %p189 = por %p187, %p188
    %p190 = scmp.ne.s32.totalorder %s182, %s184
    %p191 = scmp.eq.s32.totalorder %s38, 1
    %p192 = por %p190, %p191
    %p193 = scmp.ne.s32.totalorder %s184, %s185
    %p194 = scmp.eq.s32.totalorder %s38, 0
    %p195 = por %p193, %p194
    %p196 = scmp.ne.s32.totalorder %s184, %s185
    %p197 = scmp.eq.s32.totalorder %s39, 1
    %p198 = por %p196, %p197
    %p200 = scmp.ne.s32.totalorder %s185, %s199
    %p201 = scmp.eq.s32.totalorder %s39, 0
    %p202 = por %p200, %p201
    %s204 = sadd.s32 %s203, 1
    %p207 = scmp.eq.s32.totalorder %s33, 1
    %p208 = scmp.ne.s32.totalorder %s203, %s205
    %p209 = scmp.eq.s32.totalorder %s33, 0
    %p210 = por %p208, %p209
    %p211 = scmp.ne.s32.totalorder %s203, %s205
    %p212 = scmp.eq.s32.totalorder %s38, 1
    %p213 = por %p211, %p212
    %p214 = scmp.ne.s32.totalorder %s205, %s206
    %p215 = scmp.eq.s32.totalorder %s38, 0
    %p216 = por %p214, %p215
    %p217 = scmp.ne.s32.totalorder %s205, %s206
    %p218 = scmp.eq.s32.totalorder %s39, 1
    %p219 = por %p217, %p218
    %p221 = scmp.ne.s32.totalorder %s206, %s220
    %p222 = scmp.eq.s32.totalorder %s39, 0
    %p223 = por %p221, %p222
    %s225 = sadd.s32 %s224, 1
    %p228 = scmp.eq.s32.totalorder %s33, 1
    %p229 = scmp.ne.s32.totalorder %s224, %s226
    %p230 = scmp.eq.s32.totalorder %s33, 0
    %p231 = por %p229, %p230
    %p232 = scmp.ne.s32.totalorder %s224, %s226
    %p233 = scmp.eq.s32.totalorder %s38, 1
    %p234 = por %p232, %p233
    %p235 = scmp.ne.s32.totalorder %s226, %s227
    %p236 = scmp.eq.s32.totalorder %s38, 0
    %p237 = por %p235, %p236
    %p238 = scmp.ne.s32.totalorder %s226, %s227
    %p239 = scmp.eq.s32.totalorder %s39, 1
    %p240 = por %p238, %p239
    %p242 = scmp.ne.s32.totalorder %s227, %s241
    %p243 = scmp.eq.s32.totalorder %s39, 0
    %p244 = por %p242, %p243
    %s246 = sadd.s32 %s245, 1
    %p249 = scmp.eq.s32.totalorder %s33, 1
    %p250 = scmp.ne.s32.totalorder %s245, %s247
    %p251 = scmp.eq.s32.totalorder %s33, 0
    %p252 = por %p250, %p251
    %p253 = scmp.ne.s32.totalorder %s245, %s247
    %p254 = scmp.eq.s32.totalorder %s38, 1
    %p255 = por %p253, %p254
    %p256 = scmp.ne.s32.totalorder %s247, %s248
    %p257 = scmp.eq.s32.totalorder %s38, 0
    %p258 = por %p256, %p257
    %p259 = scmp.ne.s32.totalorder %s247, %s248
    %p260 = scmp.eq.s32.totalorder %s39, 1
    %p261 = por %p259, %p260
    %p263 = scmp.ne.s32.totalorder %s248, %s262
    %p264 = scmp.eq.s32.totalorder %s39, 0
    %p265 = por %p263, %p264
    %s267 = sadd.s32 %s266, 1
    %p270 = scmp.eq.s32.totalorder %s33, 1
    %p271 = scmp.ne.s32.totalorder %s266, %s268
    %p272 = scmp.eq.s32.totalorder %s33, 0
    %p273 = por %p271, %p272
    %p274 = scmp.ne.s32.totalorder %s266, %s268
    %p275 = scmp.eq.s32.totalorder %s38, 1
    %p276 = por %p274, %p275
    %p277 = scmp.ne.s32.totalorder %s268, %s269
    %p278 = scmp.eq.s32.totalorder %s38, 0
    %p279 = por %p277, %p278
    %p280 = scmp.ne.s32.totalorder %s268, %s269
    %p281 = scmp.eq.s32.totalorder %s39, 1
    %p282 = por %p280, %p281
    %p284 = scmp.ne.s32.totalorder %s269, %s283
    %p285 = scmp.eq.s32.totalorder %s39, 0
    %p286 = por %p284, %p285
    %s288 = sadd.s32 %s287, 1
    %p291 = scmp.eq.s32.totalorder %s33, 1
    %p292 = scmp.ne.s32.totalorder %s287, %s289
    %p293 = scmp.eq.s32.totalorder %s33, 0
    %p294 = por %p292, %p293
    %p295 = scmp.ne.s32.totalorder %s287, %s289
    %p296 = scmp.eq.s32.totalorder %s38, 1
    %p297 = por %p295, %p296
    %p298 = scmp.ne.s32.totalorder %s289, %s290
    %p299 = scmp.eq.s32.totalorder %s38, 0
    %p300 = por %p298, %p299
    %p301 = scmp.ne.s32.totalorder %s289, %s290
    %p302 = scmp.eq.s32.totalorder %s39, 1
    %p303 = por %p301, %p302
    %p305 = scmp.ne.s32.totalorder %s290, %s304
    %p306 = scmp.eq.s32.totalorder %s39, 0
    %p307 = por %p305, %p306
    %s309 = sadd.s32 %s308, 1
    %p312 = scmp.eq.s32.totalorder %s33, 1
    %p313 = scmp.ne.s32.totalorder %s308, %s310
    %p314 = scmp.eq.s32.totalorder %s33, 0
    %p315 = por %p313, %p314
    %p316 = scmp.ne.s32.totalorder %s308, %s310
    %p317 = scmp.eq.s32.totalorder %s38, 1
    %p318 = por %p316, %p317
    %p319 = scmp.ne.s32.totalorder %s310, %s311
    %p320 = scmp.eq.s32.totalorder %s38, 0
    %p321 = por %p319, %p320
    %p322 = scmp.ne.s32.totalorder %s310, %s311
    %p323 = scmp.eq.s32.totalorder %s39, 1
    %p324 = por %p322, %p323
    %p326 = scmp.ne.s32.totalorder %s311, %s325
    %p327 = scmp.eq.s32.totalorder %s39, 0
    %p328 = por %p326, %p327
    %s330 = sadd.s32 %s329, 1
    %p333 = scmp.eq.s32.totalorder %s33, 1
    %p334 = scmp.ne.s32.totalorder %s329, %s331
    %p335 = scmp.eq.s32.totalorder %s33, 0
    %p336 = por %p334, %p335
    %p337 = scmp.ne.s32.totalorder %s329, %s331
    %p338 = scmp.eq.s32.totalorder %s38, 1
    %p339 = por %p337, %p338
    %p340 = scmp.ne.s32.totalorder %s331, %s332
    %p341 = scmp.eq.s32.totalorder %s38, 0
    %p342 = por %p340, %p341
    %p343 = scmp.ne.s32.totalorder %s331, %s332
    %p344 = scmp.eq.s32.totalorder %s39, 1
    %p345 = por %p343, %p344
    %p347 = scmp.ne.s32.totalorder %s332, %s346
    %p348 = scmp.eq.s32.totalorder %s39, 0
    %p349 = por %p347, %p348
    %s351 = sadd.s32 %s350, 1
    %p354 = scmp.eq.s32.totalorder %s33, 1
    %p355 = scmp.ne.s32.totalorder %s350, %s352
    %p356 = scmp.eq.s32.totalorder %s33, 0
    %p357 = por %p355, %p356
    %p358 = scmp.ne.s32.totalorder %s350, %s352
    %p359 = scmp.eq.s32.totalorder %s38, 1
    %p360 = por %p358, %p359
    %p361 = scmp.ne.s32.totalorder %s352, %s353
    %p362 = scmp.eq.s32.totalorder %s38, 0
    %p363 = por %p361, %p362
    %p364 = scmp.ne.s32.totalorder %s352, %s353
    %p365 = scmp.eq.s32.totalorder %s39, 1
    %p366 = por %p364, %p365
    %p368 = scmp.ne.s32.totalorder %s353, %s367
    %p369 = scmp.eq.s32.totalorder %s39, 0
    %p370 = por %p368, %p369
    %s372 = sadd.s32 %s371, 1
    %p375 = scmp.eq.s32.totalorder %s33, 1
    %p376 = scmp.ne.s32.totalorder %s371, %s373
    %p377 = scmp.eq.s32.totalorder %s33, 0
    %p378 = por %p376, %p377
    %p379 = scmp.ne.s32.totalorder %s371, %s373
    %p380 = scmp.eq.s32.totalorder %s38, 1
    %p381 = por %p379, %p380
    %p382 = scmp.ne.s32.totalorder %s373, %s374
    %p383 = scmp.eq.s32.totalorder %s38, 0
    %p384 = por %p382, %p383
    %p385 = scmp.ne.s32.totalorder %s373, %s374
    %p386 = scmp.eq.s32.totalorder %s39, 1
    %p387 = por %p385, %p386
    %p389 = scmp.ne.s32.totalorder %s374, %s388
    %p390 = scmp.eq.s32.totalorder %s39, 0
    %p391 = por %p389, %p390
    %s393 = sadd.s32 %s392, 1
    %p396 = scmp.eq.s32.totalorder %s33, 1
    %p397 = scmp.ne.s32.totalorder %s392, %s394
    %p398 = scmp.eq.s32.totalorder %s33, 0
    %p399 = por %p397, %p398
    %p400 = scmp.ne.s32.totalorder %s392, %s394
    %p401 = scmp.eq.s32.totalorder %s38, 1
    %p402 = por %p400, %p401
    %p403 = scmp.ne.s32.totalorder %s394, %s395
    %p404 = scmp.eq.s32.totalorder %s38, 0
    %p405 = por %p403, %p404
    %p406 = scmp.ne.s32.totalorder %s394, %s395
    %p407 = scmp.eq.s32.totalorder %s39, 1
    %p408 = por %p406, %p407
    %p410 = scmp.ne.s32.totalorder %s395, %s409
    %p411 = scmp.eq.s32.totalorder %s39, 0
    %p412 = por %p410, %p411
    %s414 = sadd.s32 %s413, 1
    %p417 = scmp.eq.s32.totalorder %s33, 1
    %p418 = scmp.ne.s32.totalorder %s413, %s415
    %p419 = scmp.eq.s32.totalorder %s33, 0
    %p420 = por %p418, %p419
    %p421 = scmp.ne.s32.totalorder %s413, %s415
    %p422 = scmp.eq.s32.totalorder %s38, 1
    %p423 = por %p421, %p422
    %p424 = scmp.ne.s32.totalorder %s415, %s416
    %p425 = scmp.eq.s32.totalorder %s38, 0
    %p426 = por %p424, %p425
    %p427 = scmp.ne.s32.totalorder %s415, %s416
    %p428 = scmp.eq.s32.totalorder %s39, 1
    %p429 = por %p427, %p428
    %p431 = scmp.ne.s32.totalorder %s416, %s430
    %p432 = scmp.eq.s32.totalorder %s39, 0
    %p433 = por %p431, %p432
    %s435 = sadd.s32 %s434, 1
    %p438 = scmp.eq.s32.totalorder %s33, 1
    %p439 = scmp.ne.s32.totalorder %s434, %s436
    %p440 = scmp.eq.s32.totalorder %s33, 0
    %p441 = por %p439, %p440
    %p442 = scmp.ne.s32.totalorder %s434, %s436
    %p443 = scmp.eq.s32.totalorder %s38, 1
    %p444 = por %p442, %p443
    %p445 = scmp.ne.s32.totalorder %s436, %s437
    %p446 = scmp.eq.s32.totalorder %s38, 0
    %p447 = por %p445, %p446
    %p448 = scmp.ne.s32.totalorder %s436, %s437
    %p449 = scmp.eq.s32.totalorder %s39, 1
    %p450 = por %p448, %p449
    %p452 = scmp.ne.s32.totalorder %s437, %s451
    %p453 = scmp.eq.s32.totalorder %s39, 0
    %p454 = por %p452, %p453
    %s456 = sadd.s32 %s455, 1
    %p459 = scmp.eq.s32.totalorder %s33, 1
    %p460 = scmp.ne.s32.totalorder %s455, %s457
    %p461 = scmp.eq.s32.totalorder %s33, 0
    %p462 = por %p460, %p461
    %p463 = scmp.ne.s32.totalorder %s455, %s457
    %p464 = scmp.eq.s32.totalorder %s38, 1
    %p465 = por %p463, %p464
    %p466 = scmp.ne.s32.totalorder %s457, %s458
    %p467 = scmp.eq.s32.totalorder %s38, 0
    %p468 = por %p466, %p467
    %p469 = scmp.ne.s32.totalorder %s457, %s458
    %p470 = scmp.eq.s32.totalorder %s39, 1
    %p471 = por %p469, %p470
    %p473 = scmp.ne.s32.totalorder %s458, %s472
    %p474 = scmp.eq.s32.totalorder %s39, 0
    %p475 = por %p473, %p474
    %s477 = sadd.s32 %s476, 1
    %p480 = scmp.eq.s32.totalorder %s33, 1
    %p481 = scmp.ne.s32.totalorder %s476, %s478
    %p482 = scmp.eq.s32.totalorder %s33, 0
    %p483 = por %p481, %p482
    %p484 = scmp.ne.s32.totalorder %s476, %s478
    %p485 = scmp.eq.s32.totalorder %s38, 1
    %p486 = por %p484, %p485
    %p487 = scmp.ne.s32.totalorder %s478, %s479
    %p488 = scmp.eq.s32.totalorder %s38, 0
    %p489 = por %p487, %p488
    %p490 = scmp.ne.s32.totalorder %s478, %s479
    %p491 = scmp.eq.s32.totalorder %s39, 1
    %p492 = por %p490, %p491
    %p494 = scmp.ne.s32.totalorder %s479, %s493
    %p495 = scmp.eq.s32.totalorder %s39, 0
    %p496 = por %p494, %p495
    %s498 = sadd.s32 %s497, 1
    %p501 = scmp.eq.s32.totalorder %s33, 1
    %p502 = scmp.ne.s32.totalorder %s497, %s499
    %p503 = scmp.eq.s32.totalorder %s33, 0
    %p504 = por %p502, %p503
    %p505 = scmp.ne.s32.totalorder %s497, %s499
    %p506 = scmp.eq.s32.totalorder %s38, 1
    %p507 = por %p505, %p506
    %p508 = scmp.ne.s32.totalorder %s499, %s500
    %p509 = scmp.eq.s32.totalorder %s38, 0
    %p510 = por %p508, %p509
    %p511 = scmp.ne.s32.totalorder %s499, %s500
    %p512 = scmp.eq.s32.totalorder %s39, 1
    %p513 = por %p511, %p512
    %p515 = scmp.ne.s32.totalorder %s500, %s514
    %p516 = scmp.eq.s32.totalorder %s39, 0
    %p517 = por %p515, %p516
    %s519 = sadd.s32 %s518, 1
    %p522 = scmp.eq.s32.totalorder %s33, 1
    %p523 = scmp.ne.s32.totalorder %s518, %s520
    %p524 = scmp.eq.s32.totalorder %s33, 0
    %p525 = por %p523, %p524
    %p526 = scmp.ne.s32.totalorder %s518, %s520
    %p527 = scmp.eq.s32.totalorder %s38, 1
    %p528 = por %p526, %p527
    %p529 = scmp.ne.s32.totalorder %s520, %s521
    %p530 = scmp.eq.s32.totalorder %s38, 0
    %p531 = por %p529, %p530
    %p532 = scmp.ne.s32.totalorder %s520, %s521
    %p533 = scmp.eq.s32.totalorder %s39, 1
    %p534 = por %p532, %p533
    %p536 = scmp.ne.s32.totalorder %s521, %s535
    %p537 = scmp.eq.s32.totalorder %s39, 0
    %p538 = por %p536, %p537
    %s540 = sadd.s32 %s539, 1
    %p543 = scmp.eq.s32.totalorder %s33, 1
    %p544 = scmp.ne.s32.totalorder %s539, %s541
    %p545 = scmp.eq.s32.totalorder %s33, 0
    %p546 = por %p544, %p545
    %p547 = scmp.ne.s32.totalorder %s539, %s541
    %p548 = scmp.eq.s32.totalorder %s38, 1
    %p549 = por %p547, %p548
    %p550 = scmp.ne.s32.totalorder %s541, %s542
    %p551 = scmp.eq.s32.totalorder %s38, 0
    %p552 = por %p550, %p551
    %p553 = scmp.ne.s32.totalorder %s541, %s542
    %p554 = scmp.eq.s32.totalorder %s39, 1
    %p555 = por %p553, %p554
    %p557 = scmp.ne.s32.totalorder %s542, %s556
    %p558 = scmp.eq.s32.totalorder %s39, 0
    %p559 = por %p557, %p558
    %s561 = sadd.s32 %s560, 1
    %p564 = scmp.eq.s32.totalorder %s33, 1
    %p565 = scmp.ne.s32.totalorder %s560, %s562
    %p566 = scmp.eq.s32.totalorder %s33, 0
    %p567 = por %p565, %p566
    %p568 = scmp.ne.s32.totalorder %s560, %s562
    %p569 = scmp.eq.s32.totalorder %s38, 1
    %p570 = por %p568, %p569
    %p571 = scmp.ne.s32.totalorder %s562, %s563
    %p572 = scmp.eq.s32.totalorder %s38, 0
    %p573 = por %p571, %p572
    %p574 = scmp.ne.s32.totalorder %s562, %s563
    %p575 = scmp.eq.s32.totalorder %s39, 1
    %p576 = por %p574, %p575
    %p578 = scmp.ne.s32.totalorder %s563, %s577
    %p579 = scmp.eq.s32.totalorder %s39, 0
    %p580 = por %p578, %p579
    %s582 = sadd.s32 %s581, 1
    %p585 = scmp.eq.s32.totalorder %s33, 1
    %p586 = scmp.ne.s32.totalorder %s581, %s583
    %p587 = scmp.eq.s32.totalorder %s33, 0
    %p588 = por %p586, %p587
    %p589 = scmp.ne.s32.totalorder %s581, %s583
    %p590 = scmp.eq.s32.totalorder %s38, 1
    %p591 = por %p589, %p590
    %p592 = scmp.ne.s32.totalorder %s583, %s584
    %p593 = scmp.eq.s32.totalorder %s38, 0
    %p594 = por %p592, %p593
    %p595 = scmp.ne.s32.totalorder %s583, %s584
    %p596 = scmp.eq.s32.totalorder %s39, 1
    %p597 = por %p595, %p596
    %p599 = scmp.ne.s32.totalorder %s584, %s598
    %p600 = scmp.eq.s32.totalorder %s39, 0
    %p601 = por %p599, %p600
    %s603 = sadd.s32 %s602, 1
    %p606 = scmp.eq.s32.totalorder %s33, 1
    %p607 = scmp.ne.s32.totalorder %s602, %s604
    %p608 = scmp.eq.s32.totalorder %s33, 0
    %p609 = por %p607, %p608
    %p610 = scmp.ne.s32.totalorder %s602, %s604
    %p611 = scmp.eq.s32.totalorder %s38, 1
    %p612 = por %p610, %p611
    %p613 = scmp.ne.s32.totalorder %s604, %s605
    %p614 = scmp.eq.s32.totalorder %s38, 0
    %p615 = por %p613, %p614
    %p616 = scmp.ne.s32.totalorder %s604, %s605
    %p617 = scmp.eq.s32.totalorder %s39, 1
    %p618 = por %p616, %p617
    %p620 = scmp.ne.s32.totalorder %s605, %s619
    %p621 = scmp.eq.s32.totalorder %s39, 0
    %p622 = por %p620, %p621
    %s623 = ssub.s32 %s33, %s40
    %p624 = scmp.eq.s32.totalorder %s623, 0
    %s626 = sadd.s32 %s625, 1
    %s627 = scalar_select %p624, %s625, %s626
    %p630 = pneg %p624
    %p631 = scmp.eq.s32.totalorder %s33, 1
    %p632 = por %p630, %p631
    %p633 = scmp.ne.s32.totalorder %s625, %s628
    %p634 = scmp.eq.s32.totalorder %s33, 0
    %p635 = por %p633, %p634
    %p636 = scmp.ne.s32.totalorder %s625, %s628
    %p637 = scmp.eq.s32.totalorder %s38, 1
    %p638 = por %p636, %p637
    %p639 = scmp.ne.s32.totalorder %s628, %s629
    %p640 = scmp.eq.s32.totalorder %s38, 0
    %p641 = por %p639, %p640
    %p642 = scmp.ne.s32.totalorder %s628, %s629
    %p643 = scmp.eq.s32.totalorder %s39, 1
    %p644 = por %p642, %p643
    %p646 = scmp.ne.s32.totalorder %s629, %s645
    %p647 = scmp.eq.s32.totalorder %s39, 0
    %p648 = por %p646, %p647
    %p649 = scmp.le.s32.totalorder 1, %s33
    %p650 = scmp.lt.s32.totalorder %s33, 3
    %p651 = pnand %p649, %p650
    %p652 = pneg %p651
    // Predicated region
    $region9: #{decoder_layer_forward.1} parent=5 // pred_check
      _
    $region10: #{decoder_layer_forward.1} parent=5 // pred_check_branch
      %654 = sbr.rel (%p651) target = $region12
    $region11: #{decoder_layer_forward.1} parent=5 // pred_region
      %s655 = ssub.s32 %s33, 1
      // Predicated region
      $region13: #{decoder_layer_forward.1} parent=11 // pred_check
        %p656 = pneg %p132
      $region14: #{decoder_layer_forward.1} parent=11 // pred_check_branch
        %658 = sbr.rel (%p656) target = $region16
      $region15: #{decoder_layer_forward.1} parent=11 // pred_region
        _
      $region16: #{decoder_layer_forward.1} parent=11 // pred_fallthru
        _
      // Predicated region
      $region17: #{decoder_layer_forward.1} parent=11 // pred_check
        %p659 = pneg %p153
      $region18: #{decoder_layer_forward.1} parent=11 // pred_check_branch
        %661 = sbr.rel (%p659) target = $region20
      $region19: #{decoder_layer_forward.1} parent=11 // pred_region
        _
      $region20: #{decoder_layer_forward.1} parent=11 // pred_fallthru
        _
      // Predicated region
      $region21: #{decoder_layer_forward.1} parent=11 // pred_check
        %p662 = pneg %p174
      $region22: #{decoder_layer_forward.1} parent=11 // pred_check_branch
        %664 = sbr.rel (%p662) target = $region24
      $region23: #{decoder_layer_forward.1} parent=11 // pred_region
        _
      $region24: #{decoder_layer_forward.1} parent=11 // pred_fallthru
        _
      // Predicated region
      $region25: #{decoder_layer_forward.1} parent=11 // pred_check
        %p665 = pneg %p195
      $region26: #{decoder_layer_forward.1} parent=11 // pred_check_branch
        %667 = sbr.rel (%p665) target = $region28
      $region27: #{decoder_layer_forward.1} parent=11 // pred_region
        _
      $region28: #{decoder_layer_forward.1} parent=11 // pred_fallthru
        _
      // Predicated region
      $region29: #{decoder_layer_forward.1} parent=11 // pred_check
        %p668 = pneg %p216
      $region30: #{decoder_layer_forward.1} parent=11 // pred_check_branch
        %670 = sbr.rel (%p668) target = $region32
      $region31: #{decoder_layer_forward.1} parent=11 // pred_region
        _
      $region32: #{decoder_layer_forward.1} parent=11 // pred_fallthru
        _
      // Predicated region
      $region33: #{decoder_layer_forward.1} parent=11 // pred_check
        %p671 = pneg %p237
      $region34: #{decoder_layer_forward.1} parent=11 // pred_check_branch
        %673 = sbr.rel (%p671) target = $region36
      $region35: #{decoder_layer_forward.1} parent=11 // pred_region
        _
      $region36: #{decoder_layer_forward.1} parent=11 // pred_fallthru
        _
      // Predicated region
      $region37: #{decoder_layer_forward.1} parent=11 // pred_check
        %p674 = pneg %p258
      $region38: #{decoder_layer_forward.1} parent=11 // pred_check_branch
        %676 = sbr.rel (%p674) target = $region40
      $region39: #{decoder_layer_forward.1} parent=11 // pred_region
        _
      $region40: #{decoder_layer_forward.1} parent=11 // pred_fallthru
        _
      // Predicated region
      $region41: #{decoder_layer_forward.1} parent=11 // pred_check
        %p677 = pneg %p279
      $region42: #{decoder_layer_forward.1} parent=11 // pred_check_branch
        %679 = sbr.rel (%p677) target = $region44
      $region43: #{decoder_layer_forward.1} parent=11 // pred_region
        _
      $region44: #{decoder_layer_forward.1} parent=11 // pred_fallthru
        _
      // Predicated region
      $region45: #{decoder_layer_forward.1} parent=11 // pred_check
        %p680 = pneg %p300
      $region46: #{decoder_layer_forward.1} parent=11 // pred_check_branch
        %682 = sbr.rel (%p680) target = $region48
      $region47: #{decoder_layer_forward.1} parent=11 // pred_region
        _
      $region48: #{decoder_layer_forward.1} parent=11 // pred_fallthru
        _
      // Predicated region
      $region49: #{decoder_layer_forward.1} parent=11 // pred_check
        %p683 = pneg %p321
      $region50: #{decoder_layer_forward.1} parent=11 // pred_check_branch
        %685 = sbr.rel (%p683) target = $region52
      $region51: #{decoder_layer_forward.1} parent=11 // pred_region
        _
      $region52: #{decoder_layer_forward.1} parent=11 // pred_fallthru
        _
      // Predicated region
      $region53: #{decoder_layer_forward.1} parent=11 // pred_check
        %p686 = pneg %p342
      $region54: #{decoder_layer_forward.1} parent=11 // pred_check_branch
        %688 = sbr.rel (%p686) target = $region56
      $region55: #{decoder_layer_forward.1} parent=11 // pred_region
        _
      $region56: #{decoder_layer_forward.1} parent=11 // pred_fallthru
        _
      // Predicated region
      $region57: #{decoder_layer_forward.1} parent=11 // pred_check
        %p689 = pneg %p363
      $region58: #{decoder_layer_forward.1} parent=11 // pred_check_branch
        %691 = sbr.rel (%p689) target = $region60
      $region59: #{decoder_layer_forward.1} parent=11 // pred_region
        _
      $region60: #{decoder_layer_forward.1} parent=11 // pred_fallthru
        _
      // Predicated region
      $region61: #{decoder_layer_forward.1} parent=11 // pred_check
        %p692 = pneg %p384
      $region62: #{decoder_layer_forward.1} parent=11 // pred_check_branch
        %694 = sbr.rel (%p692) target = $region64
      $region63: #{decoder_layer_forward.1} parent=11 // pred_region
        _
      $region64: #{decoder_layer_forward.1} parent=11 // pred_fallthru
        _
      // Predicated region
      $region65: #{decoder_layer_forward.1} parent=11 // pred_check
        %p695 = pneg %p405
      $region66: #{decoder_layer_forward.1} parent=11 // pred_check_branch
        %697 = sbr.rel (%p695) target = $region68
      $region67: #{decoder_layer_forward.1} parent=11 // pred_region
        _
      $region68: #{decoder_layer_forward.1} parent=11 // pred_fallthru
        _
      // Predicated region
      $region69: #{decoder_layer_forward.1} parent=11 // pred_check
        %p698 = pneg %p426
      $region70: #{decoder_layer_forward.1} parent=11 // pred_check_branch
        %700 = sbr.rel (%p698) target = $region72
      $region71: #{decoder_layer_forward.1} parent=11 // pred_region
        _
      $region72: #{decoder_layer_forward.1} parent=11 // pred_fallthru
        _
      // Predicated region
      $region73: #{decoder_layer_forward.1} parent=11 // pred_check
        %p701 = pneg %p447
      $region74: #{decoder_layer_forward.1} parent=11 // pred_check_branch
        %703 = sbr.rel (%p701) target = $region76
      $region75: #{decoder_layer_forward.1} parent=11 // pred_region
        _
      $region76: #{decoder_layer_forward.1} parent=11 // pred_fallthru
        _
      // Predicated region
      $region77: #{decoder_layer_forward.1} parent=11 // pred_check
        %p704 = pneg %p468
      $region78: #{decoder_layer_forward.1} parent=11 // pred_check_branch
        %706 = sbr.rel (%p704) target = $region80
      $region79: #{decoder_layer_forward.1} parent=11 // pred_region
        _
      $region80: #{decoder_layer_forward.1} parent=11 // pred_fallthru
        _
      // Predicated region
      $region81: #{decoder_layer_forward.1} parent=11 // pred_check
        %p707 = pneg %p489
      $region82: #{decoder_layer_forward.1} parent=11 // pred_check_branch
        %709 = sbr.rel (%p707) target = $region84
      $region83: #{decoder_layer_forward.1} parent=11 // pred_region
        _
      $region84: #{decoder_layer_forward.1} parent=11 // pred_fallthru
        _
      // Predicated region
      $region85: #{decoder_layer_forward.1} parent=11 // pred_check
        %p710 = pneg %p510
      $region86: #{decoder_layer_forward.1} parent=11 // pred_check_branch
        %712 = sbr.rel (%p710) target = $region88
      $region87: #{decoder_layer_forward.1} parent=11 // pred_region
        _
      $region88: #{decoder_layer_forward.1} parent=11 // pred_fallthru
        _
      // Predicated region
      $region89: #{decoder_layer_forward.1} parent=11 // pred_check
        %p713 = pneg %p531
      $region90: #{decoder_layer_forward.1} parent=11 // pred_check_branch
        %715 = sbr.rel (%p713) target = $region92
      $region91: #{decoder_layer_forward.1} parent=11 // pred_region
        _
      $region92: #{decoder_layer_forward.1} parent=11 // pred_fallthru
        _
      // Predicated region
      $region93: #{decoder_layer_forward.1} parent=11 // pred_check
        %p716 = pneg %p552
      $region94: #{decoder_layer_forward.1} parent=11 // pred_check_branch
        %718 = sbr.rel (%p716) target = $region96
      $region95: #{decoder_layer_forward.1} parent=11 // pred_region
        _
      $region96: #{decoder_layer_forward.1} parent=11 // pred_fallthru
        _
      // Predicated region
      $region97: #{decoder_layer_forward.1} parent=11 // pred_check
        %p719 = pneg %p573
      $region98: #{decoder_layer_forward.1} parent=11 // pred_check_branch
        %721 = sbr.rel (%p719) target = $region100
      $region99: #{decoder_layer_forward.1} parent=11 // pred_region
        _
      $region100: #{decoder_layer_forward.1} parent=11 // pred_fallthru
        _
      // Predicated region
      $region101: #{decoder_layer_forward.1} parent=11 // pred_check
        %p722 = pneg %p594
      $region102: #{decoder_layer_forward.1} parent=11 // pred_check_branch
        %724 = sbr.rel (%p722) target = $region104
      $region103: #{decoder_layer_forward.1} parent=11 // pred_region
        _
      $region104: #{decoder_layer_forward.1} parent=11 // pred_fallthru
        _
      // Predicated region
      $region105: #{decoder_layer_forward.1} parent=11 // pred_check
        %p725 = pneg %p615
      $region106: #{decoder_layer_forward.1} parent=11 // pred_check_branch
        %727 = sbr.rel (%p725) target = $region108
      $region107: #{decoder_layer_forward.1} parent=11 // pred_region
        _
      $region108: #{decoder_layer_forward.1} parent=11 // pred_fallthru
        _
    $region12: #{decoder_layer_forward.1} parent=5 // pred_fallthru
      _
    %p728 = scmp.lt.s32.totalorder %s33, 2
    // Predicated region
    $region109: #{decoder_layer_forward.1} parent=5 // pred_check
      %p729 = pneg %p728
    $region110: #{decoder_layer_forward.1} parent=5 // pred_check_branch
      %731 = sbr.rel (%p729) target = $region112
    $region111: #{decoder_layer_forward.1} parent=5 // pred_region
      // Predicated region
      $region113: #{decoder_layer_forward.1} parent=111 // pred_check
        %p732 = pneg %p53
      $region114: #{decoder_layer_forward.1} parent=111 // pred_check_branch
        %734 = sbr.rel (%p732) target = $region116
      $region115: #{decoder_layer_forward.1} parent=111 // pred_region
        %p735 = scmp.lt.s32.totalorder %s33, 1
        %s736 = scalar_select %p735, %s33, 1
        %s737 = smul.addr %s736, 8
        %s738 = scalar_lea.vmem %s0, %s737
      $region116: #{decoder_layer_forward.1} parent=111 // pred_fallthru
        _
      // Predicated region
      $region117: #{decoder_layer_forward.1} parent=111 // pred_check
        %p739 = pneg %p79
      $region118: #{decoder_layer_forward.1} parent=111 // pred_check_branch
        %741 = sbr.rel (%p739) target = $region120
      $region119: #{decoder_layer_forward.1} parent=111 // pred_region
        %p742 = scmp.lt.s32.totalorder %s33, 1
        %s743 = scalar_select %p742, %s33, 1
        %s744 = smul.addr %s743, 2
        %s745 = smul.addr %s744, 8
        %s746 = scalar_lea.vmem %s1, %s745
      $region120: #{decoder_layer_forward.1} parent=111 // pred_fallthru
        _
      // Predicated region
      $region121: #{decoder_layer_forward.1} parent=111 // pred_check
        %p747 = pneg %p105
      $region122: #{decoder_layer_forward.1} parent=111 // pred_check_branch
        %749 = sbr.rel (%p747) target = $region124
      $region123: #{decoder_layer_forward.1} parent=111 // pred_region
        %p750 = scmp.lt.s32.totalorder %s33, 1
        %s751 = scalar_select %p750, %s33, 1
        %s752 = smul.addr %s751, 8
        %s753 = scalar_lea.vmem %s2, %s752
      $region124: #{decoder_layer_forward.1} parent=111 // pred_fallthru
        _
    $region112: #{decoder_layer_forward.1} parent=5 // pred_fallthru
      _
    %p754 = scmp.le.s32.totalorder 1, %s33
    %p755 = scmp.lt.s32.totalorder %s33, 3
    %p756 = pnand %p754, %p755
    %p757 = pneg %p756
    // Predicated region
    $region125: #{decoder_layer_forward.1} parent=5 // pred_check
      _
    $region126: #{decoder_layer_forward.1} parent=5 // pred_check_branch
      %759 = sbr.rel (%p756) target = $region128
    $region127: #{decoder_layer_forward.1} parent=5 // pred_region
      %s760 = ssub.s32 %s33, 1
      %p761 = scmp.lt.s32.totalorder %s38, 1
      %s762 = scalar_select %p761, %s38, 1
      %s763 = smul.addr %s762, 8
      %s764 = scalar_lea.vmem %s0, %s763
      %p765 = pneg %p59
      %p766 = pneg %p56
      %p767 = scmp.lt.s32.totalorder %s38, 1
      %s768 = scalar_select %p767, %s38, 1
      %s769 = smul.addr %s768, 2
      %s770 = smul.addr %s769, 8
      %s771 = scalar_lea.vmem %s1, %s770
      %p772 = pneg %p85
      %p773 = pneg %p82
      %p774 = scmp.lt.s32.totalorder %s38, 1
      %s775 = scalar_select %p774, %s38, 1
      %s776 = smul.addr %s775, 8
      %s777 = scalar_lea.vmem %s2, %s776
      %p778 = pneg %p111
      %p779 = pneg %p108
      %p780 = pneg %p132
      %p781 = pneg %p129
      %p782 = pneg %p153
      %p783 = pneg %p150
      %p784 = pneg %p174
      %p785 = pneg %p171
      %p786 = pneg %p195
      %p787 = pneg %p192
      %p788 = pneg %p216
      %p789 = pneg %p213
      %p790 = pneg %p237
      %p791 = pneg %p234
      %p792 = pneg %p258
      %p793 = pneg %p255
      %p794 = pneg %p279
      %p795 = pneg %p276
      %p796 = pneg %p300
      %p797 = pneg %p297
      %p798 = pneg %p321
      %p799 = pneg %p318
      %p800 = pneg %p342
      %p801 = pneg %p339
      %p802 = pneg %p363
      %p803 = pneg %p360
      %p804 = pneg %p384
      %p805 = pneg %p381
      %p806 = pneg %p405
      %p807 = pneg %p402
      %p808 = pneg %p426
      %p809 = pneg %p423
      %p810 = pneg %p447
      %p811 = pneg %p444
      %p812 = pneg %p468
      %p813 = pneg %p465
      %p814 = pneg %p489
      %p815 = pneg %p486
      %p816 = pneg %p510
      %p817 = pneg %p507
      %p818 = pneg %p531
      %p819 = pneg %p528
      %p820 = pneg %p552
      %p821 = pneg %p549
      %p822 = pneg %p573
      %p823 = pneg %p570
      %p824 = pneg %p594
      %p825 = pneg %p591
      %p826 = pneg %p615
      %p827 = pneg %p612
      %p828 = pneg %p641
      %p829 = pneg %p638
      %p830 = scmp.lt.s32.totalorder %s38, 1
      %s831 = scalar_select %p830, %s38, 1
      %s832 = smul.addr %s831, 2
      %s833 = scalar_lea.vmem %s27, %s832
      %p834 = scmp.lt.s32.totalorder %s38, 1
      %s835 = scalar_select %p834, %s38, 1
      %s836 = smul.addr %s835, 8
      %s837 = scalar_lea.vmem %s0, %s836
      %p838 = scmp.lt.s32.totalorder %s38, 1
      %s839 = scalar_select %p838, %s38, 1
      %s840 = smul.addr %s839, 2
      %s841 = smul.addr %s840, 8
      %s842 = scalar_lea.vmem %s1, %s841
      %p843 = scmp.lt.s32.totalorder %s38, 1
      %s844 = scalar_select %p843, %s38, 1
      %s845 = smul.addr %s844, 8
      %s846 = scalar_lea.vmem %s2, %s845
      %p847 = scmp.lt.s32.totalorder %s38, 1
      %s848 = scalar_select %p847, %s38, 1
      %s849 = smul.addr %s848, 2
      %s850 = scalar_lea.vmem %s27, %s849
      %v852 = vld [vmem:[%s837] sm:$0xff]
      %v853 = vld [vmem:[%s842] sm:$0xff]
      %v854 = vld [vmem:[%s842 + $0x8] sm:$0xff]
      %v855 = vpack.c.bf16 %v854, %v853
      %v856 = vld [vmem:[%s846] sm:$0xff]
      %v857 = vpack.c.bf16 %v856, %v856
      %v858 = vld [vmem:[%s26] sm:$0x3f]
      %v859 = vpack.c.bf16 %v852, %v852
      %v860 = vld [vmem:[%s3] sm:$0xf]
      %v861 = vld [vmem:[%s3 + $0x4] sm:$0xf]
      %v862 = vld [vmem:[%s3 + $0x8] sm:$0xf]
      %v863 = vld [vmem:[%s3 + $0xc] sm:$0xf]
      %v864 = vld [vmem:[%s4] sm:$0x1]
      %v866 = vlaneseq
      %v867 = vshrl.u32 %v866, 7
      %v868 = vsub.s32 0, %v867
      %v869 = vrot.slane %v864, %v868
      %v875 = vunpack.c.l.b16 %v860
      %v876 = vunpack.c.l.b16 %v861
      %v877 = vunpack.c.l.b16 %v862
      %v878 = vunpack.c.l.b16 %v863
      %v879 = vpack.c.b16 %v876, %v875
      %v880 = vpack.c.b16 %v878, %v877
      %vm883 = vcmask 261120
      %v885 = vsel %vm883, %v859, 0
      %887 = vmatprep.subr.bf16.mxu0 0
      %888 = vmatpush1.bf16.msra.mxu0 %v879
      %889 = vmatprep.subr.bf16.mxu0 0
      %890 = vmatpush1.bf16.msra.mxu0 %v880
      %891 = vmatprep.subr.bf16.mxu0 0
      %892 = vmatpush1.bf16.msra.mxu0 0
      %893 = vmatprep.subr.bf16.mxu0 0
      %894 = vmatpush1.bf16.msra.mxu0 0
      %895 = vmatprep.subr.bf16.mxu0 0
      %896 = vmatpush1.bf16.msra.mxu0 0
      %897 = vmatprep.subr.bf16.mxu0 0
      %898 = vmatpush1.bf16.msra.mxu0 0
      %899 = vmatprep.subr.bf16.mxu0 0
      %900 = vmatpush1.bf16.msra.mxu0 0
      %901 = vmatprep.subr.bf16.mxu0 0
      %902 = vmatpush1.bf16.msra.mxu0 0
      %903 = vmatprep.subr.bf16.mxu0 0
      %904 = vmatpush1.bf16.msra.mxu0 0
      %905 = vmatprep.subr.bf16.mxu0 0
      %906 = vmatpush1.bf16.msra.mxu0 0
      %907 = vmatprep.subr.bf16.mxu0 0
      %908 = vmatpush1.bf16.msra.mxu0 0
      %909 = vmatprep.subr.bf16.mxu0 0
      %910 = vmatpush1.bf16.msra.mxu0 0
      %911 = vmatprep.subr.bf16.mxu0 0
      %912 = vmatpush1.bf16.msra.mxu0 0
      %913 = vmatprep.subr.bf16.mxu0 0
      %914 = vmatpush1.bf16.msra.mxu0 0
      %915 = vmatprep.subr.bf16.mxu0 0
      %916 = vmatpush1.bf16.msra.mxu0 0
      %917 = vmatprep.subr.bf16.mxu0 0
      %918 = vmatpush1.bf16.msra.mxu0 0
      %919 = vmatprep.mubr.bf16.mxu0 0
      %920 = vmatmul.mubr.bf16.gmra.mrb[0].mxu0 %v885
      %v921 = vpop.f32.mrb[0].mxu0
      %v922 = vadd.f32 %v869, %v921
      %v923 = vpop.f32.mrb[0].mxu0
      %v924 = vpop.f32.mrb[0].mxu0
      %v925 = vpop.f32.mrb[0].mxu0
      %926 = vdwg.mxu0
      %v927 = vpack.c.bf16 %v922, %v922
      %929 = vrot.lane.b32.xlu0 %v927, 96
      %v930 = vpop.permute.xlu0 %929
      %vm931 = vcmask 64512
      %v933 = vsel %vm931, %v927, 0
      %v936 = vsel %vm931, %v930, 0
      %938 = vmatprep.subr.bf16.mxu0 0
      %939 = vmatpush1.bf16.xpose.msra.mxu0 %v936
      %940 = vmatprep.subr.bf16.mxu0 0
      %941 = vmatpush1.bf16.xpose.msra.mxu0 0
      %942 = vmatprep.subr.bf16.mxu0 0
      %943 = vmatpush1.bf16.xpose.msra.mxu0 0
      %944 = vmatprep.subr.bf16.mxu0 0
      %945 = vmatpush1.bf16.xpose.msra.mxu0 0
      %946 = vmatprep.subr.bf16.mxu0 0
      %947 = vmatpush1.bf16.xpose.msra.mxu0 0
      %948 = vmatprep.subr.bf16.mxu0 0
      %949 = vmatpush1.bf16.xpose.msra.mxu0 0
      %950 = vmatprep.subr.bf16.mxu0 0
      %951 = vmatpush1.bf16.xpose.msra.mxu0 0
      %952 = vmatprep.subr.bf16.mxu0 0
      %953 = vmatpush1.bf16.xpose.msra.mxu0 0
      %954 = vmatprep.subr.bf16.mxu0 0
      %955 = vmatpush1.bf16.xpose.msra.mxu0 0
      %956 = vmatprep.subr.bf16.mxu0 0
      %957 = vmatpush1.bf16.xpose.msra.mxu0 0
      %958 = vmatprep.subr.bf16.mxu0 0
      %959 = vmatpush1.bf16.xpose.msra.mxu0 0
      %960 = vmatprep.subr.bf16.mxu0 0
      %961 = vmatpush1.bf16.xpose.msra.mxu0 0
      %962 = vmatprep.subr.bf16.mxu0 0
      %963 = vmatpush1.bf16.xpose.msra.mxu0 0
      %964 = vmatprep.subr.bf16.mxu0 0
      %965 = vmatpush1.bf16.xpose.msra.mxu0 0
      %966 = vmatprep.subr.bf16.mxu0 0
      %967 = vmatpush1.bf16.xpose.msra.mxu0 0
      %968 = vmatprep.subr.bf16.mxu0 0
      %969 = vmatpush1.bf16.xpose.msra.mxu0 0
      %970 = vmatprep.mubr.bf16.mxu0 0
      %971 = vmatmul.mubr.bf16.gmra.mrb[0].mxu0 %v933
      %v972 = vpop.f32.mrb[0].mxu0
      %v973 = vadd.f32 0.0, %v972
      %v974 = vpop.f32.mrb[0].mxu0
      %v975 = vpop.f32.mrb[0].mxu0
      %v976 = vpop.f32.mrb[0].mxu0
      %977 = vdwg.mxu0
      %v978 = vsel %vm931, %v973, -inf
      %979 = vmax.xlane.f32.xlu0 %v978
      %v980 = vpop.xlane.xlu0 %979
      %v981 = vsub.f32 %v973, %v980
      %v982 = vmul.f32 %v981, 1.442695
      %v983 = vpow.pop %v982
      %v984 = vsel %vm931, %v983, 0.0
      %985 = vadd.xlane.f32.xlu0 %v984
      %v986 = vpop.xlane.xlu0 %985
      %v987 = vrcp.pop %v986
      %v988 = vmul.f32 %v983, %v987
      %v989 = vpack.c.bf16 %v988, %v988
      %990 = vrot.lane.b32.xlu0 %v927, 64
      %v991 = vpop.permute.xlu0 %990
      %v993 = vsel %vm931, %v989, 0
      %vm995 = vcmask 1043456
      %v997 = vsel %vm995, %v991, 0
      %999 = vmatprep.subr.bf16.mxu0 0
      %1000 = vmatpush1.bf16.msra.mxu0 %v997
      %1001 = vmatprep.subr.bf16.mxu0 0
      %1002 = vmatpush1.bf16.msra.mxu0 0
      %1003 = vmatprep.subr.bf16.mxu0 0
      %1004 = vmatpush1.bf16.msra.mxu0 0
      %1005 = vmatprep.subr.bf16.mxu0 0
      %1006 = vmatpush1.bf16.msra.mxu0 0
      %1007 = vmatprep.subr.bf16.mxu0 0
      %1008 = vmatpush1.bf16.msra.mxu0 0
      %1009 = vmatprep.subr.bf16.mxu0 0
      %1010 = vmatpush1.bf16.msra.mxu0 0
      %1011 = vmatprep.subr.bf16.mxu0 0
      %1012 = vmatpush1.bf16.msra.mxu0 0
      %1013 = vmatprep.subr.bf16.mxu0 0
      %1014 = vmatpush1.bf16.msra.mxu0 0
      %1015 = vmatprep.subr.bf16.mxu0 0
      %1016 = vmatpush1.bf16.msra.mxu0 0
      %1017 = vmatprep.subr.bf16.mxu0 0
      %1018 = vmatpush1.bf16.msra.mxu0 0
      %1019 = vmatprep.subr.bf16.mxu0 0
      %1020 = vmatpush1.bf16.msra.mxu0 0
      %1021 = vmatprep.subr.bf16.mxu0 0
      %1022 = vmatpush1.bf16.msra.mxu0 0
      %1023 = vmatprep.subr.bf16.mxu0 0
      %1024 = vmatpush1.bf16.msra.mxu0 0
      %1025 = vmatprep.subr.bf16.mxu0 0
      %1026 = vmatpush1.bf16.msra.mxu0 0
      %1027 = vmatprep.subr.bf16.mxu0 0
      %1028 = vmatpush1.bf16.msra.mxu0 0
      %1029 = vmatprep.subr.bf16.mxu0 0
      %1030 = vmatpush1.bf16.msra.mxu0 0
      %1031 = vmatprep.mubr.bf16.mxu0 0
      %1032 = vmatmul.mubr.bf16.gmra.mrb[0].mxu0 %v993
      %v1033 = vpop.f32.mrb[0].mxu0
      %v1034 = vadd.f32 0.0, %v1033
      %v1035 = vpop.f32.mrb[0].mxu0
      %v1036 = vpop.f32.mrb[0].mxu0
      %v1037 = vpop.f32.mrb[0].mxu0
      %1038 = vdwg.mxu0
      %1039 = vrot.lane.b32.xlu0 %v927, 120
      %v1040 = vpop.permute.xlu0 %1039
      %1041 = vrot.lane.b32.xlu0 %v927, 88
      %v1042 = vpop.permute.xlu0 %1041
      %v1044 = vsel %vm931, %v1040, 0
      %v1047 = vsel %vm931, %v1042, 0
      %1049 = vmatprep.subr.bf16.mxu0 0
      %1050 = vmatpush1.bf16.xpose.msra.mxu0 %v1047
      %1051 = vmatprep.subr.bf16.mxu0 0
      %1052 = vmatpush1.bf16.xpose.msra.mxu0 0
      %1053 = vmatprep.subr.bf16.mxu0 0
      %1054 = vmatpush1.bf16.xpose.msra.mxu0 0
      %1055 = vmatprep.subr.bf16.mxu0 0
      %1056 = vmatpush1.bf16.xpose.msra.mxu0 0
      %1057 = vmatprep.subr.bf16.mxu0 0
      %1058 = vmatpush1.bf16.xpose.msra.mxu0 0
      %1059 = vmatprep.subr.bf16.mxu0 0
      %1060 = vmatpush1.bf16.xpose.msra.mxu0 0
      %1061 = vmatprep.subr.bf16.mxu0 0
      %1062 = vmatpush1.bf16.xpose.msra.mxu0 0
      %1063 = vmatprep.subr.bf16.mxu0 0
      %1064 = vmatpush1.bf16.xpose.msra.mxu0 0
      %1065 = vmatprep.subr.bf16.mxu0 0
      %1066 = vmatpush1.bf16.xpose.msra.mxu0 0
      %1067 = vmatprep.subr.bf16.mxu0 0
      %1068 = vmatpush1.bf16.xpose.msra.mxu0 0
      %1069 = vmatprep.subr.bf16.mxu0 0
      %1070 = vmatpush1.bf16.xpose.msra.mxu0 0
      %1071 = vmatprep.subr.bf16.mxu0 0
      %1072 = vmatpush1.bf16.xpose.msra.mxu0 0
      %1073 = vmatprep.subr.bf16.mxu0 0
      %1074 = vmatpush1.bf16.xpose.msra.mxu0 0
      %1075 = vmatprep.subr.bf16.mxu0 0
      %1076 = vmatpush1.bf16.xpose.msra.mxu0 0
      %1077 = vmatprep.subr.bf16.mxu0 0
      %1078 = vmatpush1.bf16.xpose.msra.mxu0 0
      %1079 = vmatprep.subr.bf16.mxu0 0
      %1080 = vmatpush1.bf16.xpose.msra.mxu0 0
      %1081 = vmatprep.mubr.bf16.mxu0 0
      %1082 = vmatmul.mubr.bf16.gmra.mrb[0].mxu0 %v1044
      %v1083 = vpop.f32.mrb[0].mxu0
      %v1084 = vadd.f32 0.0, %v1083
      %v1085 = vpop.f32.mrb[0].mxu0
      %v1086 = vpop.f32.mrb[0].mxu0
      %v1087 = vpop.f32.mrb[0].mxu0
      %1088 = vdwg.mxu0
      %v1089 = vsel %vm931, %v1084, -inf
      %1090 = vmax.xlane.f32.xlu0 %v1089
      %v1091 = vpop.xlane.xlu0 %1090
      %v1092 = vsub.f32 %v1084, %v1091
      %v1093 = vmul.f32 %v1092, 1.442695
      %v1094 = vpow.pop %v1093
      %v1095 = vsel %vm931, %v1094, 0.0
      %1096 = vadd.xlane.f32.xlu0 %v1095
      %v1097 = vpop.xlane.xlu0 %1096
      %v1098 = vrcp.pop %v1097
      %v1099 = vmul.f32 %v1094, %v1098
      %v1100 = vpack.c.bf16 %v1099, %v1099
      %1101 = vrot.lane.b32.xlu0 %v927, 56
      %v1102 = vpop.permute.xlu0 %1101
      %v1104 = vsel %vm931, %v1100, 0
      %v1107 = vsel %vm995, %v1102, 0
      %1109 = vmatprep.subr.bf16.mxu0 0
      %1110 = vmatpush1.bf16.msra.mxu0 %v1107
      %1111 = vmatprep.subr.bf16.mxu0 0
      %1112 = vmatpush1.bf16.msra.mxu0 0
      %1113 = vmatprep.subr.bf16.mxu0 0
      %1114 = vmatpush1.bf16.msra.mxu0 0
      %1115 = vmatprep.subr.bf16.mxu0 0
      %1116 = vmatpush1.bf16.msra.mxu0 0
      %1117 = vmatprep.subr.bf16.mxu0 0
      %1118 = vmatpush1.bf16.msra.mxu0 0
      %1119 = vmatprep.subr.bf16.mxu0 0
      %1120 = vmatpush1.bf16.msra.mxu0 0
      %1121 = vmatprep.subr.bf16.mxu0 0
      %1122 = vmatpush1.bf16.msra.mxu0 0
      %1123 = vmatprep.subr.bf16.mxu0 0
      %1124 = vmatpush1.bf16.msra.mxu0 0
      %1125 = vmatprep.subr.bf16.mxu0 0
      %1126 = vmatpush1.bf16.msra.mxu0 0
      %1127 = vmatprep.subr.bf16.mxu0 0
      %1128 = vmatpush1.bf16.msra.mxu0 0
      %1129 = vmatprep.subr.bf16.mxu0 0
      %1130 = vmatpush1.bf16.msra.mxu0 0
      %1131 = vmatprep.subr.bf16.mxu0 0
      %1132 = vmatpush1.bf16.msra.mxu0 0
      %1133 = vmatprep.subr.bf16.mxu0 0
      %1134 = vmatpush1.bf16.msra.mxu0 0
      %1135 = vmatprep.subr.bf16.mxu0 0
      %1136 = vmatpush1.bf16.msra.mxu0 0
      %1137 = vmatprep.subr.bf16.mxu0 0
      %1138 = vmatpush1.bf16.msra.mxu0 0
      %1139 = vmatprep.subr.bf16.mxu0 0
      %1140 = vmatpush1.bf16.msra.mxu0 0
      %1141 = vmatprep.mubr.bf16.mxu0 0
      %1142 = vmatmul.mubr.bf16.gmra.mrb[0].mxu0 %v1104
      %v1143 = vpop.f32.mrb[0].mxu0
      %v1144 = vadd.f32 0.0, %v1143
      %v1145 = vpop.f32.mrb[0].mxu0
      %v1146 = vpop.f32.mrb[0].mxu0
      %v1147 = vpop.f32.mrb[0].mxu0
      %1148 = vdwg.mxu0
      %1149 = vrot.lane.b32.xlu0 %v927, 112
      %v1150 = vpop.permute.xlu0 %1149
      %1151 = vrot.lane.b32.xlu0 %v927, 80
      %v1152 = vpop.permute.xlu0 %1151
      %v1154 = vsel %vm931, %v1150, 0
      %v1157 = vsel %vm931, %v1152, 0
      %1159 = vmatprep.subr.bf16.mxu0 0
      %1160 = vmatpush1.bf16.xpose.msra.mxu0 %v1157
      %1161 = vmatprep.subr.bf16.mxu0 0
      %1162 = vmatpush1.bf16.xpose.msra.mxu0 0
      %1163 = vmatprep.subr.bf16.mxu0 0
      %1164 = vmatpush1.bf16.xpose.msra.mxu0 0
      %1165 = vmatprep.subr.bf16.mxu0 0
      %1166 = vmatpush1.bf16.xpose.msra.mxu0 0
      %1167 = vmatprep.subr.bf16.mxu0 0
      %1168 = vmatpush1.bf16.xpose.msra.mxu0 0
      %1169 = vmatprep.subr.bf16.mxu0 0
      %1170 = vmatpush1.bf16.xpose.msra.mxu0 0
      %1171 = vmatprep.subr.bf16.mxu0 0
      %1172 = vmatpush1.bf16.xpose.msra.mxu0 0
      %1173 = vmatprep.subr.bf16.mxu0 0
      %1174 = vmatpush1.bf16.xpose.msra.mxu0 0
      %1175 = vmatprep.subr.bf16.mxu0 0
      %1176 = vmatpush1.bf16.xpose.msra.mxu0 0
      %1177 = vmatprep.subr.bf16.mxu0 0
      %1178 = vmatpush1.bf16.xpose.msra.mxu0 0
      %1179 = vmatprep.subr.bf16.mxu0 0
      %1180 = vmatpush1.bf16.xpose.msra.mxu0 0
      %1181 = vmatprep.subr.bf16.mxu0 0
      %1182 = vmatpush1.bf16.xpose.msra.mxu0 0
      %1183 = vmatprep.subr.bf16.mxu0 0
      %1184 = vmatpush1.bf16.xpose.msra.mxu0 0
      %1185 = vmatprep.subr.bf16.mxu0 0
      %1186 = vmatpush1.bf16.xpose.msra.mxu0 0
      %1187 = vmatprep.subr.bf16.mxu0 0
      %1188 = vmatpush1.bf16.xpose.msra.mxu0 0
      %1189 = vmatprep.subr.bf16.mxu0 0
      %1190 = vmatpush1.bf16.xpose.msra.mxu0 0
      %1191 = vmatprep.mubr.bf16.mxu0 0
      %1192 = vmatmul.mubr.bf16.gmra.mrb[0].mxu0 %v1154
      %v1193 = vpop.f32.mrb[0].mxu0
      %v1194 = vadd.f32 0.0, %v1193
      %v1195 = vpop.f32.mrb[0].mxu0
      %v1196 = vpop.f32.mrb[0].mxu0
      %v1197 = vpop.f32.mrb[0].mxu0
      %1198 = vdwg.mxu0
      %v1199 = vsel %vm931, %v1194, -inf
      %1200 = vmax.xlane.f32.xlu0 %v1199
      %v1201 = vpop.xlane.xlu0 %1200
      %v1202 = vsub.f32 %v1194, %v1201
      %v1203 = vmul.f32 %v1202, 1.442695
      %v1204 = vpow.pop %v1203
      %v1205 = vsel %vm931, %v1204, 0.0
      %1206 = vadd.xlane.f32.xlu0 %v1205
      %v1207 = vpop.xlane.xlu0 %1206
      %v1208 = vrcp.pop %v1207
      %v1209 = vmul.f32 %v1204, %v1208
      %v1210 = vpack.c.bf16 %v1209, %v1209
      %1211 = vrot.lane.b32.xlu0 %v927, 48
      %v1212 = vpop.permute.xlu0 %1211
      %v1214 = vsel %vm931, %v1210, 0
      %v1217 = vsel %vm995, %v1212, 0
      %1219 = vmatprep.subr.bf16.mxu0 0
      %1220 = vmatpush1.bf16.msra.mxu0 %v1217
      %1221 = vmatprep.subr.bf16.mxu0 0
      %1222 = vmatpush1.bf16.msra.mxu0 0
      %1223 = vmatprep.subr.bf16.mxu0 0
      %1224 = vmatpush1.bf16.msra.mxu0 0
      %1225 = vmatprep.subr.bf16.mxu0 0
      %1226 = vmatpush1.bf16.msra.mxu0 0
      %1227 = vmatprep.subr.bf16.mxu0 0
      %1228 = vmatpush1.bf16.msra.mxu0 0
      %1229 = vmatprep.subr.bf16.mxu0 0
      %1230 = vmatpush1.bf16.msra.mxu0 0
      %1231 = vmatprep.subr.bf16.mxu0 0
      %1232 = vmatpush1.bf16.msra.mxu0 0
      %1233 = vmatprep.subr.bf16.mxu0 0
      %1234 = vmatpush1.bf16.msra.mxu0 0
      %1235 = vmatprep.subr.bf16.mxu0 0
      %1236 = vmatpush1.bf16.msra.mxu0 0
      %1237 = vmatprep.subr.bf16.mxu0 0
      %1238 = vmatpush1.bf16.msra.mxu0 0
      %1239 = vmatprep.subr.bf16.mxu0 0
      %1240 = vmatpush1.bf16.msra.mxu0 0
      %1241 = vmatprep.subr.bf16.mxu0 0
      %1242 = vmatpush1.bf16.msra.mxu0 0
      %1243 = vmatprep.subr.bf16.mxu0 0
      %1244 = vmatpush1.bf16.msra.mxu0 0
      %1245 = vmatprep.subr.bf16.mxu0 0
      %1246 = vmatpush1.bf16.msra.mxu0 0
      %1247 = vmatprep.subr.bf16.mxu0 0
      %1248 = vmatpush1.bf16.msra.mxu0 0
      %1249 = vmatprep.subr.bf16.mxu0 0
      %1250 = vmatpush1.bf16.msra.mxu0 0
      %1251 = vmatprep.mubr.bf16.mxu0 0
      %1252 = vmatmul.mubr.bf16.gmra.mrb[0].mxu0 %v1214
      %v1253 = vpop.f32.mrb[0].mxu0
      %v1254 = vadd.f32 0.0, %v1253
      %v1255 = vpop.f32.mrb[0].mxu0
      %v1256 = vpop.f32.mrb[0].mxu0
      %v1257 = vpop.f32.mrb[0].mxu0
      %1258 = vdwg.mxu0
      %1259 = vrot.lane.b32.xlu0 %v927, 104
      %v1260 = vpop.permute.xlu0 %1259
      %1261 = vrot.lane.b32.xlu0 %v927, 72
      %v1262 = vpop.permute.xlu0 %1261
      %v1264 = vsel %vm931, %v1260, 0
      %v1267 = vsel %vm931, %v1262, 0
      %1269 = vmatprep.subr.bf16.mxu0 0
      %1270 = vmatpush1.bf16.xpose.msra.mxu0 %v1267
      %1271 = vmatprep.subr.bf16.mxu0 0
      %1272 = vmatpush1.bf16.xpose.msra.mxu0 0
      %1273 = vmatprep.subr.bf16.mxu0 0
      %1274 = vmatpush1.bf16.xpose.msra.mxu0 0
      %1275 = vmatprep.subr.bf16.mxu0 0
      %1276 = vmatpush1.bf16.xpose.msra.mxu0 0
      %1277 = vmatprep.subr.bf16.mxu0 0
      %1278 = vmatpush1.bf16.xpose.msra.mxu0 0
      %1279 = vmatprep.subr.bf16.mxu0 0
      %1280 = vmatpush1.bf16.xpose.msra.mxu0 0
      %1281 = vmatprep.subr.bf16.mxu0 0
      %1282 = vmatpush1.bf16.xpose.msra.mxu0 0
      %1283 = vmatprep.subr.bf16.mxu0 0
      %1284 = vmatpush1.bf16.xpose.msra.mxu0 0
      %1285 = vmatprep.subr.bf16.mxu0 0
      %1286 = vmatpush1.bf16.xpose.msra.mxu0 0
      %1287 = vmatprep.subr.bf16.mxu0 0
      %1288 = vmatpush1.bf16.xpose.msra.mxu0 0
      %1289 = vmatprep.subr.bf16.mxu0 0
      %1290 = vmatpush1.bf16.xpose.msra.mxu0 0
      %1291 = vmatprep.subr.bf16.mxu0 0
      %1292 = vmatpush1.bf16.xpose.msra.mxu0 0
      %1293 = vmatprep.subr.bf16.mxu0 0
      %1294 = vmatpush1.bf16.xpose.msra.mxu0 0
      %1295 = vmatprep.subr.bf16.mxu0 0
      %1296 = vmatpush1.bf16.xpose.msra.mxu0 0
      %1297 = vmatprep.subr.bf16.mxu0 0
      %1298 = vmatpush1.bf16.xpose.msra.mxu0 0
      %1299 = vmatprep.subr.bf16.mxu0 0
      %1300 = vmatpush1.bf16.xpose.msra.mxu0 0
      %1301 = vmatprep.mubr.bf16.mxu0 0
      %1302 = vmatmul.mubr.bf16.gmra.mrb[0].mxu0 %v1264
      %v1303 = vpop.f32.mrb[0].mxu0
      %v1304 = vadd.f32 0.0, %v1303
      %v1305 = vpop.f32.mrb[0].mxu0
      %v1306 = vpop.f32.mrb[0].mxu0
      %v1307 = vpop.f32.mrb[0].mxu0
      %1308 = vdwg.mxu0
      %v1309 = vsel %vm931, %v1304, -inf
      %1310 = vmax.xlane.f32.xlu0 %v1309
      %v1311 = vpop.xlane.xlu0 %1310
      %v1312 = vsub.f32 %v1304, %v1311
      %v1313 = vmul.f32 %v1312, 1.442695
      %v1314 = vpow.pop %v1313
      %v1315 = vsel %vm931, %v1314, 0.0
      %1316 = vadd.xlane.f32.xlu0 %v1315
      %v1317 = vpop.xlane.xlu0 %1316
      %v1318 = vrcp.pop %v1317
      %v1319 = vmul.f32 %v1314, %v1318
      %v1320 = vpack.c.bf16 %v1319, %v1319
      %1321 = vrot.lane.b32.xlu0 %v927, 40
      %v1322 = vpop.permute.xlu0 %1321
      %v1324 = vsel %vm931, %v1320, 0
      %v1327 = vsel %vm995, %v1322, 0
      %1329 = vmatprep.subr.bf16.mxu0 0
      %1330 = vmatpush1.bf16.msra.mxu0 %v1327
      %1331 = vmatprep.subr.bf16.mxu0 0
      %1332 = vmatpush1.bf16.msra.mxu0 0
      %1333 = vmatprep.subr.bf16.mxu0 0
      %1334 = vmatpush1.bf16.msra.mxu0 0
      %1335 = vmatprep.subr.bf16.mxu0 0
      %1336 = vmatpush1.bf16.msra.mxu0 0
      %1337 = vmatprep.subr.bf16.mxu0 0
      %1338 = vmatpush1.bf16.msra.mxu0 0
      %1339 = vmatprep.subr.bf16.mxu0 0
      %1340 = vmatpush1.bf16.msra.mxu0 0
      %1341 = vmatprep.subr.bf16.mxu0 0
      %1342 = vmatpush1.bf16.msra.mxu0 0
      %1343 = vmatprep.subr.bf16.mxu0 0
      %1344 = vmatpush1.bf16.msra.mxu0 0
      %1345 = vmatprep.subr.bf16.mxu0 0
      %1346 = vmatpush1.bf16.msra.mxu0 0
      %1347 = vmatprep.subr.bf16.mxu0 0
      %1348 = vmatpush1.bf16.msra.mxu0 0
      %1349 = vmatprep.subr.bf16.mxu0 0
      %1350 = vmatpush1.bf16.msra.mxu0 0
      %1351 = vmatprep.subr.bf16.mxu0 0
      %1352 = vmatpush1.bf16.msra.mxu0 0
      %1353 = vmatprep.subr.bf16.mxu0 0
      %1354 = vmatpush1.bf16.msra.mxu0 0
      %1355 = vmatprep.subr.bf16.mxu0 0
      %1356 = vmatpush1.bf16.msra.mxu0 0
      %1357 = vmatprep.subr.bf16.mxu0 0
      %1358 = vmatpush1.bf16.msra.mxu0 0
      %1359 = vmatprep.subr.bf16.mxu0 0
      %1360 = vmatpush1.bf16.msra.mxu0 0
      %1361 = vmatprep.mubr.bf16.mxu0 0
      %1362 = vmatmul.mubr.bf16.gmra.mrb[0].mxu0 %v1324
      %v1363 = vpop.f32.mrb[0].mxu0
      %v1364 = vadd.f32 0.0, %v1363
      %v1365 = vpop.f32.mrb[0].mxu0
      %v1366 = vpop.f32.mrb[0].mxu0
      %v1367 = vpop.f32.mrb[0].mxu0
      %1368 = vdwg.mxu0
      %1370 = vrot.lane.b32.xlu0 %v1144, 8
      %v1371 = vpop.permute.xlu0 %1370
      %1374 = vrot.lane.b32.xlu0 %v1254, 16
      %v1375 = vpop.permute.xlu0 %1374
      %1378 = vrot.lane.b32.xlu0 %v1364, 24
      %v1379 = vpop.permute.xlu0 %1378
      %v1381 = vsel %vm931, %v1034, %v1371
      %vm1382 = vcmask 130048
      %v1383 = vsel %vm1382, %v1381, %v1375
      %vm1384 = vcmask 195584
      %v1385 = vsel %vm1384, %v1383, %v1379
      %v1386 = vpack.c.bf16 %v1385, %v1385
      %v1387 = vld [vmem:[%s5] sm:$0xf]
      %v1388 = vld [vmem:[%s5 + $0x4] sm:$0xf]
      %v1389 = vld [vmem:[%s5 + $0x8] sm:$0xf]
      %v1390 = vld [vmem:[%s5 + $0xc] sm:$0xf]
      %v1391 = vld [vmem:[%s6] sm:$0x1]
      %v1393 = vlaneseq
      %v1394 = vshrl.u32 %v1393, 7
      %v1395 = vsub.s32 0, %v1394
      %v1396 = vrot.slane %v1391, %v1395
      %v1402 = vunpack.c.l.b16 %v1387
      %v1403 = vunpack.c.l.b16 %v1388
      %v1404 = vunpack.c.l.b16 %v1389
      %v1405 = vunpack.c.l.b16 %v1390
      %v1406 = vpack.c.b16 %v1403, %v1402
      %v1407 = vpack.c.b16 %v1405, %v1404
      %v1411 = vsel %vm883, %v1386, 0
      %1413 = vmatprep.subr.bf16.mxu0 0
      %1414 = vmatpush1.bf16.msra.mxu0 %v1406
      %1415 = vmatprep.subr.bf16.mxu0 0
      %1416 = vmatpush1.bf16.msra.mxu0 %v1407
      %1417 = vmatprep.subr.bf16.mxu0 0
      %1418 = vmatpush1.bf16.msra.mxu0 0
      %1419 = vmatprep.subr.bf16.mxu0 0
      %1420 = vmatpush1.bf16.msra.mxu0 0
      %1421 = vmatprep.subr.bf16.mxu0 0
      %1422 = vmatpush1.bf16.msra.mxu0 0
      %1423 = vmatprep.subr.bf16.mxu0 0
      %1424 = vmatpush1.bf16.msra.mxu0 0
      %1425 = vmatprep.subr.bf16.mxu0 0
      %1426 = vmatpush1.bf16.msra.mxu0 0
      %1427 = vmatprep.subr.bf16.mxu0 0
      %1428 = vmatpush1.bf16.msra.mxu0 0
      %1429 = vmatprep.subr.bf16.mxu0 0
      %1430 = vmatpush1.bf16.msra.mxu0 0
      %1431 = vmatprep.subr.bf16.mxu0 0
      %1432 = vmatpush1.bf16.msra.mxu0 0
      %1433 = vmatprep.subr.bf16.mxu0 0
      %1434 = vmatpush1.bf16.msra.mxu0 0
      %1435 = vmatprep.subr.bf16.mxu0 0
      %1436 = vmatpush1.bf16.msra.mxu0 0
      %1437 = vmatprep.subr.bf16.mxu0 0
      %1438 = vmatpush1.bf16.msra.mxu0 0
      %1439 = vmatprep.subr.bf16.mxu0 0
      %1440 = vmatpush1.bf16.msra.mxu0 0
      %1441 = vmatprep.subr.bf16.mxu0 0
      %1442 = vmatpush1.bf16.msra.mxu0 0
      %1443 = vmatprep.subr.bf16.mxu0 0
      %1444 = vmatpush1.bf16.msra.mxu0 0
      %1445 = vmatprep.mubr.bf16.mxu0 0
      %1446 = vmatmul.mubr.bf16.gmra.mrb[0].mxu0 %v1411
      %v1447 = vpop.f32.mrb[0].mxu0
      %v1448 = vadd.f32 %v1396, %v1447
      %v1449 = vpop.f32.mrb[0].mxu0
      %v1450 = vpop.f32.mrb[0].mxu0
      %v1451 = vpop.f32.mrb[0].mxu0
      %1452 = vdwg.mxu0
      %v1453 = vadd.f32 %v852, %v1448
      %v1454 = vsel %vm883, %v1453, 0.0
      %1455 = vadd.xlane.f32.xlu0 %v1454
      %v1456 = vpop.xlane.xlu0 %1455
      %v1457 = vrcp.pop 32.0
      %v1458 = vmul.f32 %v1456, %v1457
      %v1459 = vsub.f32 %v1453, %v1458
      %v1460 = vmul.f32 %v1459, %v1459
      %v1461 = vsel %vm883, %v1460, 0.0
      %1462 = vadd.xlane.f32.xlu0 %v1461
      %v1463 = vpop.xlane.xlu0 %1462
      %v1464 = vmul.f32 %v1463, %v1457
      %v1465 = vadd.f32 %v1464, 1e-05
      %v1466 = vrsqrt.pop %v1465
      %v1467 = vmul.f32 %v1459, %v1466
      %v1468 = vlaneseq
      %v1469 = vshrl.u32 %v1468, 7
      %v1470 = vsub.s32 0, %v1469
      %v1471 = vrot.slane %v858, %v1470
      %v1472 = vmul.f32 %v1467, %v1471
      %v1473 = vlaneseq
      %v1474 = vshrl.u32 %v1473, 7
      %v1475 = vsub.s32 1, %v1474
      %v1476 = vrot.slane %v858, %v1475
      %v1477 = vadd.f32 %v1472, %v1476
      %v1478 = vpack.c.bf16 %v1477, %v1477
      %v1479 = vld [vmem:[%s7] sm:$0xf]
      %v1480 = vld [vmem:[%s7 + $0x4] sm:$0xf]
      %v1481 = vld [vmem:[%s7 + $0x8] sm:$0xf]
      %v1482 = vld [vmem:[%s7 + $0xc] sm:$0xf]
      %v1483 = vld [vmem:[%s8] sm:$0x1]
      %v1485 = vlaneseq
      %v1486 = vshrl.u32 %v1485, 7
      %v1487 = vsub.s32 0, %v1486
      %v1488 = vrot.slane %v1483, %v1487
      %v1494 = vunpack.c.l.b16 %v1479
      %v1495 = vunpack.c.l.b16 %v1480
      %v1496 = vunpack.c.l.b16 %v1481
      %v1497 = vunpack.c.l.b16 %v1482
      %v1498 = vpack.c.b16 %v1495, %v1494
      %v1499 = vpack.c.b16 %v1497, %v1496
      %v1503 = vsel %vm883, %v1478, 0
      %1505 = vmatprep.subr.bf16.mxu0 0
      %1506 = vmatpush1.bf16.msra.mxu0 %v1498
      %1507 = vmatprep.subr.bf16.mxu0 0
      %1508 = vmatpush1.bf16.msra.mxu0 %v1499
      %1509 = vmatprep.subr.bf16.mxu0 0
      %1510 = vmatpush1.bf16.msra.mxu0 0
      %1511 = vmatprep.subr.bf16.mxu0 0
      %1512 = vmatpush1.bf16.msra.mxu0 0
      %1513 = vmatprep.subr.bf16.mxu0 0
      %1514 = vmatpush1.bf16.msra.mxu0 0
      %1515 = vmatprep.subr.bf16.mxu0 0
      %1516 = vmatpush1.bf16.msra.mxu0 0
      %1517 = vmatprep.subr.bf16.mxu0 0
      %1518 = vmatpush1.bf16.msra.mxu0 0
      %1519 = vmatprep.subr.bf16.mxu0 0
      %1520 = vmatpush1.bf16.msra.mxu0 0
      %1521 = vmatprep.subr.bf16.mxu0 0
      %1522 = vmatpush1.bf16.msra.mxu0 0
      %1523 = vmatprep.subr.bf16.mxu0 0
      %1524 = vmatpush1.bf16.msra.mxu0 0
      %1525 = vmatprep.subr.bf16.mxu0 0
      %1526 = vmatpush1.bf16.msra.mxu0 0
      %1527 = vmatprep.subr.bf16.mxu0 0
      %1528 = vmatpush1.bf16.msra.mxu0 0
      %1529 = vmatprep.subr.bf16.mxu0 0
      %1530 = vmatpush1.bf16.msra.mxu0 0
      %1531 = vmatprep.subr.bf16.mxu0 0
      %1532 = vmatpush1.bf16.msra.mxu0 0
      %1533 = vmatprep.subr.bf16.mxu0 0
      %1534 = vmatpush1.bf16.msra.mxu0 0
      %1535 = vmatprep.subr.bf16.mxu0 0
      %1536 = vmatpush1.bf16.msra.mxu0 0
      %1537 = vmatprep.mubr.bf16.mxu0 0
      %1538 = vmatmul.mubr.bf16.gmra.mrb[0].mxu0 %v1503
      %v1539 = vpop.f32.mrb[0].mxu0
      %v1540 = vadd.f32 %v1488, %v1539
      %v1541 = vpop.f32.mrb[0].mxu0
      %v1542 = vpop.f32.mrb[0].mxu0
      %v1543 = vpop.f32.mrb[0].mxu0
      %1544 = vdwg.mxu0
      %v1545 = vld [vmem:[%s9] sm:$0xf]
      %v1546 = vld [vmem:[%s9 + $0x4] sm:$0xf]
      %v1547 = vld [vmem:[%s9 + $0x8] sm:$0xf]
      %v1548 = vld [vmem:[%s9 + $0xc] sm:$0xf]
      %v1549 = vld [vmem:[%s10] sm:$0x1]
      %v1551 = vlaneseq
      %v1552 = vshrl.u32 %v1551, 7
      %v1553 = vsub.s32 0, %v1552
      %v1554 = vrot.slane %v1549, %v1553
      %v1560 = vunpack.c.l.b16 %v1545
      %v1561 = vunpack.c.l.b16 %v1546
      %v1562 = vunpack.c.l.b16 %v1547
      %v1563 = vunpack.c.l.b16 %v1548
      %v1564 = vpack.c.b16 %v1561, %v1560
      %v1565 = vpack.c.b16 %v1563, %v1562
      %v1569 = vsel %vm883, %v855, 0
      %1571 = vmatprep.subr.bf16.mxu0 0
      %1572 = vmatpush1.bf16.msra.mxu0 %v1564
      %1573 = vmatprep.subr.bf16.mxu0 0
      %1574 = vmatpush1.bf16.msra.mxu0 %v1565
      %1575 = vmatprep.subr.bf16.mxu0 0
      %1576 = vmatpush1.bf16.msra.mxu0 0
      %1577 = vmatprep.subr.bf16.mxu0 0
      %1578 = vmatpush1.bf16.msra.mxu0 0
      %1579 = vmatprep.subr.bf16.mxu0 0
      %1580 = vmatpush1.bf16.msra.mxu0 0
      %1581 = vmatprep.subr.bf16.mxu0 0
      %1582 = vmatpush1.bf16.msra.mxu0 0
      %1583 = vmatprep.subr.bf16.mxu0 0
      %1584 = vmatpush1.bf16.msra.mxu0 0
      %1585 = vmatprep.subr.bf16.mxu0 0
      %1586 = vmatpush1.bf16.msra.mxu0 0
      %1587 = vmatprep.subr.bf16.mxu0 0
      %1588 = vmatpush1.bf16.msra.mxu0 0
      %1589 = vmatprep.subr.bf16.mxu0 0
      %1590 = vmatpush1.bf16.msra.mxu0 0
      %1591 = vmatprep.subr.bf16.mxu0 0
      %1592 = vmatpush1.bf16.msra.mxu0 0
      %1593 = vmatprep.subr.bf16.mxu0 0
      %1594 = vmatpush1.bf16.msra.mxu0 0
      %1595 = vmatprep.subr.bf16.mxu0 0
      %1596 = vmatpush1.bf16.msra.mxu0 0
      %1597 = vmatprep.subr.bf16.mxu0 0
      %1598 = vmatpush1.bf16.msra.mxu0 0
      %1599 = vmatprep.subr.bf16.mxu0 0
      %1600 = vmatpush1.bf16.msra.mxu0 0
      %1601 = vmatprep.subr.bf16.mxu0 0
      %1602 = vmatpush1.bf16.msra.mxu0 0
      %1603 = vmatprep.mubr.bf16.mxu0 0
      %1604 = vmatmul.mubr.bf16.gmra.mrb[0].mxu0 %v1569
      %v1605 = vpop.f32.mrb[0].mxu0
      %v1606 = vadd.f32 %v1554, %v1605
      %v1607 = vpop.f32.mrb[0].mxu0
      %v1608 = vpop.f32.mrb[0].mxu0
      %v1609 = vadd.f32 %v1554, %v1608
      %v1610 = vpop.f32.mrb[0].mxu0
      %1611 = vdwg.mxu0
      %v1612 = vpack.c.bf16 %v1540, %v1540
      %v1613 = vpack.c.bf16 %v1609, %v1606
      %v1615 = vsel %vm931, %v1612, 0
      %v1618 = vsel %vm931, %v1613, 0
      %1620 = vmatprep.subr.bf16.mxu0 0
      %1621 = vmatpush1.bf16.xpose.msra.mxu0 %v1618
      %1622 = vmatprep.subr.bf16.mxu0 0
      %1623 = vmatpush1.bf16.xpose.msra.mxu0 0
      %1624 = vmatprep.subr.bf16.mxu0 0
      %1625 = vmatpush1.bf16.xpose.msra.mxu0 0
      %1626 = vmatprep.subr.bf16.mxu0 0
      %1627 = vmatpush1.bf16.xpose.msra.mxu0 0
      %1628 = vmatprep.subr.bf16.mxu0 0
      %1629 = vmatpush1.bf16.xpose.msra.mxu0 0
      %1630 = vmatprep.subr.bf16.mxu0 0
      %1631 = vmatpush1.bf16.xpose.msra.mxu0 0
      %1632 = vmatprep.subr.bf16.mxu0 0
      %1633 = vmatpush1.bf16.xpose.msra.mxu0 0
      %1634 = vmatprep.subr.bf16.mxu0 0
      %1635 = vmatpush1.bf16.xpose.msra.mxu0 0
      %1636 = vmatprep.subr.bf16.mxu0 0
      %1637 = vmatpush1.bf16.xpose.msra.mxu0 0
      %1638 = vmatprep.subr.bf16.mxu0 0
      %1639 = vmatpush1.bf16.xpose.msra.mxu0 0
      %1640 = vmatprep.subr.bf16.mxu0 0
      %1641 = vmatpush1.bf16.xpose.msra.mxu0 0
      %1642 = vmatprep.subr.bf16.mxu0 0
      %1643 = vmatpush1.bf16.xpose.msra.mxu0 0
      %1644 = vmatprep.subr.bf16.mxu0 0
      %1645 = vmatpush1.bf16.xpose.msra.mxu0 0
      %1646 = vmatprep.subr.bf16.mxu0 0
      %1647 = vmatpush1.bf16.xpose.msra.mxu0 0
      %1648 = vmatprep.subr.bf16.mxu0 0
      %1649 = vmatpush1.bf16.xpose.msra.mxu0 0
      %1650 = vmatprep.subr.bf16.mxu0 0
      %1651 = vmatpush1.bf16.xpose.msra.mxu0 0
      %1652 = vmatprep.mubr.bf16.mxu0 0
      %1653 = vmatmul.mubr.bf16.gmra.mrb[0].mxu0 %v1615
      %v1654 = vpop.f32.mrb[0].mxu0
      %v1655 = vadd.f32 0.0, %v1654
      %v1656 = vpop.f32.mrb[0].mxu0
      %v1657 = vpop.f32.mrb[0].mxu0
      %v1658 = vpop.f32.mrb[0].mxu0
      %1659 = vdwg.mxu0
      %v1660 = vsel %vm1382, %v1655, -inf
      %1661 = vmax.xlane.f32.xlu0 %v1660
      %v1662 = vpop.xlane.xlu0 %1661
      %v1663 = vsub.f32 %v1655, %v1662
      %v1664 = vmul.f32 %v1663, 1.442695
      %v1665 = vpow.pop %v1664
      %v1666 = vsel %vm1382, %v1665, 0.0
      %1667 = vadd.xlane.f32.xlu0 %v1666
      %v1668 = vpop.xlane.xlu0 %1667
      %v1669 = vrcp.pop %v1668
      %v1670 = vmul.f32 %v1665, %v1669
      %v1671 = vpack.c.bf16 %v1670, %v1670
      %1673 = vrot.lane.b32.xlu0 %v1613, 96
      %v1674 = vpop.permute.xlu0 %1673
      %v1677 = vsel %vm1382, %v1671, 0
      %1679 = vmatprep.subr.bf16.mxu0 0
      %1680 = vmatpush1.bf16.msra.mxu0 %v1674
      %1681 = vmatprep.subr.bf16.mxu0 0
      %1682 = vmatpush1.bf16.msra.mxu0 0
      %1683 = vmatprep.subr.bf16.mxu0 0
      %1684 = vmatpush1.bf16.msra.mxu0 0
      %1685 = vmatprep.subr.bf16.mxu0 0
      %1686 = vmatpush1.bf16.msra.mxu0 0
      %1687 = vmatprep.subr.bf16.mxu0 0
      %1688 = vmatpush1.bf16.msra.mxu0 0
      %1689 = vmatprep.subr.bf16.mxu0 0
      %1690 = vmatpush1.bf16.msra.mxu0 0
      %1691 = vmatprep.subr.bf16.mxu0 0
      %1692 = vmatpush1.bf16.msra.mxu0 0
      %1693 = vmatprep.subr.bf16.mxu0 0
      %1694 = vmatpush1.bf16.msra.mxu0 0
      %1695 = vmatprep.subr.bf16.mxu0 0
      %1696 = vmatpush1.bf16.msra.mxu0 0
      %1697 = vmatprep.subr.bf16.mxu0 0
      %1698 = vmatpush1.bf16.msra.mxu0 0
      %1699 = vmatprep.subr.bf16.mxu0 0
      %1700 = vmatpush1.bf16.msra.mxu0 0
      %1701 = vmatprep.subr.bf16.mxu0 0
      %1702 = vmatpush1.bf16.msra.mxu0 0
      %1703 = vmatprep.subr.bf16.mxu0 0
      %1704 = vmatpush1.bf16.msra.mxu0 0
      %1705 = vmatprep.subr.bf16.mxu0 0
      %1706 = vmatpush1.bf16.msra.mxu0 0
      %1707 = vmatprep.subr.bf16.mxu0 0
      %1708 = vmatpush1.bf16.msra.mxu0 0
      %1709 = vmatprep.subr.bf16.mxu0 0
      %1710 = vmatpush1.bf16.msra.mxu0 0
      %1711 = vmatprep.mubr.bf16.mxu0 0
      %1712 = vmatmul.mubr.bf16.gmra.mrb[0].mxu0 %v1677
      %v1713 = vpop.f32.mrb[0].mxu0
      %v1714 = vadd.f32 0.0, %v1713
      %v1715 = vpop.f32.mrb[0].mxu0
      %v1716 = vpop.f32.mrb[0].mxu0
      %v1717 = vpop.f32.mrb[0].mxu0
      %1718 = vdwg.mxu0
      %1720 = vrot.lane.b32.xlu0 %v1612, 120
      %v1721 = vpop.permute.xlu0 %1720
      %1722 = vrot.lane.b32.xlu0 %v1613, 120
      %v1723 = vpop.permute.xlu0 %1722
      %v1725 = vsel %vm931, %v1721, 0
      %v1728 = vsel %vm931, %v1723, 0
      %1730 = vmatprep.subr.bf16.mxu0 0
      %1731 = vmatpush1.bf16.xpose.msra.mxu0 %v1728
      %1732 = vmatprep.subr.bf16.mxu0 0
      %1733 = vmatpush1.bf16.xpose.msra.mxu0 0
      %1734 = vmatprep.subr.bf16.mxu0 0
      %1735 = vmatpush1.bf16.xpose.msra.mxu0 0
      %1736 = vmatprep.subr.bf16.mxu0 0
      %1737 = vmatpush1.bf16.xpose.msra.mxu0 0
      %1738 = vmatprep.subr.bf16.mxu0 0
      %1739 = vmatpush1.bf16.xpose.msra.mxu0 0
      %1740 = vmatprep.subr.bf16.mxu0 0
      %1741 = vmatpush1.bf16.xpose.msra.mxu0 0
      %1742 = vmatprep.subr.bf16.mxu0 0
      %1743 = vmatpush1.bf16.xpose.msra.mxu0 0
      %1744 = vmatprep.subr.bf16.mxu0 0
      %1745 = vmatpush1.bf16.xpose.msra.mxu0 0
      %1746 = vmatprep.subr.bf16.mxu0 0
      %1747 = vmatpush1.bf16.xpose.msra.mxu0 0
      %1748 = vmatprep.subr.bf16.mxu0 0
      %1749 = vmatpush1.bf16.xpose.msra.mxu0 0
      %1750 = vmatprep.subr.bf16.mxu0 0
      %1751 = vmatpush1.bf16.xpose.msra.mxu0 0
      %1752 = vmatprep.subr.bf16.mxu0 0
      %1753 = vmatpush1.bf16.xpose.msra.mxu0 0
      %1754 = vmatprep.subr.bf16.mxu0 0
      %1755 = vmatpush1.bf16.xpose.msra.mxu0 0
      %1756 = vmatprep.subr.bf16.mxu0 0
      %1757 = vmatpush1.bf16.xpose.msra.mxu0 0
      %1758 = vmatprep.subr.bf16.mxu0 0
      %1759 = vmatpush1.bf16.xpose.msra.mxu0 0
      %1760 = vmatprep.subr.bf16.mxu0 0
      %1761 = vmatpush1.bf16.xpose.msra.mxu0 0
      %1762 = vmatprep.mubr.bf16.mxu0 0
      %1763 = vmatmul.mubr.bf16.gmra.mrb[0].mxu0 %v1725
      %v1764 = vpop.f32.mrb[0].mxu0
      %v1765 = vadd.f32 0.0, %v1764
      %v1766 = vpop.f32.mrb[0].mxu0
      %v1767 = vpop.f32.mrb[0].mxu0
      %v1768 = vpop.f32.mrb[0].mxu0
      %1769 = vdwg.mxu0
      %v1770 = vsel %vm1382, %v1765, -inf
      %1771 = vmax.xlane.f32.xlu0 %v1770
      %v1772 = vpop.xlane.xlu0 %1771
      %v1773 = vsub.f32 %v1765, %v1772
      %v1774 = vmul.f32 %v1773, 1.442695
      %v1775 = vpow.pop %v1774
      %v1776 = vsel %vm1382, %v1775, 0.0
      %1777 = vadd.xlane.f32.xlu0 %v1776
      %v1778 = vpop.xlane.xlu0 %1777
      %v1779 = vrcp.pop %v1778
      %v1780 = vmul.f32 %v1775, %v1779
      %v1781 = vpack.c.bf16 %v1780, %v1780
      %1782 = vrot.lane.b32.xlu0 %v1613, 88
      %v1783 = vpop.permute.xlu0 %1782
      %v1786 = vsel %vm1382, %v1781, 0
      %1788 = vmatprep.subr.bf16.mxu0 0
      %1789 = vmatpush1.bf16.msra.mxu0 %v1783
      %1790 = vmatprep.subr.bf16.mxu0 0
      %1791 = vmatpush1.bf16.msra.mxu0 0
      %1792 = vmatprep.subr.bf16.mxu0 0
      %1793 = vmatpush1.bf16.msra.mxu0 0
      %1794 = vmatprep.subr.bf16.mxu0 0
      %1795 = vmatpush1.bf16.msra.mxu0 0
      %1796 = vmatprep.subr.bf16.mxu0 0
      %1797 = vmatpush1.bf16.msra.mxu0 0
      %1798 = vmatprep.subr.bf16.mxu0 0
      %1799 = vmatpush1.bf16.msra.mxu0 0
      %1800 = vmatprep.subr.bf16.mxu0 0
      %1801 = vmatpush1.bf16.msra.mxu0 0
      %1802 = vmatprep.subr.bf16.mxu0 0
      %1803 = vmatpush1.bf16.msra.mxu0 0
      %1804 = vmatprep.subr.bf16.mxu0 0
      %1805 = vmatpush1.bf16.msra.mxu0 0
      %1806 = vmatprep.subr.bf16.mxu0 0
      %1807 = vmatpush1.bf16.msra.mxu0 0
      %1808 = vmatprep.subr.bf16.mxu0 0
      %1809 = vmatpush1.bf16.msra.mxu0 0
      %1810 = vmatprep.subr.bf16.mxu0 0
      %1811 = vmatpush1.bf16.msra.mxu0 0
      %1812 = vmatprep.subr.bf16.mxu0 0
      %1813 = vmatpush1.bf16.msra.mxu0 0
      %1814 = vmatprep.subr.bf16.mxu0 0
      %1815 = vmatpush1.bf16.msra.mxu0 0
      %1816 = vmatprep.subr.bf16.mxu0 0
      %1817 = vmatpush1.bf16.msra.mxu0 0
      %1818 = vmatprep.subr.bf16.mxu0 0
      %1819 = vmatpush1.bf16.msra.mxu0 0
      %1820 = vmatprep.mubr.bf16.mxu0 0
      %1821 = vmatmul.mubr.bf16.gmra.mrb[0].mxu0 %v1786
      %v1822 = vpop.f32.mrb[0].mxu0
      %v1823 = vadd.f32 0.0, %v1822
      %v1824 = vpop.f32.mrb[0].mxu0
      %v1825 = vpop.f32.mrb[0].mxu0
      %v1826 = vpop.f32.mrb[0].mxu0
      %1827 = vdwg.mxu0
      %1828 = vrot.lane.b32.xlu0 %v1612, 112
      %v1829 = vpop.permute.xlu0 %1828
      %1830 = vrot.lane.b32.xlu0 %v1613, 112
      %v1831 = vpop.permute.xlu0 %1830
      %v1833 = vsel %vm931, %v1829, 0
      %v1836 = vsel %vm931, %v1831, 0
      %1838 = vmatprep.subr.bf16.mxu0 0
      %1839 = vmatpush1.bf16.xpose.msra.mxu0 %v1836
      %1840 = vmatprep.subr.bf16.mxu0 0
      %1841 = vmatpush1.bf16.xpose.msra.mxu0 0
      %1842 = vmatprep.subr.bf16.mxu0 0
      %1843 = vmatpush1.bf16.xpose.msra.mxu0 0
      %1844 = vmatprep.subr.bf16.mxu0 0
      %1845 = vmatpush1.bf16.xpose.msra.mxu0 0
      %1846 = vmatprep.subr.bf16.mxu0 0
      %1847 = vmatpush1.bf16.xpose.msra.mxu0 0
      %1848 = vmatprep.subr.bf16.mxu0 0
      %1849 = vmatpush1.bf16.xpose.msra.mxu0 0
      %1850 = vmatprep.subr.bf16.mxu0 0
      %1851 = vmatpush1.bf16.xpose.msra.mxu0 0
      %1852 = vmatprep.subr.bf16.mxu0 0
      %1853 = vmatpush1.bf16.xpose.msra.mxu0 0
      %1854 = vmatprep.subr.bf16.mxu0 0
      %1855 = vmatpush1.bf16.xpose.msra.mxu0 0
      %1856 = vmatprep.subr.bf16.mxu0 0
      %1857 = vmatpush1.bf16.xpose.msra.mxu0 0
      %1858 = vmatprep.subr.bf16.mxu0 0
      %1859 = vmatpush1.bf16.xpose.msra.mxu0 0
      %1860 = vmatprep.subr.bf16.mxu0 0
      %1861 = vmatpush1.bf16.xpose.msra.mxu0 0
      %1862 = vmatprep.subr.bf16.mxu0 0
      %1863 = vmatpush1.bf16.xpose.msra.mxu0 0
      %1864 = vmatprep.subr.bf16.mxu0 0
      %1865 = vmatpush1.bf16.xpose.msra.mxu0 0
      %1866 = vmatprep.subr.bf16.mxu0 0
      %1867 = vmatpush1.bf16.xpose.msra.mxu0 0
      %1868 = vmatprep.subr.bf16.mxu0 0
      %1869 = vmatpush1.bf16.xpose.msra.mxu0 0
      %1870 = vmatprep.mubr.bf16.mxu0 0
      %1871 = vmatmul.mubr.bf16.gmra.mrb[0].mxu0 %v1833
      %v1872 = vpop.f32.mrb[0].mxu0
      %v1873 = vadd.f32 0.0, %v1872
      %v1874 = vpop.f32.mrb[0].mxu0
      %v1875 = vpop.f32.mrb[0].mxu0
      %v1876 = vpop.f32.mrb[0].mxu0
      %1877 = vdwg.mxu0
      %v1878 = vsel %vm1382, %v1873, -inf
      %1879 = vmax.xlane.f32.xlu0 %v1878
      %v1880 = vpop.xlane.xlu0 %1879
      %v1881 = vsub.f32 %v1873, %v1880
      %v1882 = vmul.f32 %v1881, 1.442695
      %v1883 = vpow.pop %v1882
      %v1884 = vsel %vm1382, %v1883, 0.0
      %1885 = vadd.xlane.f32.xlu0 %v1884
      %v1886 = vpop.xlane.xlu0 %1885
      %v1887 = vrcp.pop %v1886
      %v1888 = vmul.f32 %v1883, %v1887
      %v1889 = vpack.c.bf16 %v1888, %v1888
      %1890 = vrot.lane.b32.xlu0 %v1613, 80
      %v1891 = vpop.permute.xlu0 %1890
      %v1894 = vsel %vm1382, %v1889, 0
      %1896 = vmatprep.subr.bf16.mxu0 0
      %1897 = vmatpush1.bf16.msra.mxu0 %v1891
      %1898 = vmatprep.subr.bf16.mxu0 0
      %1899 = vmatpush1.bf16.msra.mxu0 0
      %1900 = vmatprep.subr.bf16.mxu0 0
      %1901 = vmatpush1.bf16.msra.mxu0 0
      %1902 = vmatprep.subr.bf16.mxu0 0
      %1903 = vmatpush1.bf16.msra.mxu0 0
      %1904 = vmatprep.subr.bf16.mxu0 0
      %1905 = vmatpush1.bf16.msra.mxu0 0
      %1906 = vmatprep.subr.bf16.mxu0 0
      %1907 = vmatpush1.bf16.msra.mxu0 0
      %1908 = vmatprep.subr.bf16.mxu0 0
      %1909 = vmatpush1.bf16.msra.mxu0 0
      %1910 = vmatprep.subr.bf16.mxu0 0
      %1911 = vmatpush1.bf16.msra.mxu0 0
      %1912 = vmatprep.subr.bf16.mxu0 0
      %1913 = vmatpush1.bf16.msra.mxu0 0
      %1914 = vmatprep.subr.bf16.mxu0 0
      %1915 = vmatpush1.bf16.msra.mxu0 0
      %1916 = vmatprep.subr.bf16.mxu0 0
      %1917 = vmatpush1.bf16.msra.mxu0 0
      %1918 = vmatprep.subr.bf16.mxu0 0
      %1919 = vmatpush1.bf16.msra.mxu0 0
      %1920 = vmatprep.subr.bf16.mxu0 0
      %1921 = vmatpush1.bf16.msra.mxu0 0
      %1922 = vmatprep.subr.bf16.mxu0 0
      %1923 = vmatpush1.bf16.msra.mxu0 0
      %1924 = vmatprep.subr.bf16.mxu0 0
      %1925 = vmatpush1.bf16.msra.mxu0 0
      %1926 = vmatprep.subr.bf16.mxu0 0
      %1927 = vmatpush1.bf16.msra.mxu0 0
      %1928 = vmatprep.mubr.bf16.mxu0 0
      %1929 = vmatmul.mubr.bf16.gmra.mrb[0].mxu0 %v1894
      %v1930 = vpop.f32.mrb[0].mxu0
      %v1931 = vadd.f32 0.0, %v1930
      %v1932 = vpop.f32.mrb[0].mxu0
      %v1933 = vpop.f32.mrb[0].mxu0
      %v1934 = vpop.f32.mrb[0].mxu0
      %1935 = vdwg.mxu0
      %1936 = vrot.lane.b32.xlu0 %v1612, 104
      %v1937 = vpop.permute.xlu0 %1936
      %1938 = vrot.lane.b32.xlu0 %v1613, 104
      %v1939 = vpop.permute.xlu0 %1938
      %v1941 = vsel %vm931, %v1937, 0
      %v1944 = vsel %vm931, %v1939, 0
      %1946 = vmatprep.subr.bf16.mxu0 0
      %1947 = vmatpush1.bf16.xpose.msra.mxu0 %v1944
      %1948 = vmatprep.subr.bf16.mxu0 0
      %1949 = vmatpush1.bf16.xpose.msra.mxu0 0
      %1950 = vmatprep.subr.bf16.mxu0 0
      %1951 = vmatpush1.bf16.xpose.msra.mxu0 0
      %1952 = vmatprep.subr.bf16.mxu0 0
      %1953 = vmatpush1.bf16.xpose.msra.mxu0 0
      %1954 = vmatprep.subr.bf16.mxu0 0
      %1955 = vmatpush1.bf16.xpose.msra.mxu0 0
      %1956 = vmatprep.subr.bf16.mxu0 0
      %1957 = vmatpush1.bf16.xpose.msra.mxu0 0
      %1958 = vmatprep.subr.bf16.mxu0 0
      %1959 = vmatpush1.bf16.xpose.msra.mxu0 0
      %1960 = vmatprep.subr.bf16.mxu0 0
      %1961 = vmatpush1.bf16.xpose.msra.mxu0 0
      %1962 = vmatprep.subr.bf16.mxu0 0
      %1963 = vmatpush1.bf16.xpose.msra.mxu0 0
      %1964 = vmatprep.subr.bf16.mxu0 0
      %1965 = vmatpush1.bf16.xpose.msra.mxu0 0
      %1966 = vmatprep.subr.bf16.mxu0 0
      %1967 = vmatpush1.bf16.xpose.msra.mxu0 0
      %1968 = vmatprep.subr.bf16.mxu0 0
      %1969 = vmatpush1.bf16.xpose.msra.mxu0 0
      %1970 = vmatprep.subr.bf16.mxu0 0
      %1971 = vmatpush1.bf16.xpose.msra.mxu0 0
      %1972 = vmatprep.subr.bf16.mxu0 0
      %1973 = vmatpush1.bf16.xpose.msra.mxu0 0
      %1974 = vmatprep.subr.bf16.mxu0 0
      %1975 = vmatpush1.bf16.xpose.msra.mxu0 0
      %1976 = vmatprep.subr.bf16.mxu0 0
      %1977 = vmatpush1.bf16.xpose.msra.mxu0 0
      %1978 = vmatprep.mubr.bf16.mxu0 0
      %1979 = vmatmul.mubr.bf16.gmra.mrb[0].mxu0 %v1941
      %v1980 = vpop.f32.mrb[0].mxu0
      %v1981 = vadd.f32 0.0, %v1980
      %v1982 = vpop.f32.mrb[0].mxu0
      %v1983 = vpop.f32.mrb[0].mxu0
      %v1984 = vpop.f32.mrb[0].mxu0
      %1985 = vdwg.mxu0
      %v1986 = vsel %vm1382, %v1981, -inf
      %1987 = vmax.xlane.f32.xlu0 %v1986
      %v1988 = vpop.xlane.xlu0 %1987
      %v1989 = vsub.f32 %v1981, %v1988
      %v1990 = vmul.f32 %v1989, 1.442695
      %v1991 = vpow.pop %v1990
      %v1992 = vsel %vm1382, %v1991, 0.0
      %1993 = vadd.xlane.f32.xlu0 %v1992
      %v1994 = vpop.xlane.xlu0 %1993
      %v1995 = vrcp.pop %v1994
      %v1996 = vmul.f32 %v1991, %v1995
      %v1997 = vpack.c.bf16 %v1996, %v1996
      %1998 = vrot.lane.b32.xlu0 %v1613, 72
      %v1999 = vpop.permute.xlu0 %1998
      %v2002 = vsel %vm1382, %v1997, 0
      %2004 = vmatprep.subr.bf16.mxu0 0
      %2005 = vmatpush1.bf16.msra.mxu0 %v1999
      %2006 = vmatprep.subr.bf16.mxu0 0
      %2007 = vmatpush1.bf16.msra.mxu0 0
      %2008 = vmatprep.subr.bf16.mxu0 0
      %2009 = vmatpush1.bf16.msra.mxu0 0
      %2010 = vmatprep.subr.bf16.mxu0 0
      %2011 = vmatpush1.bf16.msra.mxu0 0
      %2012 = vmatprep.subr.bf16.mxu0 0
      %2013 = vmatpush1.bf16.msra.mxu0 0
      %2014 = vmatprep.subr.bf16.mxu0 0
      %2015 = vmatpush1.bf16.msra.mxu0 0
      %2016 = vmatprep.subr.bf16.mxu0 0
      %2017 = vmatpush1.bf16.msra.mxu0 0
      %2018 = vmatprep.subr.bf16.mxu0 0
      %2019 = vmatpush1.bf16.msra.mxu0 0
      %2020 = vmatprep.subr.bf16.mxu0 0
      %2021 = vmatpush1.bf16.msra.mxu0 0
      %2022 = vmatprep.subr.bf16.mxu0 0
      %2023 = vmatpush1.bf16.msra.mxu0 0
      %2024 = vmatprep.subr.bf16.mxu0 0
      %2025 = vmatpush1.bf16.msra.mxu0 0
      %2026 = vmatprep.subr.bf16.mxu0 0
      %2027 = vmatpush1.bf16.msra.mxu0 0
      %2028 = vmatprep.subr.bf16.mxu0 0
      %2029 = vmatpush1.bf16.msra.mxu0 0
      %2030 = vmatprep.subr.bf16.mxu0 0
      %2031 = vmatpush1.bf16.msra.mxu0 0
      %2032 = vmatprep.subr.bf16.mxu0 0
      %2033 = vmatpush1.bf16.msra.mxu0 0
      %2034 = vmatprep.subr.bf16.mxu0 0
      %2035 = vmatpush1.bf16.msra.mxu0 0
      %2036 = vmatprep.mubr.bf16.mxu0 0
      %2037 = vmatmul.mubr.bf16.gmra.mrb[0].mxu0 %v2002
      %v2038 = vpop.f32.mrb[0].mxu0
      %v2039 = vadd.f32 0.0, %v2038
      %v2040 = vpop.f32.mrb[0].mxu0
      %v2041 = vpop.f32.mrb[0].mxu0
      %v2042 = vpop.f32.mrb[0].mxu0
      %2043 = vdwg.mxu0
      %2045 = vrot.lane.b32.xlu0 %v1823, 8
      %v2046 = vpop.permute.xlu0 %2045
      %2049 = vrot.lane.b32.xlu0 %v1931, 16
      %v2050 = vpop.permute.xlu0 %2049
      %2053 = vrot.lane.b32.xlu0 %v2039, 24
      %v2054 = vpop.permute.xlu0 %2053
      %v2056 = vsel %vm931, %v1714, %v2046
      %v2057 = vsel %vm1382, %v2056, %v2050
      %v2058 = vsel %vm1384, %v2057, %v2054
      %v2059 = vpack.c.bf16 %v2058, %v2058
      %v2060 = vld [vmem:[%s11] sm:$0xf]
      %v2061 = vld [vmem:[%s11 + $0x4] sm:$0xf]
      %v2062 = vld [vmem:[%s11 + $0x8] sm:$0xf]
      %v2063 = vld [vmem:[%s11 + $0xc] sm:$0xf]
      %v2064 = vld [vmem:[%s12] sm:$0x1]
      %v2066 = vlaneseq
      %v2067 = vshrl.u32 %v2066, 7
      %v2068 = vsub.s32 0, %v2067
      %v2069 = vrot.slane %v2064, %v2068
      %v2075 = vunpack.c.l.b16 %v2060
      %v2076 = vunpack.c.l.b16 %v2061
      %v2077 = vunpack.c.l.b16 %v2062
      %v2078 = vunpack.c.l.b16 %v2063
      %v2079 = vpack.c.b16 %v2076, %v2075
      %v2080 = vpack.c.b16 %v2078, %v2077
      %v2084 = vsel %vm883, %v2059, 0
      %2086 = vmatprep.subr.bf16.mxu0 0
      %2087 = vmatpush1.bf16.msra.mxu0 %v2079
      %2088 = vmatprep.subr.bf16.mxu0 0
      %2089 = vmatpush1.bf16.msra.mxu0 %v2080
      %2090 = vmatprep.subr.bf16.mxu0 0
      %2091 = vmatpush1.bf16.msra.mxu0 0
      %2092 = vmatprep.subr.bf16.mxu0 0
      %2093 = vmatpush1.bf16.msra.mxu0 0
      %2094 = vmatprep.subr.bf16.mxu0 0
      %2095 = vmatpush1.bf16.msra.mxu0 0
      %2096 = vmatprep.subr.bf16.mxu0 0
      %2097 = vmatpush1.bf16.msra.mxu0 0
      %2098 = vmatprep.subr.bf16.mxu0 0
      %2099 = vmatpush1.bf16.msra.mxu0 0
      %2100 = vmatprep.subr.bf16.mxu0 0
      %2101 = vmatpush1.bf16.msra.mxu0 0
      %2102 = vmatprep.subr.bf16.mxu0 0
      %2103 = vmatpush1.bf16.msra.mxu0 0
      %2104 = vmatprep.subr.bf16.mxu0 0
      %2105 = vmatpush1.bf16.msra.mxu0 0
      %2106 = vmatprep.subr.bf16.mxu0 0
      %2107 = vmatpush1.bf16.msra.mxu0 0
      %2108 = vmatprep.subr.bf16.mxu0 0
      %2109 = vmatpush1.bf16.msra.mxu0 0
      %2110 = vmatprep.subr.bf16.mxu0 0
      %2111 = vmatpush1.bf16.msra.mxu0 0
      %2112 = vmatprep.subr.bf16.mxu0 0
      %2113 = vmatpush1.bf16.msra.mxu0 0
      %2114 = vmatprep.subr.bf16.mxu0 0
      %2115 = vmatpush1.bf16.msra.mxu0 0
      %2116 = vmatprep.subr.bf16.mxu0 0
      %2117 = vmatpush1.bf16.msra.mxu0 0
      %2118 = vmatprep.mubr.bf16.mxu0 0
      %2119 = vmatmul.mubr.bf16.gmra.mrb[0].mxu0 %v2084
      %v2120 = vpop.f32.mrb[0].mxu0
      %v2121 = vadd.f32 %v2069, %v2120
      %v2122 = vpop.f32.mrb[0].mxu0
      %v2123 = vpop.f32.mrb[0].mxu0
      %v2124 = vpop.f32.mrb[0].mxu0
      %2125 = vdwg.mxu0
      %v2126 = vld [vmem:[%s13] sm:$0xf]
      %v2127 = vld [vmem:[%s13 + $0x4] sm:$0xf]
      %v2128 = vld [vmem:[%s13 + $0x8] sm:$0xf]
      %v2129 = vld [vmem:[%s13 + $0xc] sm:$0xf]
      %v2130 = vld [vmem:[%s14] sm:$0x1]
      %v2132 = vlaneseq
      %v2133 = vshrl.u32 %v2132, 7
      %v2134 = vsub.s32 0, %v2133
      %v2135 = vrot.slane %v2130, %v2134
      %v2141 = vunpack.c.l.b16 %v2126
      %v2142 = vunpack.c.l.b16 %v2127
      %v2143 = vunpack.c.l.b16 %v2128
      %v2144 = vunpack.c.l.b16 %v2129
      %v2145 = vpack.c.b16 %v2142, %v2141
      %v2146 = vpack.c.b16 %v2144, %v2143
      %2149 = vmatprep.subr.bf16.mxu0 0
      %2150 = vmatpush1.bf16.msra.mxu0 %v2145
      %2151 = vmatprep.subr.bf16.mxu0 0
      %2152 = vmatpush1.bf16.msra.mxu0 %v2146
      %2153 = vmatprep.subr.bf16.mxu0 0
      %2154 = vmatpush1.bf16.msra.mxu0 0
      %2155 = vmatprep.subr.bf16.mxu0 0
      %2156 = vmatpush1.bf16.msra.mxu0 0
      %2157 = vmatprep.subr.bf16.mxu0 0
      %2158 = vmatpush1.bf16.msra.mxu0 0
      %2159 = vmatprep.subr.bf16.mxu0 0
      %2160 = vmatpush1.bf16.msra.mxu0 0
      %2161 = vmatprep.subr.bf16.mxu0 0
      %2162 = vmatpush1.bf16.msra.mxu0 0
      %2163 = vmatprep.subr.bf16.mxu0 0
      %2164 = vmatpush1.bf16.msra.mxu0 0
      %2165 = vmatprep.subr.bf16.mxu0 0
      %2166 = vmatpush1.bf16.msra.mxu0 0
      %2167 = vmatprep.subr.bf16.mxu0 0
      %2168 = vmatpush1.bf16.msra.mxu0 0
      %2169 = vmatprep.subr.bf16.mxu0 0
      %2170 = vmatpush1.bf16.msra.mxu0 0
      %2171 = vmatprep.subr.bf16.mxu0 0
      %2172 = vmatpush1.bf16.msra.mxu0 0
      %2173 = vmatprep.subr.bf16.mxu0 0
      %2174 = vmatpush1.bf16.msra.mxu0 0
      %2175 = vmatprep.subr.bf16.mxu0 0
      %2176 = vmatpush1.bf16.msra.mxu0 0
      %2177 = vmatprep.subr.bf16.mxu0 0
      %2178 = vmatpush1.bf16.msra.mxu0 0
      %2179 = vmatprep.subr.bf16.mxu0 0
      %2180 = vmatpush1.bf16.msra.mxu0 0
      %2181 = vmatprep.mubr.bf16.mxu0 0
      %2182 = vmatmul.mubr.bf16.gmra.mrb[0].mxu0 %v1503
      %v2183 = vpop.f32.mrb[0].mxu0
      %v2184 = vadd.f32 %v2135, %v2183
      %v2185 = vpop.f32.mrb[0].mxu0
      %v2186 = vpop.f32.mrb[0].mxu0
      %v2187 = vpop.f32.mrb[0].mxu0
      %2188 = vdwg.mxu0
      %v2189 = vld [vmem:[%s15] sm:$0xf]
      %v2190 = vld [vmem:[%s15 + $0x4] sm:$0xf]
      %v2191 = vld [vmem:[%s15 + $0x8] sm:$0xf]
      %v2192 = vld [vmem:[%s15 + $0xc] sm:$0xf]
      %v2193 = vld [vmem:[%s15 + $0x10] sm:$0xf]
      %v2194 = vld [vmem:[%s15 + $0x14] sm:$0xf]
      %v2195 = vld [vmem:[%s15 + $0x18] sm:$0xf]
      %v2196 = vld [vmem:[%s15 + $0x1c] sm:$0xf]
      %v2197 = vld [vmem:[%s16] sm:$0x1]
      %v2199 = vlaneseq
      %v2200 = vshrl.u32 %v2199, 7
      %v2201 = vsub.s32 0, %v2200
      %v2202 = vrot.slane %v2197, %v2201
      %v2212 = vunpack.c.l.b16 %v2189
      %v2213 = vunpack.c.l.b16 %v2190
      %v2214 = vunpack.c.l.b16 %v2191
      %v2215 = vunpack.c.l.b16 %v2192
      %v2216 = vunpack.c.l.b16 %v2193
      %v2217 = vunpack.c.l.b16 %v2194
      %v2218 = vunpack.c.l.b16 %v2195
      %v2219 = vunpack.c.l.b16 %v2196
      %v2220 = vpack.c.b16 %v2213, %v2212
      %v2221 = vpack.c.b16 %v2215, %v2214
      %v2222 = vpack.c.b16 %v2217, %v2216
      %v2223 = vpack.c.b16 %v2219, %v2218
      %vm2228 = vcmask 523264
      %v2230 = vsel %vm2228, %v857, 0
      %2232 = vmatprep.subr.bf16.mxu0 0
      %2233 = vmatpush1.bf16.msra.mxu0 %v2220
      %2234 = vmatprep.subr.bf16.mxu0 0
      %2235 = vmatpush1.bf16.msra.mxu0 %v2221
      %2236 = vmatprep.subr.bf16.mxu0 0
      %2237 = vmatpush1.bf16.msra.mxu0 %v2222
      %2238 = vmatprep.subr.bf16.mxu0 0
      %2239 = vmatpush1.bf16.msra.mxu0 %v2223
      %2240 = vmatprep.subr.bf16.mxu0 0
      %2241 = vmatpush1.bf16.msra.mxu0 0
      %2242 = vmatprep.subr.bf16.mxu0 0
      %2243 = vmatpush1.bf16.msra.mxu0 0
      %2244 = vmatprep.subr.bf16.mxu0 0
      %2245 = vmatpush1.bf16.msra.mxu0 0
      %2246 = vmatprep.subr.bf16.mxu0 0
      %2247 = vmatpush1.bf16.msra.mxu0 0
      %2248 = vmatprep.subr.bf16.mxu0 0
      %2249 = vmatpush1.bf16.msra.mxu0 0
      %2250 = vmatprep.subr.bf16.mxu0 0
      %2251 = vmatpush1.bf16.msra.mxu0 0
      %2252 = vmatprep.subr.bf16.mxu0 0
      %2253 = vmatpush1.bf16.msra.mxu0 0
      %2254 = vmatprep.subr.bf16.mxu0 0
      %2255 = vmatpush1.bf16.msra.mxu0 0
      %2256 = vmatprep.subr.bf16.mxu0 0
      %2257 = vmatpush1.bf16.msra.mxu0 0
      %2258 = vmatprep.subr.bf16.mxu0 0
      %2259 = vmatpush1.bf16.msra.mxu0 0
      %2260 = vmatprep.subr.bf16.mxu0 0
      %2261 = vmatpush1.bf16.msra.mxu0 0
      %2262 = vmatprep.subr.bf16.mxu0 0
      %2263 = vmatpush1.bf16.msra.mxu0 0
      %2264 = vmatprep.mubr.bf16.mxu0 0
      %2265 = vmatmul.mubr.bf16.gmra.mrb[0].mxu0 %v2230
      %v2266 = vpop.f32.mrb[0].mxu0
      %v2267 = vadd.f32 %v2202, %v2266
      %v2268 = vpop.f32.mrb[0].mxu0
      %v2269 = vpop.f32.mrb[0].mxu0
      %v2270 = vpop.f32.mrb[0].mxu0
      %2271 = vdwg.mxu0
      %v2272 = vpack.c.bf16 %v2184, %v2184
      %v2273 = vpack.c.bf16 %v2267, %v2267
      %v2275 = vsel %vm1382, %v2272, 0
      %v2278 = vsel %vm1382, %v2273, 0
      %2280 = vmatprep.subr.bf16.mxu0 0
      %2281 = vmatpush1.bf16.xpose.msra.mxu0 %v2278
      %2282 = vmatprep.subr.bf16.mxu0 0
      %2283 = vmatpush1.bf16.xpose.msra.mxu0 0
      %2284 = vmatprep.subr.bf16.mxu0 0
      %2285 = vmatpush1.bf16.xpose.msra.mxu0 0
      %2286 = vmatprep.subr.bf16.mxu0 0
      %2287 = vmatpush1.bf16.xpose.msra.mxu0 0
      %2288 = vmatprep.subr.bf16.mxu0 0
      %2289 = vmatpush1.bf16.xpose.msra.mxu0 0
      %2290 = vmatprep.subr.bf16.mxu0 0
      %2291 = vmatpush1.bf16.xpose.msra.mxu0 0
      %2292 = vmatprep.subr.bf16.mxu0 0
      %2293 = vmatpush1.bf16.xpose.msra.mxu0 0
      %2294 = vmatprep.subr.bf16.mxu0 0
      %2295 = vmatpush1.bf16.xpose.msra.mxu0 0
      %2296 = vmatprep.subr.bf16.mxu0 0
      %2297 = vmatpush1.bf16.xpose.msra.mxu0 0
      %2298 = vmatprep.subr.bf16.mxu0 0
      %2299 = vmatpush1.bf16.xpose.msra.mxu0 0
      %2300 = vmatprep.subr.bf16.mxu0 0
      %2301 = vmatpush1.bf16.xpose.msra.mxu0 0
      %2302 = vmatprep.subr.bf16.mxu0 0
      %2303 = vmatpush1.bf16.xpose.msra.mxu0 0
      %2304 = vmatprep.subr.bf16.mxu0 0
      %2305 = vmatpush1.bf16.xpose.msra.mxu0 0
      %2306 = vmatprep.subr.bf16.mxu0 0
      %2307 = vmatpush1.bf16.xpose.msra.mxu0 0
      %2308 = vmatprep.subr.bf16.mxu0 0
      %2309 = vmatpush1.bf16.xpose.msra.mxu0 0
      %2310 = vmatprep.subr.bf16.mxu0 0
      %2311 = vmatpush1.bf16.xpose.msra.mxu0 0
      %2312 = vmatprep.mubr.bf16.mxu0 0
      %2313 = vmatmul.mubr.bf16.gmra.mrb[0].mxu0 %v2275
      %v2314 = vpop.f32.mrb[0].mxu0
      %v2315 = vadd.f32 0.0, %v2314
      %v2316 = vpop.f32.mrb[0].mxu0
      %v2317 = vpop.f32.mrb[0].mxu0
      %v2318 = vpop.f32.mrb[0].mxu0
      %2319 = vdwg.mxu0
      %v2320 = vsel %vm931, %v2315, -inf
      %2321 = vmax.xlane.f32.xlu0 %v2320
      %v2322 = vpop.xlane.xlu0 %2321
      %v2323 = vsub.f32 %v2315, %v2322
      %v2324 = vmul.f32 %v2323, 1.442695
      %v2325 = vpow.pop %v2324
      %v2326 = vsel %vm931, %v2325, 0.0
      %2327 = vadd.xlane.f32.xlu0 %v2326
      %v2328 = vpop.xlane.xlu0 %2327
      %v2329 = vrcp.pop %v2328
      %v2330 = vmul.f32 %v2325, %v2329
      %v2331 = vpack.c.bf16 %v2330, %v2330
      %2333 = vrot.lane.b32.xlu0 %v2273, 64
      %v2334 = vpop.permute.xlu0 %2333
      %v2336 = vsel %vm931, %v2331, 0
      %v2339 = vsel %vm995, %v2334, 0
      %2341 = vmatprep.subr.bf16.mxu0 0
      %2342 = vmatpush1.bf16.msra.mxu0 %v2339
      %2343 = vmatprep.subr.bf16.mxu0 0
      %2344 = vmatpush1.bf16.msra.mxu0 0
      %2345 = vmatprep.subr.bf16.mxu0 0
      %2346 = vmatpush1.bf16.msra.mxu0 0
      %2347 = vmatprep.subr.bf16.mxu0 0
      %2348 = vmatpush1.bf16.msra.mxu0 0
      %2349 = vmatprep.subr.bf16.mxu0 0
      %2350 = vmatpush1.bf16.msra.mxu0 0
      %2351 = vmatprep.subr.bf16.mxu0 0
      %2352 = vmatpush1.bf16.msra.mxu0 0
      %2353 = vmatprep.subr.bf16.mxu0 0
      %2354 = vmatpush1.bf16.msra.mxu0 0
      %2355 = vmatprep.subr.bf16.mxu0 0
      %2356 = vmatpush1.bf16.msra.mxu0 0
      %2357 = vmatprep.subr.bf16.mxu0 0
      %2358 = vmatpush1.bf16.msra.mxu0 0
      %2359 = vmatprep.subr.bf16.mxu0 0
      %2360 = vmatpush1.bf16.msra.mxu0 0
      %2361 = vmatprep.subr.bf16.mxu0 0
      %2362 = vmatpush1.bf16.msra.mxu0 0
      %2363 = vmatprep.subr.bf16.mxu0 0
      %2364 = vmatpush1.bf16.msra.mxu0 0
      %2365 = vmatprep.subr.bf16.mxu0 0
      %2366 = vmatpush1.bf16.msra.mxu0 0
      %2367 = vmatprep.subr.bf16.mxu0 0
      %2368 = vmatpush1.bf16.msra.mxu0 0
      %2369 = vmatprep.subr.bf16.mxu0 0
      %2370 = vmatpush1.bf16.msra.mxu0 0
      %2371 = vmatprep.subr.bf16.mxu0 0
      %2372 = vmatpush1.bf16.msra.mxu0 0
      %2373 = vmatprep.mubr.bf16.mxu0 0
      %2374 = vmatmul.mubr.bf16.gmra.mrb[0].mxu0 %v2336
      %v2375 = vpop.f32.mrb[0].mxu0
      %v2376 = vadd.f32 0.0, %v2375
      %v2377 = vpop.f32.mrb[0].mxu0
      %v2378 = vpop.f32.mrb[0].mxu0
      %v2379 = vpop.f32.mrb[0].mxu0
      %2380 = vdwg.mxu0
      %2382 = vrot.lane.b32.xlu0 %v2272, 112
      %v2383 = vpop.permute.xlu0 %2382
      %2384 = vrot.lane.b32.xlu0 %v2273, 112
      %v2385 = vpop.permute.xlu0 %2384
      %v2387 = vsel %vm1382, %v2383, 0
      %v2390 = vsel %vm1382, %v2385, 0
      %2392 = vmatprep.subr.bf16.mxu0 0
      %2393 = vmatpush1.bf16.xpose.msra.mxu0 %v2390
      %2394 = vmatprep.subr.bf16.mxu0 0
      %2395 = vmatpush1.bf16.xpose.msra.mxu0 0
      %2396 = vmatprep.subr.bf16.mxu0 0
      %2397 = vmatpush1.bf16.xpose.msra.mxu0 0
      %2398 = vmatprep.subr.bf16.mxu0 0
      %2399 = vmatpush1.bf16.xpose.msra.mxu0 0
      %2400 = vmatprep.subr.bf16.mxu0 0
      %2401 = vmatpush1.bf16.xpose.msra.mxu0 0
      %2402 = vmatprep.subr.bf16.mxu0 0
      %2403 = vmatpush1.bf16.xpose.msra.mxu0 0
      %2404 = vmatprep.subr.bf16.mxu0 0
      %2405 = vmatpush1.bf16.xpose.msra.mxu0 0
      %2406 = vmatprep.subr.bf16.mxu0 0
      %2407 = vmatpush1.bf16.xpose.msra.mxu0 0
      %2408 = vmatprep.subr.bf16.mxu0 0
      %2409 = vmatpush1.bf16.xpose.msra.mxu0 0
      %2410 = vmatprep.subr.bf16.mxu0 0
      %2411 = vmatpush1.bf16.xpose.msra.mxu0 0
      %2412 = vmatprep.subr.bf16.mxu0 0
      %2413 = vmatpush1.bf16.xpose.msra.mxu0 0
      %2414 = vmatprep.subr.bf16.mxu0 0
      %2415 = vmatpush1.bf16.xpose.msra.mxu0 0
      %2416 = vmatprep.subr.bf16.mxu0 0
      %2417 = vmatpush1.bf16.xpose.msra.mxu0 0
      %2418 = vmatprep.subr.bf16.mxu0 0
      %2419 = vmatpush1.bf16.xpose.msra.mxu0 0
      %2420 = vmatprep.subr.bf16.mxu0 0
      %2421 = vmatpush1.bf16.xpose.msra.mxu0 0
      %2422 = vmatprep.subr.bf16.mxu0 0
      %2423 = vmatpush1.bf16.xpose.msra.mxu0 0
      %2424 = vmatprep.mubr.bf16.mxu0 0
      %2425 = vmatmul.mubr.bf16.gmra.mrb[0].mxu0 %v2387
      %v2426 = vpop.f32.mrb[0].mxu0
      %v2427 = vadd.f32 0.0, %v2426
      %v2428 = vpop.f32.mrb[0].mxu0
      %v2429 = vpop.f32.mrb[0].mxu0
      %v2430 = vpop.f32.mrb[0].mxu0
      %2431 = vdwg.mxu0
      %v2432 = vsel %vm931, %v2427, -inf
      %2433 = vmax.xlane.f32.xlu0 %v2432
      %v2434 = vpop.xlane.xlu0 %2433
      %v2435 = vsub.f32 %v2427, %v2434
      %v2436 = vmul.f32 %v2435, 1.442695
      %v2437 = vpow.pop %v2436
      %v2438 = vsel %vm931, %v2437, 0.0
      %2439 = vadd.xlane.f32.xlu0 %v2438
      %v2440 = vpop.xlane.xlu0 %2439
      %v2441 = vrcp.pop %v2440
      %v2442 = vmul.f32 %v2437, %v2441
      %v2443 = vpack.c.bf16 %v2442, %v2442
      %2444 = vrot.lane.b32.xlu0 %v2273, 48
      %v2445 = vpop.permute.xlu0 %2444
      %v2447 = vsel %vm931, %v2443, 0
      %v2450 = vsel %vm995, %v2445, 0
      %2452 = vmatprep.subr.bf16.mxu0 0
      %2453 = vmatpush1.bf16.msra.mxu0 %v2450
      %2454 = vmatprep.subr.bf16.mxu0 0
      %2455 = vmatpush1.bf16.msra.mxu0 0
      %2456 = vmatprep.subr.bf16.mxu0 0
      %2457 = vmatpush1.bf16.msra.mxu0 0
      %2458 = vmatprep.subr.bf16.mxu0 0
      %2459 = vmatpush1.bf16.msra.mxu0 0
      %2460 = vmatprep.subr.bf16.mxu0 0
      %2461 = vmatpush1.bf16.msra.mxu0 0
      %2462 = vmatprep.subr.bf16.mxu0 0
      %2463 = vmatpush1.bf16.msra.mxu0 0
      %2464 = vmatprep.subr.bf16.mxu0 0
      %2465 = vmatpush1.bf16.msra.mxu0 0
      %2466 = vmatprep.subr.bf16.mxu0 0
      %2467 = vmatpush1.bf16.msra.mxu0 0
      %2468 = vmatprep.subr.bf16.mxu0 0
      %2469 = vmatpush1.bf16.msra.mxu0 0
      %2470 = vmatprep.subr.bf16.mxu0 0
      %2471 = vmatpush1.bf16.msra.mxu0 0
      %2472 = vmatprep.subr.bf16.mxu0 0
      %2473 = vmatpush1.bf16.msra.mxu0 0
      %2474 = vmatprep.subr.bf16.mxu0 0
      %2475 = vmatpush1.bf16.msra.mxu0 0
      %2476 = vmatprep.subr.bf16.mxu0 0
      %2477 = vmatpush1.bf16.msra.mxu0 0
      %2478 = vmatprep.subr.bf16.mxu0 0
      %2479 = vmatpush1.bf16.msra.mxu0 0
      %2480 = vmatprep.subr.bf16.mxu0 0
      %2481 = vmatpush1.bf16.msra.mxu0 0
      %2482 = vmatprep.subr.bf16.mxu0 0
      %2483 = vmatpush1.bf16.msra.mxu0 0
      %2484 = vmatprep.mubr.bf16.mxu0 0
      %2485 = vmatmul.mubr.bf16.gmra.mrb[0].mxu0 %v2447
      %v2486 = vpop.f32.mrb[0].mxu0
      %v2487 = vadd.f32 0.0, %v2486
      %v2488 = vpop.f32.mrb[0].mxu0
      %v2489 = vpop.f32.mrb[0].mxu0
      %v2490 = vpop.f32.mrb[0].mxu0
      %2491 = vdwg.mxu0
      %2492 = vrot.lane.b32.xlu0 %v2272, 96
      %v2493 = vpop.permute.xlu0 %2492
      %2494 = vrot.lane.b32.xlu0 %v2273, 96
      %v2495 = vpop.permute.xlu0 %2494
      %v2497 = vsel %vm1382, %v2493, 0
      %v2500 = vsel %vm1382, %v2495, 0
      %2502 = vmatprep.subr.bf16.mxu0 0
      %2503 = vmatpush1.bf16.xpose.msra.mxu0 %v2500
      %2504 = vmatprep.subr.bf16.mxu0 0
      %2505 = vmatpush1.bf16.xpose.msra.mxu0 0
      %2506 = vmatprep.subr.bf16.mxu0 0
      %2507 = vmatpush1.bf16.xpose.msra.mxu0 0
      %2508 = vmatprep.subr.bf16.mxu0 0
      %2509 = vmatpush1.bf16.xpose.msra.mxu0 0
      %2510 = vmatprep.subr.bf16.mxu0 0
      %2511 = vmatpush1.bf16.xpose.msra.mxu0 0
      %2512 = vmatprep.subr.bf16.mxu0 0
      %2513 = vmatpush1.bf16.xpose.msra.mxu0 0
      %2514 = vmatprep.subr.bf16.mxu0 0
      %2515 = vmatpush1.bf16.xpose.msra.mxu0 0
      %2516 = vmatprep.subr.bf16.mxu0 0
      %2517 = vmatpush1.bf16.xpose.msra.mxu0 0
      %2518 = vmatprep.subr.bf16.mxu0 0
      %2519 = vmatpush1.bf16.xpose.msra.mxu0 0
      %2520 = vmatprep.subr.bf16.mxu0 0
      %2521 = vmatpush1.bf16.xpose.msra.mxu0 0
      %2522 = vmatprep.subr.bf16.mxu0 0
      %2523 = vmatpush1.bf16.xpose.msra.mxu0 0
      %2524 = vmatprep.subr.bf16.mxu0 0
      %2525 = vmatpush1.bf16.xpose.msra.mxu0 0
      %2526 = vmatprep.subr.bf16.mxu0 0
      %2527 = vmatpush1.bf16.xpose.msra.mxu0 0
      %2528 = vmatprep.subr.bf16.mxu0 0
      %2529 = vmatpush1.bf16.xpose.msra.mxu0 0
      %2530 = vmatprep.subr.bf16.mxu0 0
      %2531 = vmatpush1.bf16.xpose.msra.mxu0 0
      %2532 = vmatprep.subr.bf16.mxu0 0
      %2533 = vmatpush1.bf16.xpose.msra.mxu0 0
      %2534 = vmatprep.mubr.bf16.mxu0 0
      %2535 = vmatmul.mubr.bf16.gmra.mrb[0].mxu0 %v2497
      %v2536 = vpop.f32.mrb[0].mxu0
      %v2537 = vadd.f32 0.0, %v2536
      %v2538 = vpop.f32.mrb[0].mxu0
      %v2539 = vpop.f32.mrb[0].mxu0
      %v2540 = vpop.f32.mrb[0].mxu0
      %2541 = vdwg.mxu0
      %v2542 = vsel %vm931, %v2537, -inf
      %2543 = vmax.xlane.f32.xlu0 %v2542
      %v2544 = vpop.xlane.xlu0 %2543
      %v2545 = vsub.f32 %v2537, %v2544
      %v2546 = vmul.f32 %v2545, 1.442695
      %v2547 = vpow.pop %v2546
      %v2548 = vsel %vm931, %v2547, 0.0
      %2549 = vadd.xlane.f32.xlu0 %v2548
      %v2550 = vpop.xlane.xlu0 %2549
      %v2551 = vrcp.pop %v2550
      %v2552 = vmul.f32 %v2547, %v2551
      %v2553 = vpack.c.bf16 %v2552, %v2552
      %2554 = vrot.lane.b32.xlu0 %v2273, 32
      %v2555 = vpop.permute.xlu0 %2554
      %v2557 = vsel %vm931, %v2553, 0
      %v2560 = vsel %vm995, %v2555, 0
      %2562 = vmatprep.subr.bf16.mxu0 0
      %2563 = vmatpush1.bf16.msra.mxu0 %v2560
      %2564 = vmatprep.subr.bf16.mxu0 0
      %2565 = vmatpush1.bf16.msra.mxu0 0
      %2566 = vmatprep.subr.bf16.mxu0 0
      %2567 = vmatpush1.bf16.msra.mxu0 0
      %2568 = vmatprep.subr.bf16.mxu0 0
      %2569 = vmatpush1.bf16.msra.mxu0 0
      %2570 = vmatprep.subr.bf16.mxu0 0
      %2571 = vmatpush1.bf16.msra.mxu0 0
      %2572 = vmatprep.subr.bf16.mxu0 0
      %2573 = vmatpush1.bf16.msra.mxu0 0
      %2574 = vmatprep.subr.bf16.mxu0 0
      %2575 = vmatpush1.bf16.msra.mxu0 0
      %2576 = vmatprep.subr.bf16.mxu0 0
      %2577 = vmatpush1.bf16.msra.mxu0 0
      %2578 = vmatprep.subr.bf16.mxu0 0
      %2579 = vmatpush1.bf16.msra.mxu0 0
      %2580 = vmatprep.subr.bf16.mxu0 0
      %2581 = vmatpush1.bf16.msra.mxu0 0
      %2582 = vmatprep.subr.bf16.mxu0 0
      %2583 = vmatpush1.bf16.msra.mxu0 0
      %2584 = vmatprep.subr.bf16.mxu0 0
      %2585 = vmatpush1.bf16.msra.mxu0 0
      %2586 = vmatprep.subr.bf16.mxu0 0
      %2587 = vmatpush1.bf16.msra.mxu0 0
      %2588 = vmatprep.subr.bf16.mxu0 0
      %2589 = vmatpush1.bf16.msra.mxu0 0
      %2590 = vmatprep.subr.bf16.mxu0 0
      %2591 = vmatpush1.bf16.msra.mxu0 0
      %2592 = vmatprep.subr.bf16.mxu0 0
      %2593 = vmatpush1.bf16.msra.mxu0 0
      %2594 = vmatprep.mubr.bf16.mxu0 0
      %2595 = vmatmul.mubr.bf16.gmra.mrb[0].mxu0 %v2557
      %v2596 = vpop.f32.mrb[0].mxu0
      %v2597 = vadd.f32 0.0, %v2596
      %v2598 = vpop.f32.mrb[0].mxu0
      %v2599 = vpop.f32.mrb[0].mxu0
      %v2600 = vpop.f32.mrb[0].mxu0
      %2601 = vdwg.mxu0
      %2602 = vrot.lane.b32.xlu0 %v2272, 80
      %v2603 = vpop.permute.xlu0 %2602
      %2604 = vrot.lane.b32.xlu0 %v2273, 80
      %v2605 = vpop.permute.xlu0 %2604
      %v2607 = vsel %vm1382, %v2603, 0
      %v2610 = vsel %vm1382, %v2605, 0
      %2612 = vmatprep.subr.bf16.mxu0 0
      %2613 = vmatpush1.bf16.xpose.msra.mxu0 %v2610
      %2614 = vmatprep.subr.bf16.mxu0 0
      %2615 = vmatpush1.bf16.xpose.msra.mxu0 0
      %2616 = vmatprep.subr.bf16.mxu0 0
      %2617 = vmatpush1.bf16.xpose.msra.mxu0 0
      %2618 = vmatprep.subr.bf16.mxu0 0
      %2619 = vmatpush1.bf16.xpose.msra.mxu0 0
      %2620 = vmatprep.subr.bf16.mxu0 0
      %2621 = vmatpush1.bf16.xpose.msra.mxu0 0
      %2622 = vmatprep.subr.bf16.mxu0 0
      %2623 = vmatpush1.bf16.xpose.msra.mxu0 0
      %2624 = vmatprep.subr.bf16.mxu0 0
      %2625 = vmatpush1.bf16.xpose.msra.mxu0 0
      %2626 = vmatprep.subr.bf16.mxu0 0
      %2627 = vmatpush1.bf16.xpose.msra.mxu0 0
      %2628 = vmatprep.subr.bf16.mxu0 0
      %2629 = vmatpush1.bf16.xpose.msra.mxu0 0
      %2630 = vmatprep.subr.bf16.mxu0 0
      %2631 = vmatpush1.bf16.xpose.msra.mxu0 0
      %2632 = vmatprep.subr.bf16.mxu0 0
      %2633 = vmatpush1.bf16.xpose.msra.mxu0 0
      %2634 = vmatprep.subr.bf16.mxu0 0
      %2635 = vmatpush1.bf16.xpose.msra.mxu0 0
      %2636 = vmatprep.subr.bf16.mxu0 0
      %2637 = vmatpush1.bf16.xpose.msra.mxu0 0
      %2638 = vmatprep.subr.bf16.mxu0 0
      %2639 = vmatpush1.bf16.xpose.msra.mxu0 0
      %2640 = vmatprep.subr.bf16.mxu0 0
      %2641 = vmatpush1.bf16.xpose.msra.mxu0 0
      %2642 = vmatprep.subr.bf16.mxu0 0
      %2643 = vmatpush1.bf16.xpose.msra.mxu0 0
      %2644 = vmatprep.mubr.bf16.mxu0 0
      %2645 = vmatmul.mubr.bf16.gmra.mrb[0].mxu0 %v2607
      %v2646 = vpop.f32.mrb[0].mxu0
      %v2647 = vadd.f32 0.0, %v2646
      %v2648 = vpop.f32.mrb[0].mxu0
      %v2649 = vpop.f32.mrb[0].mxu0
      %v2650 = vpop.f32.mrb[0].mxu0
      %2651 = vdwg.mxu0
      %v2652 = vsel %vm931, %v2647, -inf
      %2653 = vmax.xlane.f32.xlu0 %v2652
      %v2654 = vpop.xlane.xlu0 %2653
      %v2655 = vsub.f32 %v2647, %v2654
      %v2656 = vmul.f32 %v2655, 1.442695
      %v2657 = vpow.pop %v2656
      %v2658 = vsel %vm931, %v2657, 0.0
      %2659 = vadd.xlane.f32.xlu0 %v2658
      %v2660 = vpop.xlane.xlu0 %2659
      %v2661 = vrcp.pop %v2660
      %v2662 = vmul.f32 %v2657, %v2661
      %v2663 = vpack.c.bf16 %v2662, %v2662
      %2664 = vrot.lane.b32.xlu0 %v2273, 16
      %v2665 = vpop.permute.xlu0 %2664
      %v2667 = vsel %vm931, %v2663, 0
      %v2670 = vsel %vm995, %v2665, 0
      %2672 = vmatprep.subr.bf16.mxu0 0
      %2673 = vmatpush1.bf16.msra.mxu0 %v2670
      %2674 = vmatprep.subr.bf16.mxu0 0
      %2675 = vmatpush1.bf16.msra.mxu0 0
      %2676 = vmatprep.subr.bf16.mxu0 0
      %2677 = vmatpush1.bf16.msra.mxu0 0
      %2678 = vmatprep.subr.bf16.mxu0 0
      %2679 = vmatpush1.bf16.msra.mxu0 0
      %2680 = vmatprep.subr.bf16.mxu0 0
      %2681 = vmatpush1.bf16.msra.mxu0 0
      %2682 = vmatprep.subr.bf16.mxu0 0
      %2683 = vmatpush1.bf16.msra.mxu0 0
      %2684 = vmatprep.subr.bf16.mxu0 0
      %2685 = vmatpush1.bf16.msra.mxu0 0
      %2686 = vmatprep.subr.bf16.mxu0 0
      %2687 = vmatpush1.bf16.msra.mxu0 0
      %2688 = vmatprep.subr.bf16.mxu0 0
      %2689 = vmatpush1.bf16.msra.mxu0 0
      %2690 = vmatprep.subr.bf16.mxu0 0
      %2691 = vmatpush1.bf16.msra.mxu0 0
      %2692 = vmatprep.subr.bf16.mxu0 0
      %2693 = vmatpush1.bf16.msra.mxu0 0
      %2694 = vmatprep.subr.bf16.mxu0 0
      %2695 = vmatpush1.bf16.msra.mxu0 0
      %2696 = vmatprep.subr.bf16.mxu0 0
      %2697 = vmatpush1.bf16.msra.mxu0 0
      %2698 = vmatprep.subr.bf16.mxu0 0
      %2699 = vmatpush1.bf16.msra.mxu0 0
      %2700 = vmatprep.subr.bf16.mxu0 0
      %2701 = vmatpush1.bf16.msra.mxu0 0
      %2702 = vmatprep.subr.bf16.mxu0 0
      %2703 = vmatpush1.bf16.msra.mxu0 0
      %2704 = vmatprep.mubr.bf16.mxu0 0
      %2705 = vmatmul.mubr.bf16.gmra.mrb[0].mxu0 %v2667
      %v2706 = vpop.f32.mrb[0].mxu0
      %v2707 = vadd.f32 0.0, %v2706
      %v2708 = vpop.f32.mrb[0].mxu0
      %v2709 = vpop.f32.mrb[0].mxu0
      %v2710 = vpop.f32.mrb[0].mxu0
      %2711 = vdwg.mxu0
      %2713 = vrot.lane.b32.xlu0 %v2487, 16
      %v2714 = vpop.permute.xlu0 %2713
      %2717 = vrot.lane.b32.xlu0 %v2597, 32
      %v2718 = vpop.permute.xlu0 %2717
      %2721 = vrot.lane.b32.xlu0 %v2707, 48
      %v2722 = vpop.permute.xlu0 %2721
      %v2724 = vsel %vm1382, %v2376, %v2714
      %v2725 = vsel %vm883, %v2724, %v2718
      %vm2726 = vcmask 392192
      %v2727 = vsel %vm2726, %v2725, %v2722
      %v2728 = vpack.c.bf16 %v2727, %v2727
      %v2729 = vld [vmem:[%s17] sm:$0xf]
      %v2730 = vld [vmem:[%s17 + $0x4] sm:$0xf]
      %v2731 = vld [vmem:[%s17 + $0x8] sm:$0xf]
      %v2732 = vld [vmem:[%s17 + $0xc] sm:$0xf]
      %v2733 = vld [vmem:[%s17 + $0x10] sm:$0xf]
      %v2734 = vld [vmem:[%s17 + $0x14] sm:$0xf]
      %v2735 = vld [vmem:[%s17 + $0x18] sm:$0xf]
      %v2736 = vld [vmem:[%s17 + $0x1c] sm:$0xf]
      %v2737 = vld [vmem:[%s18] sm:$0x1]
      %v2739 = vlaneseq
      %v2740 = vshrl.u32 %v2739, 7
      %v2741 = vsub.s32 0, %v2740
      %v2742 = vrot.slane %v2737, %v2741
      %v2752 = vunpack.c.l.b16 %v2729
      %v2753 = vunpack.c.l.b16 %v2730
      %v2754 = vunpack.c.l.b16 %v2731
      %v2755 = vunpack.c.l.b16 %v2732
      %v2756 = vunpack.c.l.b16 %v2733
      %v2757 = vunpack.c.l.b16 %v2734
      %v2758 = vunpack.c.l.b16 %v2735
      %v2759 = vunpack.c.l.b16 %v2736
      %v2760 = vpack.c.b16 %v2753, %v2752
      %v2761 = vpack.c.b16 %v2755, %v2754
      %v2762 = vpack.c.b16 %v2757, %v2756
      %v2763 = vpack.c.b16 %v2759, %v2758
      %v2769 = vsel %vm2228, %v2728, 0
      %2771 = vmatprep.subr.bf16.mxu0 0
      %2772 = vmatpush1.bf16.msra.mxu0 %v2760
      %2773 = vmatprep.subr.bf16.mxu0 0
      %2774 = vmatpush1.bf16.msra.mxu0 %v2761
      %2775 = vmatprep.subr.bf16.mxu0 0
      %2776 = vmatpush1.bf16.msra.mxu0 %v2762
      %2777 = vmatprep.subr.bf16.mxu0 0
      %2778 = vmatpush1.bf16.msra.mxu0 %v2763
      %2779 = vmatprep.subr.bf16.mxu0 0
      %2780 = vmatpush1.bf16.msra.mxu0 0
      %2781 = vmatprep.subr.bf16.mxu0 0
      %2782 = vmatpush1.bf16.msra.mxu0 0
      %2783 = vmatprep.subr.bf16.mxu0 0
      %2784 = vmatpush1.bf16.msra.mxu0 0
      %2785 = vmatprep.subr.bf16.mxu0 0
      %2786 = vmatpush1.bf16.msra.mxu0 0
      %2787 = vmatprep.subr.bf16.mxu0 0
      %2788 = vmatpush1.bf16.msra.mxu0 0
      %2789 = vmatprep.subr.bf16.mxu0 0
      %2790 = vmatpush1.bf16.msra.mxu0 0
      %2791 = vmatprep.subr.bf16.mxu0 0
      %2792 = vmatpush1.bf16.msra.mxu0 0
      %2793 = vmatprep.subr.bf16.mxu0 0
      %2794 = vmatpush1.bf16.msra.mxu0 0
      %2795 = vmatprep.subr.bf16.mxu0 0
      %2796 = vmatpush1.bf16.msra.mxu0 0
      %2797 = vmatprep.subr.bf16.mxu0 0
      %2798 = vmatpush1.bf16.msra.mxu0 0
      %2799 = vmatprep.subr.bf16.mxu0 0
      %2800 = vmatpush1.bf16.msra.mxu0 0
      %2801 = vmatprep.subr.bf16.mxu0 0
      %2802 = vmatpush1.bf16.msra.mxu0 0
      %2803 = vmatprep.mubr.bf16.mxu0 0
      %2804 = vmatmul.mubr.bf16.gmra.mrb[0].mxu0 %v2769
      %v2805 = vpop.f32.mrb[0].mxu0
      %v2806 = vadd.f32 %v2742, %v2805
      %v2807 = vpop.f32.mrb[0].mxu0
      %v2808 = vpop.f32.mrb[0].mxu0
      %v2809 = vpop.f32.mrb[0].mxu0
      %2810 = vdwg.mxu0
      %v2811 = vpack.c.bf16 %v2121, %v2121
      %v2812 = vld [vmem:[%s19] sm:$0xf]
      %v2813 = vld [vmem:[%s19 + $0x4] sm:$0xf]
      %v2814 = vld [vmem:[%s19 + $0x8] sm:$0xf]
      %v2815 = vld [vmem:[%s19 + $0xc] sm:$0xf]
      %v2816 = vpack.c.bf16 %v2806, %v2806
      %v2817 = vld [vmem:[%s20] sm:$0xf]
      %v2818 = vld [vmem:[%s20 + $0x4] sm:$0xf]
      %v2819 = vld [vmem:[%s20 + $0x8] sm:$0xf]
      %v2820 = vld [vmem:[%s20 + $0xc] sm:$0xf]
      %v2821 = vld [vmem:[%s20 + $0x10] sm:$0xf]
      %v2822 = vld [vmem:[%s20 + $0x14] sm:$0xf]
      %v2823 = vld [vmem:[%s20 + $0x18] sm:$0xf]
      %v2824 = vld [vmem:[%s20 + $0x1c] sm:$0xf]
      %v2833 = vunpack.c.l.b16 %v2817
      %v2834 = vunpack.c.l.b16 %v2818
      %v2835 = vunpack.c.l.b16 %v2819
      %v2836 = vunpack.c.l.b16 %v2820
      %v2837 = vunpack.c.l.b16 %v2821
      %v2838 = vunpack.c.l.b16 %v2822
      %v2839 = vunpack.c.l.b16 %v2823
      %v2840 = vunpack.c.l.b16 %v2824
      %v2841 = vpack.c.b16 %v2834, %v2833
      %v2842 = vpack.c.b16 %v2836, %v2835
      %v2843 = vpack.c.b16 %v2838, %v2837
      %v2844 = vpack.c.b16 %v2840, %v2839
      %v2850 = vsel %vm2228, %v2816, 0
      %2852 = vmatprep.subr.bf16.mxu0 0
      %2853 = vmatpush1.bf16.msra.mxu0 %v2841
      %2854 = vmatprep.subr.bf16.mxu0 0
      %2855 = vmatpush1.bf16.msra.mxu0 %v2842
      %2856 = vmatprep.subr.bf16.mxu0 0
      %2857 = vmatpush1.bf16.msra.mxu0 %v2843
      %2858 = vmatprep.subr.bf16.mxu0 0
      %2859 = vmatpush1.bf16.msra.mxu0 %v2844
      %2860 = vmatprep.subr.bf16.mxu0 0
      %2861 = vmatpush1.bf16.msra.mxu0 0
      %2862 = vmatprep.subr.bf16.mxu0 0
      %2863 = vmatpush1.bf16.msra.mxu0 0
      %2864 = vmatprep.subr.bf16.mxu0 0
      %2865 = vmatpush1.bf16.msra.mxu0 0
      %2866 = vmatprep.subr.bf16.mxu0 0
      %2867 = vmatpush1.bf16.msra.mxu0 0
      %2868 = vmatprep.subr.bf16.mxu0 0
      %2869 = vmatpush1.bf16.msra.mxu0 0
      %2870 = vmatprep.subr.bf16.mxu0 0
      %2871 = vmatpush1.bf16.msra.mxu0 0
      %2872 = vmatprep.subr.bf16.mxu0 0
      %2873 = vmatpush1.bf16.msra.mxu0 0
      %2874 = vmatprep.subr.bf16.mxu0 0
      %2875 = vmatpush1.bf16.msra.mxu0 0
      %2876 = vmatprep.subr.bf16.mxu0 0
      %2877 = vmatpush1.bf16.msra.mxu0 0
      %2878 = vmatprep.subr.bf16.mxu0 0
      %2879 = vmatpush1.bf16.msra.mxu0 0
      %2880 = vmatprep.subr.bf16.mxu0 0
      %2881 = vmatpush1.bf16.msra.mxu0 0
      %2882 = vmatprep.subr.bf16.mxu0 0
      %2883 = vmatpush1.bf16.msra.mxu0 0
      %2884 = vmatprep.mubr.bf16.mxu0 0
      %2885 = vmatmul.mubr.bf16.gmra.mrb[0].mxu0 %v2850
      %v2886 = vpop.f32.mrb[0].mxu0
      %v2887 = vadd.f32 0.0, %v2886
      %v2888 = vpop.f32.mrb[0].mxu0
      %v2889 = vpop.f32.mrb[0].mxu0
      %v2890 = vpop.f32.mrb[0].mxu0
      %2891 = vdwg.mxu0
      %v2896 = vunpack.c.l.b16 %v2812
      %v2897 = vunpack.c.l.b16 %v2813
      %v2898 = vunpack.c.l.b16 %v2814
      %v2899 = vunpack.c.l.b16 %v2815
      %v2900 = vpack.c.b16 %v2897, %v2896
      %v2901 = vpack.c.b16 %v2899, %v2898
      %v2905 = vsel %vm883, %v2811, 0
      %2907 = vmatprep.subr.bf16.mxu0 0
      %2908 = vmatpush1.bf16.msra.mxu0 %v2900
      %2909 = vmatprep.subr.bf16.mxu0 0
      %2910 = vmatpush1.bf16.msra.mxu0 %v2901
      %2911 = vmatprep.subr.bf16.mxu0 0
      %2912 = vmatpush1.bf16.msra.mxu0 0
      %2913 = vmatprep.subr.bf16.mxu0 0
      %2914 = vmatpush1.bf16.msra.mxu0 0
      %2915 = vmatprep.subr.bf16.mxu0 0
      %2916 = vmatpush1.bf16.msra.mxu0 0
      %2917 = vmatprep.subr.bf16.mxu0 0
      %2918 = vmatpush1.bf16.msra.mxu0 0
      %2919 = vmatprep.subr.bf16.mxu0 0
      %2920 = vmatpush1.bf16.msra.mxu0 0
      %2921 = vmatprep.subr.bf16.mxu0 0
      %2922 = vmatpush1.bf16.msra.mxu0 0
      %2923 = vmatprep.subr.bf16.mxu0 0
      %2924 = vmatpush1.bf16.msra.mxu0 0
      %2925 = vmatprep.subr.bf16.mxu0 0
      %2926 = vmatpush1.bf16.msra.mxu0 0
      %2927 = vmatprep.subr.bf16.mxu0 0
      %2928 = vmatpush1.bf16.msra.mxu0 0
      %2929 = vmatprep.subr.bf16.mxu0 0
      %2930 = vmatpush1.bf16.msra.mxu0 0
      %2931 = vmatprep.subr.bf16.mxu0 0
      %2932 = vmatpush1.bf16.msra.mxu0 0
      %2933 = vmatprep.subr.bf16.mxu0 0
      %2934 = vmatpush1.bf16.msra.mxu0 0
      %2935 = vmatprep.subr.bf16.mxu0 0
      %2936 = vmatpush1.bf16.msra.mxu0 0
      %2937 = vmatprep.subr.bf16.mxu0 0
      %2938 = vmatpush1.bf16.msra.mxu0 0
      %2939 = vmatprep.mubr.bf16.mxu0 0
      %2940 = vmatmul.mubr.bf16.gmra.mrb[0].mxu0 %v2905
      %v2941 = vpop.f32.mrb[0].mxu0
      %v2942 = vadd.f32 %v2887, %v2941
      %v2943 = vpop.f32.mrb[0].mxu0
      %v2944 = vpop.f32.mrb[0].mxu0
      %v2945 = vpop.f32.mrb[0].mxu0
      %2946 = vdwg.mxu0
      %v2947 = vld [vmem:[%s21] sm:$0x1]
      %v2949 = vlaneseq
      %v2950 = vshrl.u32 %v2949, 7
      %v2951 = vsub.s32 0, %v2950
      %v2952 = vrot.slane %v2947, %v2951
      %v2954 = vadd.f32 %v2942, %v2952
      %v2955 = vadd.f32 %v1477, %v2954
      %v2956 = vsel %vm883, %v2955, 0.0
      %2957 = vadd.xlane.f32.xlu0 %v2956
      %v2958 = vpop.xlane.xlu0 %2957
      %v2959 = vmul.f32 %v2958, %v1457
      %v2960 = vsub.f32 %v2955, %v2959
      %v2961 = vmul.f32 %v2960, %v2960
      %v2962 = vsel %vm883, %v2961, 0.0
      %2963 = vadd.xlane.f32.xlu0 %v2962
      %v2964 = vpop.xlane.xlu0 %2963
      %v2965 = vmul.f32 %v2964, %v1457
      %v2966 = vadd.f32 %v2965, 1e-05
      %v2967 = vrsqrt.pop %v2966
      %v2968 = vmul.f32 %v2960, %v2967
      %v2969 = vlaneseq
      %v2970 = vshrl.u32 %v2969, 7
      %v2971 = vsub.s32 2, %v2970
      %v2972 = vrot.slane %v858, %v2971
      %v2973 = vmul.f32 %v2968, %v2972
      %v2974 = vlaneseq
      %v2975 = vshrl.u32 %v2974, 7
      %v2976 = vsub.s32 3, %v2975
      %v2977 = vrot.slane %v858, %v2976
      %v2978 = vadd.f32 %v2973, %v2977
      %v2979 = vpack.c.bf16 %v2978, %v2978
      %v2980 = vld [vmem:[%s22] sm:$0xf]
      %v2981 = vld [vmem:[%s22 + $0x4] sm:$0xf]
      %v2982 = vld [vmem:[%s22 + $0x8] sm:$0xf]
      %v2983 = vld [vmem:[%s22 + $0xc] sm:$0xf]
      %v2984 = vld [vmem:[%s23] sm:$0x1]
      %v2986 = vlaneseq
      %v2987 = vshrl.u32 %v2986, 7
      %v2988 = vsub.s32 0, %v2987
      %v2989 = vrot.slane %v2984, %v2988
      %v2995 = vunpack.c.l.b16 %v2980
      %v2996 = vunpack.c.l.b16 %v2981
      %v2997 = vunpack.c.l.b16 %v2982
      %v2998 = vunpack.c.l.b16 %v2983
      %v2999 = vpack.c.b16 %v2996, %v2995
      %v3000 = vpack.c.b16 %v2998, %v2997
      %v3004 = vsel %vm883, %v2979, 0
      %3006 = vmatprep.subr.bf16.mxu0 0
      %3007 = vmatpush1.bf16.msra.mxu0 %v2999
      %3008 = vmatprep.subr.bf16.mxu0 0
      %3009 = vmatpush1.bf16.msra.mxu0 %v3000
      %3010 = vmatprep.subr.bf16.mxu0 0
      %3011 = vmatpush1.bf16.msra.mxu0 0
      %3012 = vmatprep.subr.bf16.mxu0 0
      %3013 = vmatpush1.bf16.msra.mxu0 0
      %3014 = vmatprep.subr.bf16.mxu0 0
      %3015 = vmatpush1.bf16.msra.mxu0 0
      %3016 = vmatprep.subr.bf16.mxu0 0
      %3017 = vmatpush1.bf16.msra.mxu0 0
      %3018 = vmatprep.subr.bf16.mxu0 0
      %3019 = vmatpush1.bf16.msra.mxu0 0
      %3020 = vmatprep.subr.bf16.mxu0 0
      %3021 = vmatpush1.bf16.msra.mxu0 0
      %3022 = vmatprep.subr.bf16.mxu0 0
      %3023 = vmatpush1.bf16.msra.mxu0 0
      %3024 = vmatprep.subr.bf16.mxu0 0
      %3025 = vmatpush1.bf16.msra.mxu0 0
      %3026 = vmatprep.subr.bf16.mxu0 0
      %3027 = vmatpush1.bf16.msra.mxu0 0
      %3028 = vmatprep.subr.bf16.mxu0 0
      %3029 = vmatpush1.bf16.msra.mxu0 0
      %3030 = vmatprep.subr.bf16.mxu0 0
      %3031 = vmatpush1.bf16.msra.mxu0 0
      %3032 = vmatprep.subr.bf16.mxu0 0
      %3033 = vmatpush1.bf16.msra.mxu0 0
      %3034 = vmatprep.subr.bf16.mxu0 0
      %3035 = vmatpush1.bf16.msra.mxu0 0
      %3036 = vmatprep.subr.bf16.mxu0 0
      %3037 = vmatpush1.bf16.msra.mxu0 0
      %3038 = vmatprep.mubr.bf16.mxu0 0
      %3039 = vmatmul.mubr.bf16.gmra.mrb[0].mxu0 %v3004
      %v3040 = vpop.f32.mrb[0].mxu0
      %v3041 = vadd.f32 %v2989, %v3040
      %v3042 = vpop.f32.mrb[0].mxu0
      %v3043 = vpop.f32.mrb[0].mxu0
      %v3044 = vpop.f32.mrb[0].mxu0
      %3045 = vdwg.mxu0
      %v3046 = vmax.f32 %v3041, 0.0
      %v3047 = vpack.c.bf16 %v3046, %v3046
      %v3048 = vld [vmem:[%s24] sm:$0xf]
      %v3049 = vld [vmem:[%s24 + $0x4] sm:$0xf]
      %v3050 = vld [vmem:[%s24 + $0x8] sm:$0xf]
      %v3051 = vld [vmem:[%s24 + $0xc] sm:$0xf]
      %v3052 = vld [vmem:[%s24 + $0x10] sm:$0xf]
      %v3053 = vld [vmem:[%s24 + $0x14] sm:$0xf]
      %v3054 = vld [vmem:[%s24 + $0x18] sm:$0xf]
      %v3055 = vld [vmem:[%s24 + $0x1c] sm:$0xf]
      %v3056 = vld [vmem:[%s25] sm:$0x1]
      %v3058 = vlaneseq
      %v3059 = vshrl.u32 %v3058, 7
      %v3060 = vsub.s32 0, %v3059
      %v3061 = vrot.slane %v3056, %v3060
      %v3071 = vunpack.c.l.b16 %v3048
      %v3072 = vunpack.c.l.b16 %v3049
      %v3073 = vunpack.c.l.b16 %v3050
      %v3074 = vunpack.c.l.b16 %v3051
      %v3075 = vunpack.c.l.b16 %v3052
      %v3076 = vunpack.c.l.b16 %v3053
      %v3077 = vunpack.c.l.b16 %v3054
      %v3078 = vunpack.c.l.b16 %v3055
      %v3079 = vpack.c.b16 %v3072, %v3071
      %v3080 = vpack.c.b16 %v3074, %v3073
      %v3081 = vpack.c.b16 %v3076, %v3075
      %v3082 = vpack.c.b16 %v3078, %v3077
      %v3088 = vsel %vm2228, %v3047, 0
      %3090 = vmatprep.subr.bf16.mxu0 0
      %3091 = vmatpush1.bf16.msra.mxu0 %v3079
      %3092 = vmatprep.subr.bf16.mxu0 0
      %3093 = vmatpush1.bf16.msra.mxu0 %v3080
      %3094 = vmatprep.subr.bf16.mxu0 0
      %3095 = vmatpush1.bf16.msra.mxu0 %v3081
      %3096 = vmatprep.subr.bf16.mxu0 0
      %3097 = vmatpush1.bf16.msra.mxu0 %v3082
      %3098 = vmatprep.subr.bf16.mxu0 0
      %3099 = vmatpush1.bf16.msra.mxu0 0
      %3100 = vmatprep.subr.bf16.mxu0 0
      %3101 = vmatpush1.bf16.msra.mxu0 0
      %3102 = vmatprep.subr.bf16.mxu0 0
      %3103 = vmatpush1.bf16.msra.mxu0 0
      %3104 = vmatprep.subr.bf16.mxu0 0
      %3105 = vmatpush1.bf16.msra.mxu0 0
      %3106 = vmatprep.subr.bf16.mxu0 0
      %3107 = vmatpush1.bf16.msra.mxu0 0
      %3108 = vmatprep.subr.bf16.mxu0 0
      %3109 = vmatpush1.bf16.msra.mxu0 0
      %3110 = vmatprep.subr.bf16.mxu0 0
      %3111 = vmatpush1.bf16.msra.mxu0 0
      %3112 = vmatprep.subr.bf16.mxu0 0
      %3113 = vmatpush1.bf16.msra.mxu0 0
      %3114 = vmatprep.subr.bf16.mxu0 0
      %3115 = vmatpush1.bf16.msra.mxu0 0
      %3116 = vmatprep.subr.bf16.mxu0 0
      %3117 = vmatpush1.bf16.msra.mxu0 0
      %3118 = vmatprep.subr.bf16.mxu0 0
      %3119 = vmatpush1.bf16.msra.mxu0 0
      %3120 = vmatprep.subr.bf16.mxu0 0
      %3121 = vmatpush1.bf16.msra.mxu0 0
      %3122 = vmatprep.mubr.bf16.mxu0 0
      %3123 = vmatmul.mubr.bf16.gmra.mrb[0].mxu0 %v3088
      %v3124 = vpop.f32.mrb[0].mxu0
      %v3125 = vadd.f32 %v3061, %v3124
      %v3126 = vpop.f32.mrb[0].mxu0
      %v3127 = vpop.f32.mrb[0].mxu0
      %v3128 = vpop.f32.mrb[0].mxu0
      %3129 = vdwg.mxu0
      %v3130 = vadd.f32 %v2978, %v3125
      %v3131 = vsel %vm883, %v3130, 0.0
      %3132 = vadd.xlane.f32.xlu0 %v3131
      %v3133 = vpop.xlane.xlu0 %3132
      %v3134 = vmul.f32 %v3133, %v1457
      %v3135 = vsub.f32 %v3130, %v3134
      %v3136 = vmul.f32 %v3135, %v3135
      %v3137 = vsel %vm883, %v3136, 0.0
      %3138 = vadd.xlane.f32.xlu0 %v3137
      %v3139 = vpop.xlane.xlu0 %3138
      %v3140 = vmul.f32 %v3139, %v1457
      %v3141 = vadd.f32 %v3140, 1e-05
      %v3142 = vrsqrt.pop %v3141
      %v3143 = vmul.f32 %v3135, %v3142
      %v3144 = vlaneseq
      %v3145 = vshrl.u32 %v3144, 7
      %v3146 = vsub.s32 4, %v3145
      %v3147 = vrot.slane %v858, %v3146
      %v3148 = vmul.f32 %v3143, %v3147
      %v3149 = vlaneseq
      %v3150 = vshrl.u32 %v3149, 7
      %v3151 = vsub.s32 5, %v3150
      %v3152 = vrot.slane %v858, %v3151
      %v3153 = vadd.f32 %v3148, %v3152
      %v3155 = vrot.slane %v3153, 1
      %3156 = vrot.lane.b32.xlu0 %v3155, 32
      %v3157 = vpop.permute.xlu0 %3156
      %v3159 = vrot.slane %v3153, 2
      %3160 = vrot.lane.b32.xlu0 %v3159, 64
      %v3161 = vpop.permute.xlu0 %3160
      %v3163 = vrot.slane %v3153, 3
      %3164 = vrot.lane.b32.xlu0 %v3163, 96
      %v3165 = vpop.permute.xlu0 %3164
      %v3167 = vrot.slane %v3153, 4
      %v3169 = vrot.slane %v3153, 5
      %3170 = vrot.lane.b32.xlu0 %v3169, 32
      %v3171 = vpop.permute.xlu0 %3170
      %v3173 = vrot.slane %v3153, 6
      %3174 = vrot.lane.b32.xlu0 %v3173, 64
      %v3175 = vpop.permute.xlu0 %3174
      %v3177 = vrot.slane %v3153, 7
      %3178 = vrot.lane.b32.xlu0 %v3177, 96
      %v3179 = vpop.permute.xlu0 %3178
      %v3181 = vsel %vm883, %v3153, %v3157
      %v3182 = vsel %vm2228, %v3181, %v3161
      %vm3183 = vcmask 785408
      %v3184 = vsel %vm3183, %v3182, %v3165
      %v3185 = vsel %vm883, %v3167, %v3171
      %v3186 = vsel %vm2228, %v3185, %v3175
      %v3187 = vsel %vm3183, %v3186, %v3179
      %v3190 = vcombine.low %v3184, %v3187
      %v3192 = vunpack.c.l.s4 1966171168
      %v3193 = vunpack.c.0.s8 %v3192
      %v3194 = vlaneseq
      %v3195 = vshrl.u32 %v3194, 7
      %v3196 = vsub.s32 %v3193, %v3195
      %v3197 = vrot.slane %v3190, %v3196
      %v3199 = vunpack.c.l.s4 1966171168
      %v3200 = vunpack.c.0.s8 %v3199
      %v3201 = vlaneseq
      %v3202 = vshrl.u32 %v3201, 7
      %v3203 = vsub.s32 %v3200, %v3202
      %v3204 = vrot.slane %v3197, %v3203
      %v3206 = vlaneseq
      %vm3207 = vcmp.ge.s32.totalorder %v3206, 0
      %vm3208 = vcmp.lt.s32.totalorder %v3206, 256
      %vm3209 = vmand %vm3207, %vm3208
      %3210 = vst.msk [vmem:[%s850] sm:$0x3] %vm3209, %v3204
      %p3211 = scmp.lt.s32.totalorder %s38, 1
      %s3212 = scalar_select %p3211, %s38, 1
      %s3213 = smul.addr %s3212, 2
      %s3214 = scalar_lea.vmem %s27, %s3213
      // Predicated region
      $region129: #{decoder_layer_forward.1} parent=127 // pred_check
        %p3215 = pneg %p638
      $region130: #{decoder_layer_forward.1} parent=127 // pred_check_branch
        %3217 = sbr.rel (%p3215) target = $region132
      $region131: #{decoder_layer_forward.1} parent=127 // pred_region
        _
      $region132: #{decoder_layer_forward.1} parent=127 // pred_fallthru
        _
    $region128: #{decoder_layer_forward.1} parent=5 // pred_fallthru
      _
    %p3218 = scmp.le.s32.totalorder 2, %s33
    // Predicated region
    $region133: #{decoder_layer_forward.1} parent=5 // pred_check
      %p3219 = pneg %p3218
    $region134: #{decoder_layer_forward.1} parent=5 // pred_check_branch
      %3221 = sbr.rel (%p3219) target = $region136
    $region135: #{decoder_layer_forward.1} parent=5 // pred_region
      %s3222 = ssub.s32 %s33, 2
      // Predicated region
      $region137: #{decoder_layer_forward.1} parent=135 // pred_check
        %p3223 = pneg %p644
      $region138: #{decoder_layer_forward.1} parent=135 // pred_check_branch
        %3225 = sbr.rel (%p3223) target = $region140
      $region139: #{decoder_layer_forward.1} parent=135 // pred_region
        %p3226 = scmp.lt.s32.totalorder %s39, 1
        %s3227 = scalar_select %p3226, %s39, 1
        %s3228 = smul.addr %s3227, 2
        %s3229 = scalar_lea.vmem %s27, %s3228
      $region140: #{decoder_layer_forward.1} parent=135 // pred_fallthru
        _
    $region136: #{decoder_layer_forward.1} parent=5 // pred_fallthru
      _
  $region6: #{decoder_layer_forward.1} parent=0 // loop_footer
    %s37 = sadd.s32 1, %s33
  $region7: #{decoder_layer_forward.1} parent=0 // loop_footer_branch
    %32 = sbr.rel target = $region3
  $region8: #{decoder_layer_forward.1} parent=0 // loop_exit
    _

</llo_original>
